<compile_context>
chip_gen: v7x
topology: tpu7x:2x2x1
jax: 0.10.0
libtpu: 0.0.40
codegen_flags: <defaults>
</compile_context>

<pallas_src>
import functools
import math

import jax
import jax.numpy as jnp
from jax import lax
from jax.experimental import pallas as pl
from jax.experimental.pallas import tpu as pltpu

GN_EPS = 0.00064               # nn.GroupNorm(C//N, C, eps=0.00064)
DECAY_BASE = math.exp(-0.5)    # exp(w) = exp(-0.5)*sigmoid(w_in)  since w = -softplus(-w_in)-0.5
VMEM_LIMIT = 48 * 1024 * 1024  # explicit scoped-VMEM cap: safe on v5e/v6e (128 MiB) and v7x (64 MiB)


# ---------------------------------------------------------------------------
# helpers
# ---------------------------------------------------------------------------
def _tile(dim, target, unit):
    """Largest multiple of `unit` that divides `dim` and is <= target, else the full dim."""
    t = (min(target, dim) // unit) * unit
    while t >= unit:
        if dim % t == 0:
            return t
        t -= unit
    return dim


def _pick_chunk(T, target=64):
    """WKV chunk length: a multiple of 8 that divides T (<= target), else full T.
    Kept <= 64 by default so exp(+cumsum(exp(w))) stays comfortably inside f32 range."""
    for c in range(min(target, T), 7, -1):
        if c % 8 == 0 and T % c == 0:
            return c
    return T


def _mm(a, b):       # a @ b
    return lax.dot_general(a, b, (((1,), (0,)), ((), ())),
                           preferred_element_type=jnp.float32)


def _mm_nt(a, b):    # a @ b.T
    return lax.dot_general(a, b, (((1,), (1,)), ((), ())),
                           preferred_element_type=jnp.float32)


def _mm_tn(a, b):    # a.T @ b
    return lax.dot_general(a, b, (((0,), (0,)), ((), ())),
                           preferred_element_type=jnp.float32)


def _sigmoid(x):     # manual sigmoid (plain VPU/EUP ops, safe in Mosaic)
    return 1.0 / (1.0 + jnp.exp(-x))


# ---------------------------------------------------------------------------
# Pallas kernel 1: tiled matmul (all Linear / LoRA projections).
# ---------------------------------------------------------------------------
def _matmul_kernel(x_ref, w_ref, o_ref, acc_ref):
    @pl.when(pl.program_id(2) == 0)
    def _init():
        acc_ref[...] = jnp.zeros_like(acc_ref)

    acc_ref[...] += jnp.dot(x_ref[...], w_ref[...],
                            preferred_element_type=jnp.float32)

    @pl.when(pl.program_id(2) == pl.num_programs(2) - 1)
    def _done():
        o_ref[...] = acc_ref[...].astype(o_ref.dtype)


def pallas_matmul(x, w, *, tm=256, tn=256, tk=512, compute_dtype=None):
    """(M,K)@(K,N) -> (M,N) with f32 VMEM accumulator; K axis 'arbitrary', M/N parallel.
    Tile targets 256/256/512 suit v6e/v7x (2x256^2 MXU); on v5e prefer 128/128/512.
    compute_dtype=jnp.bfloat16 halves HBM/VMEM traffic at production sizes.
    # TODO(synk): flip compute_dtype to bf16 in production; f32 kept here for the exact self-test.
    """
    M, K = x.shape
    K2, N = w.shape
    assert K == K2
    if compute_dtype is not None:
        x = x.astype(compute_dtype)
        w = w.astype(compute_dtype)
    tm = _tile(M, tm, 8)
    tn = _tile(N, tn, 128)
    tk = _tile(K, tk, 128)
    return pl.pallas_call(
        _matmul_kernel,
        out_shape=jax.ShapeDtypeStruct((M, N), jnp.float32),
        grid=(M // tm, N // tn, K // tk),
        in_specs=[pl.BlockSpec((tm, tk), lambda i, j, k: (i, k)),
                  pl.BlockSpec((tk, tn), lambda i, j, k: (k, j))],
        out_specs=pl.BlockSpec((tm, tn), lambda i, j, k: (i, j)),
        scratch_shapes=[pltpu.VMEM((tm, tn), jnp.float32)],
        compiler_params=pltpu.CompilerParams(
            dimension_semantics=("parallel", "parallel", "arbitrary"),
            vmem_limit_bytes=VMEM_LIMIT),
        cost_estimate=pl.CostEstimate(
            flops=2 * M * N * K, transcendentals=0,
            bytes_accessed=4 * (M * K + K * N + M * N)),
    )(x, w)


# ---------------------------------------------------------------------------
# Pallas kernel 2: fused token-shift mixes  x + m*(last_x - x)  for the six mix params.
# ---------------------------------------------------------------------------
def _mix_kernel(x_ref, xp_ref, mr, mw, mk, mv, ma, mg,
                or_, ow_, ok_, ov_, oa_, og_):
    x = x_ref[...]
    d = xp_ref[...] - x
    or_[...] = x + mr[...] * d
    ow_[...] = x + mw[...] * d
    ok_[...] = x + mk[...] * d
    ov_[...] = x + mv[...] * d
    oa_[...] = x + ma[...] * d
    og_[...] = x + mg[...] * d


def pallas_token_shift_mix(x, last_x, mixes):
    B, T, C = x.shape
    tb = _tile(T, 256, 8)
    spec_x = pl.BlockSpec((None, tb, C), lambda b, t: (b, t, 0))
    spec_m = pl.BlockSpec((1, C), lambda b, t: (0, 0))
    return pl.pallas_call(
        _mix_kernel,
        out_shape=tuple(jax.ShapeDtypeStruct((B, T, C), jnp.float32)
                        for _ in range(6)),
        grid=(B, T // tb),
        in_specs=[spec_x, spec_x] + [spec_m] * 6,
        out_specs=tuple(spec_x for _ in range(6)),
        compiler_params=pltpu.CompilerParams(
            dimension_semantics=("parallel", "parallel"),
            vmem_limit_bytes=VMEM_LIMIT),
    )(x, last_x, *(m.reshape(1, C) for m in mixes))


# ---------------------------------------------------------------------------
# Pallas kernel 3: chunked WKV7 recurrence + fused GroupNorm + r*k residual.
# ---------------------------------------------------------------------------
def _wkv7_gn_kernel(r_ref, w_ref, k_ref, v_ref, ain_ref,
                    kk_scale_ref, ka_ref, rk_ref, lnw_ref, lnb_ref,
                    o_ref, s_ref, *, H, N, L):
    f32 = jnp.float32

    @pl.when(pl.program_id(1) == 0)          # new batch element -> zero the carried state
    def _init():
        s_ref[...] = jnp.zeros_like(s_ref)

    # ---- lane-dense elementwise prep over the whole (L, C) block ----
    r_all = r_ref[...]
    a_gate = _sigmoid(ain_ref[...])                      # sigmoid(a0 + xa@a1@a2)
    e_all = DECAY_BASE * _sigmoid(w_ref[...])            # exp(w),  w = -softplus(-w_in)-0.5
    k_base = k_ref[...]
    v_all = v_ref[...]
    kk_all = k_base * kk_scale_ref[...]                  # k * k_k
    k_all = k_base * (1.0 + (a_gate - 1.0) * ka_ref[...])  # k * (1 + (a-1)*k_a)

    # ---- static triangular helpers for the chunk of length L ----
    row = lax.broadcasted_iota(jnp.int32, (L, L), 0)
    col = lax.broadcasted_iota(jnp.int32, (L, L), 1)
    incl = (col <= row).astype(f32)          # inclusive lower triangle == cumsum matrix
    strict = (col < row).astype(f32)         # strictly lower triangle
    eye_l = (col == row).astype(f32)
    rown = lax.broadcasted_iota(jnp.int32, (N, N), 0)
    coln = lax.broadcasted_iota(jnp.int32, (N, N), 1)
    eye_n = (rown == coln).astype(f32)
    n_doubling = max(0, int(math.ceil(math.log2(max(L, 2)))) - 1)

    outs = []
    for h in range(H):                       # heads: static unroll, lane slices of the block
        sl = slice(h * N, (h + 1) * N)
        r_h = r_all[:, sl]
        e_h = e_all[:, sl]
        k_h = k_all[:, sl]
        v_h = v_all[:, sl]
        kk_h = kk_all[:, sl]
        ag_h = a_gate[:, sl]

        # F.normalize(kk, dim=-1)
        nrm = jnp.sqrt(jnp.sum(kk_h * kk_h, axis=-1, keepdims=True))
        kk_h = kk_h / jnp.maximum(nrm, 1e-12)
        a_h = kk_h                           # delta-rule "a"
        b_h = -kk_h * ag_h                   # delta-rule "b" = -kk * a_gate

        # cumulative decay inside the chunk (inclusive), as one MXU matmul
        cum = _mm(incl, e_h)                 # sum_{s<=t} exp(w_s)        (L, N)
        c_in = jnp.exp(-cum)                 # prod_{s<=t} d_s
        c_pr = jnp.exp(e_h - cum)            # prod_{s< t} d_s
        c_iv = jnp.exp(cum)                  # 1 / c_in

        atil = a_h * c_pr
        btil = b_h * c_iv
        ktil = k_h * c_iv
        rtil = r_h * c_in

        S0 = s_ref[h]                        # (N, N) carried state  (k-dim x v-dim)

        t_ab = strict * _mm_nt(atil, btil)   # (L, L)
        t_ak = strict * _mm_nt(atil, ktil)   # (L, L)

        # z_t = a_t S_{t-1}:  Z = (I - t_ab)^{-1} (atil @ S0 + t_ak @ V)
        rhs = _mm(atil, S0) + _mm(t_ak, v_h)
        inv = eye_l + t_ab
        p = t_ab
        for _ in range(n_doubling):          # (I-T)^{-1} = prod_j (I + T^(2^j)),  T nilpotent
            p = _mm(p, p)
            inv = inv + _mm(inv, p)
        z = _mm(inv, rhs)                    # (L, N)

        # chunk outputs: y_t = rtil_t S0 + sum_{s<=t} (rtil.btil_s) z_s + (rtil.ktil_s) v_s
        g_b = incl * _mm_nt(rtil, btil)
        g_k = incl * _mm_nt(rtil, ktil)
        y = _mm(rtil, S0) + _mm(g_b, z) + _mm(g_k, v_h)          # == x_attn for this head

        # carried-state update:  S <- diag(c_L) S0 + (btil*c_L)^T Z + (ktil*c_L)^T V
        c_last = c_in[L - 1:L, :]            # (1, N)
        bhat = btil * c_last
        khat = ktil * c_last
        s_ref[h, :, :] = (_mm(eye_n * c_last, S0)
                          + _mm_tn(bhat, z) + _mm_tn(khat, v_h))

        # fused GroupNorm (one group == one head) + ((r*k*r_k).sum * v) residual
        mean = jnp.mean(y, axis=-1, keepdims=True)
        yc = y - mean
        var = jnp.mean(yc * yc, axis=-1, keepdims=True)
        yn = yc * lax.rsqrt(var + GN_EPS)
        yn = yn * lnw_ref[h:h + 1, :] + lnb_ref[h:h + 1, :]
        rk_dot = jnp.sum(r_h * k_h * rk_ref[h:h + 1, :], axis=-1, keepdims=True)
        outs.append(yn + rk_dot * v_h)

    o_ref[...] = jnp.concatenate(outs, axis=1)                   # one lane-dense (L, C) store


def pallas_wkv_post(r, w_in, k_base, v, a_in, k_k, k_a, r_k, ln_w, ln_b, H, N,
                    *, chunk=64):
    B, T, C = r.shape
    L = _pick_chunk(T, chunk)
    nlog = max(1, int(math.ceil(math.log2(max(L, 2)))))
    flops = 2 * B * H * (T // L) * (5 * L * N * N + 8 * L * L * N
                                    + 2 * N * N * N + 2 * nlog * L ** 3)
    spec_act = pl.BlockSpec((None, L, C), lambda b, t: (b, t, 0))
    spec_c = pl.BlockSpec((1, C), lambda b, t: (0, 0))
    spec_hn = pl.BlockSpec((H, N), lambda b, t: (0, 0))
    kernel = functools.partial(_wkv7_gn_kernel, H=H, N=N, L=L)
    return pl.pallas_call(
        kernel,
        out_shape=jax.ShapeDtypeStruct((B, T, C), jnp.float32),
        grid=(B, T // L),
        in_specs=[spec_act] * 5 + [spec_c, spec_c, spec_hn, spec_hn, spec_hn],
        out_specs=spec_act,
        scratch_shapes=[pltpu.VMEM((H, N, N), jnp.float32)],
        compiler_params=pltpu.CompilerParams(
            dimension_semantics=("parallel", "arbitrary"),
            vmem_limit_bytes=VMEM_LIMIT),
        cost_estimate=pl.CostEstimate(
            flops=flops, transcendentals=8 * B * T * C,
            bytes_accessed=4 * 7 * B * T * C),
    )(r, w_in, k_base, v, a_in,
      k_k.reshape(1, C), k_a.reshape(1, C),
      r_k.reshape(H, N), ln_w.reshape(H, N), ln_b.reshape(H, N))


# ---------------------------------------------------------------------------
# Pure-JAX references (verification only).
# ---------------------------------------------------------------------------
def jnp_matmul(x, w):
    return jnp.dot(x, w)


def jnp_token_shift_mix(x, last_x, mixes):
    return tuple(x + m * (last_x - x) for m in mixes)


def jnp_wkv7(r, w, k, v, a, b):
    # inputs (B, H, T, N): sequential per-timestep reference of the recurrence.
    B, H, T, N = r.shape
    decay = jnp.exp(-jnp.exp(w))

    def step(S, inp):
        rt, dt, kt, vt, at, bt = inp                              # each (B, H, N)
        sa = jnp.einsum('bhij,bhj->bhi', S, at)
        S = (S * dt[:, :, None, :] + sa[..., None] * bt[:, :, None, :]
             + vt[..., None] * kt[:, :, None, :])
        out = jnp.einsum('bhij,bhj->bhi', S, rt)
        return S, out

    xs = tuple(jnp.moveaxis(z, 2, 0) for z in (r, decay, k, v, a, b))
    _, outs = lax.scan(step, jnp.zeros((B, H, N, N), jnp.float32), xs)
    return jnp.moveaxis(outs, 0, 2)


def jnp_wkv_post(r, w_in, k_base, v, a_in, k_k, k_a, r_k, ln_w, ln_b, H, N):
    B, T, C = r.shape
    a_gate = jax.nn.sigmoid(a_in)
    w = -jax.nn.softplus(-w_in) - 0.5
    kk = k_base * k_k.reshape(1, 1, C)
    k = k_base * (1.0 + (a_gate - 1.0) * k_a.reshape(1, 1, C))
    heads = lambda z: z.reshape(B, T, H, N)
    r4, w4, k4, v4, kk4, a4 = map(heads, (r, w, k, v, kk, a_gate))
    kk4 = kk4 / jnp.maximum(jnp.linalg.norm(kk4, axis=-1, keepdims=True), 1e-12)
    hmaj = lambda z: jnp.transpose(z, (0, 2, 1, 3))
    x_attn = jnp_wkv7(hmaj(r4), hmaj(w4), hmaj(k4), hmaj(v4),
                      hmaj(kk4), hmaj(-kk4 * a4))
    x_attn = jnp.transpose(x_attn, (0, 2, 1, 3))                  # (B, T, H, N)
    mean = jnp.mean(x_attn, axis=-1, keepdims=True)
    var = jnp.mean(jnp.square(x_attn - mean), axis=-1, keepdims=True)
    xn = ((x_attn - mean) * lax.rsqrt(var + GN_EPS)
          * ln_w.reshape(H, N) + ln_b.reshape(H, N))
    rk_dot = jnp.sum(r4 * k4 * r_k.reshape(H, N), axis=-1, keepdims=True)
    return (xn + rk_dot * v4).reshape(B, T, C)


# ---------------------------------------------------------------------------
# Full RWKV_Tmix_x070 forward (glue in plain JAX, hot paths in Pallas).
# ---------------------------------------------------------------------------
def forward(params, x, v0, *, head_size, matmul, wkv_post, mix_fn):
    B, T, C = x.shape
    N = head_size
    H = C // N

    # token shift: F.pad(x, (0, 0, 1, -1))
    last_x = jnp.pad(x, ((0, 0), (1, 0), (0, 0)))[:, :T, :]
    xr, xw, xk, xv, xa, xg = mix_fn(
        x, last_x, [params[p] for p in ['x_r', 'x_w', 'x_k', 'x_v', 'x_a', 'x_g']])

    flat = lambda z: z.reshape(B * T, C)
    unflat = lambda z: z.reshape(B, T, C)

    # nn.Linear(C, C, bias=False) with pre-transposed weights: y = x @ W_T
    r = unflat(matmul(flat(xr), params['receptance_T']))
    k_base = unflat(matmul(flat(xk), params['key_T']))
    v = unflat(matmul(flat(xv), params['value_T']))

    w_in = params['w0'] + unflat(
        matmul(jnp.tanh(matmul(flat(xw), params['w1'])), params['w2']))

    if v0 is None:
        v0 = v
    else:
        v_lora = unflat(matmul(matmul(flat(xv), params['v1']), params['v2']))
        v = v + (v0 - v) * jax.nn.sigmoid(params['v0'] + v_lora)

    a_in = params['a0'] + unflat(
        matmul(matmul(flat(xa), params['a1']), params['a2']))
    g = unflat(matmul(jax.nn.sigmoid(matmul(flat(xg), params['g1'])), params['g2']))

    # chunked WKV7 + GroupNorm + (r*k*r_k).sum * v residual (fused kernel)
    y = wkv_post(r, w_in, k_base, v, a_in,
                 params['k_k'], params['k_a'], params['r_k'],
                 params['ln_x_w'], params['ln_x_b'], H, N)

    out = unflat(matmul(flat(y * g), params['output_T']))
    return out, v0


# ---------------------------------------------------------------------------
# Deterministic parameter init (shapes exactly as in RWKV_Tmix_x070.__init__).
# ---------------------------------------------------------------------------
def init_params(key, C, head_size):
    N = head_size
    H = C // N
    dims = [max(32, 32 * round(fac * C ** p / 32))
            for fac, p in zip([1.8, 1.8, 1.3, 0.6], [0.5, 0.5, 0.5, 0.8])]
    keys = iter(jax.random.split(key, 64))

    def randn(shape, scale=0.1):
        return scale * jax.random.normal(next(keys), shape, dtype=jnp.float32)

    p = {}
    for name in ['x_r', 'x_w', 'x_k', 'x_v', 'x_a', 'x_g']:
        p[name] = randn((1, 1, C))
    for c, D in zip('wavg', dims):
        p[f'{c}1'] = randn((C, D), 0.05)
        p[f'{c}2'] = randn((D, C), 0.05)
        if c != 'g':
            p[f'{c}0'] = randn((1, 1, C))
    p['k_k'] = 1.0 + randn((1, 1, C))
    p['k_a'] = 1.0 + randn((1, 1, C))
    p['r_k'] = randn((H, N))
    for name in ['receptance', 'key', 'value', 'output']:
        p[name] = randn((C, C), 1.0 / math.sqrt(C))              # torch Linear weight (out, in)
    p['ln_x_w'] = 1.0 + randn((C,))
    p['ln_x_b'] = randn((C,))
    return p


def prepare_params(p):
    """One-time prep: pre-transpose nn.Linear weights so no W.T materializes per call."""
    q = dict(p)
    for name in ['receptance', 'key', 'value', 'output']:
        q[name + '_T'] = jnp.transpose(p[name])
    return q


if __name__ == "__main__":
    B, T = 2, 8
    C, HEAD_SIZE = 32, 16

    root = jax.random.PRNGKey(0)
    pkey, xkey, vkey = jax.random.split(root, 3)
    params = prepare_params(init_params(pkey, C, HEAD_SIZE))
    x = jax.random.normal(xkey, (B, T, C), dtype=jnp.float32)
    v0_in = jax.random.normal(vkey, (B, T, C), dtype=jnp.float32)

    fwd_pallas = jax.jit(functools.partial(
        forward, head_size=HEAD_SIZE,
        matmul=pallas_matmul, wkv_post=pallas_wkv_post,
        mix_fn=pallas_token_shift_mix))
    fwd_ref = functools.partial(
        forward, head_size=HEAD_SIZE,
        matmul=jnp_matmul, wkv_post=jnp_wkv_post, mix_fn=jnp_token_shift_mix)

    # first-layer case (v0 is None) and later-layer case (v0 provided)
    out1, v0_out1 = jax.block_until_ready(fwd_pallas(params, x, None))
    out2, v0_out2 = jax.block_until_ready(fwd_pallas(params, x, v0_in))

    ref1, ref_v01 = fwd_ref(params, x, None)
    ref2, _ = fwd_ref(params, x, v0_in)

    assert out1.shape == (B, T, C) and v0_out1.shape == (B, T, C)
    assert bool(jnp.allclose(out1, ref1, rtol=2e-2, atol=2e-3)), "mismatch (v0=None)"
    assert bool(jnp.allclose(v0_out1, ref_v01, rtol=2e-2, atol=2e-3)), "v0 mismatch"
    assert bool(jnp.allclose(out2, ref2, rtol=2e-2, atol=2e-3)), "mismatch (v0 given)"

    print("KERNEL_OK")
</pallas_src>

<mosaic_0001>
module attributes {stable_mosaic.version = 11 : i64} {
  func.func @_matmul_kernel(%arg0: i32, %arg1: i32, %arg2: i32, %arg3: memref<16x32xf32, #tpu.memory_space<vmem>>, %arg4: memref<32x32xf32, #tpu.memory_space<vmem>>, %arg5: memref<16x32xf32, #tpu.memory_space<vmem>>, %arg6: memref<16x32xf32, #tpu.memory_space<vmem>>) attributes {dimension_semantics = [#tpu.dimension_semantics<parallel>, #tpu.dimension_semantics<parallel>, #tpu.dimension_semantics<arbitrary>], iteration_bounds = array<i64: 1, 1, 1>, scalar_prefetch = 0 : i64, scratch_operands = 1 : i64, tpu.core_type = #tpu.core_type<tc>, window_params = [{transform_indices = @transform_0, window_bounds = array<i64: 16, 32>}, {transform_indices = @transform_1, window_bounds = array<i64: 32, 32>}, {transform_indices = @transform_2, window_bounds = array<i64: 16, 32>}]} {
    %c0_i32 = arith.constant 0 : i32
    %0 = arith.cmpi eq, %arg2, %c0_i32 : i32
    %1 = arith.extui %0 : i1 to i32
    %c0_i32_0 = arith.constant 0 : i32
    %2 = arith.cmpi ne, %1, %c0_i32_0 : i32
    scf.if %2 {
      %cst_10 = arith.constant 0.000000e+00 : f32
      %12 = vector.broadcast %cst_10 : f32 to vector<16x32xf32>
      %c0_11 = arith.constant 0 : index
      %c0_12 = arith.constant 0 : index
      %13 = vector.load %arg6[%c0_11, %c0_12] : memref<16x32xf32, #tpu.memory_space<vmem>>, vector<16x32xf32>
      tpu.vector_store %arg6[%c0_11, %c0_12], %12 {strides = array<i32>} : memref<16x32xf32, #tpu.memory_space<vmem>>, vector<16x32xf32>,
    } else {
    }
    %c0 = arith.constant 0 : index
    %c0_1 = arith.constant 0 : index
    %3 = vector.load %arg6[%c0, %c0_1] : memref<16x32xf32, #tpu.memory_space<vmem>>, vector<16x32xf32>
    %c0_2 = arith.constant 0 : index
    %c0_3 = arith.constant 0 : index
    %4 = vector.load %arg3[%c0_2, %c0_3] : memref<16x32xf32, #tpu.memory_space<vmem>>, vector<16x32xf32>
    %c0_4 = arith.constant 0 : index
    %c0_5 = arith.constant 0 : index
    %5 = vector.load %arg4[%c0_4, %c0_5] : memref<32x32xf32, #tpu.memory_space<vmem>>, vector<32x32xf32>
    %cst = arith.constant dense<0.000000e+00> : vector<16x32xf32>
    %6 = tpu.matmul %4, %5, %cst {dimension_numbers = #tpu.dot_dimension_numbers<[1], [0], [0], [1], [0, 0, 1, 1], [], []>} : vector<16x32xf32>, vector<32x32xf32>, vector<16x32xf32> -> vector<16x32xf32>
    %7 = arith.addf %3, %6 : vector<16x32xf32>
    %c0_6 = arith.constant 0 : index
    %c0_7 = arith.constant 0 : index
    %8 = vector.load %arg6[%c0_6, %c0_7] : memref<16x32xf32, #tpu.memory_space<vmem>>, vector<16x32xf32>
    tpu.vector_store %arg6[%c0_6, %c0_7], %7 {strides = array<i32>} : memref<16x32xf32, #tpu.memory_space<vmem>>, vector<16x32xf32>,
    %c0_i32_8 = arith.constant 0 : i32
    %9 = arith.cmpi eq, %arg2, %c0_i32_8 : i32
    %10 = arith.extui %9 : i1 to i32
    %c0_i32_9 = arith.constant 0 : i32
    %11 = arith.cmpi ne, %10, %c0_i32_9 : i32
    scf.if %11 {
      %c0_10 = arith.constant 0 : index
      %c0_11 = arith.constant 0 : index
      %12 = vector.load %arg6[%c0_10, %c0_11] : memref<16x32xf32, #tpu.memory_space<vmem>>, vector<16x32xf32>
      %c0_12 = arith.constant 0 : index
      %c0_13 = arith.constant 0 : index
      %13 = vector.load %arg5[%c0_12, %c0_13] : memref<16x32xf32, #tpu.memory_space<vmem>>, vector<16x32xf32>
      tpu.vector_store %arg5[%c0_12, %c0_13], %12 {strides = array<i32>} : memref<16x32xf32, #tpu.memory_space<vmem>>, vector<16x32xf32>,
    } else {
    }
    return
  }
  func.func @transform_0(%arg0: i32, %arg1: i32, %arg2: i32) -> (i32, i32) {
    %c0_i32 = arith.constant 0 : i32
    return %arg0, %arg2 : i32, i32
  }
  func.func @transform_1(%arg0: i32, %arg1: i32, %arg2: i32) -> (i32, i32) {
    %c0_i32 = arith.constant 0 : i32
    return %arg2, %arg1 : i32, i32
  }
  func.func @transform_2(%arg0: i32, %arg1: i32, %arg2: i32) -> (i32, i32) {
    %c0_i32 = arith.constant 0 : i32
    return %arg0, %arg1 : i32, i32
  }
}

module attributes {stable_mosaic.version = 11 : i64} {
  func.func @_mix_kernel(%arg0: i32, %arg1: i32, %arg2: memref<1x8x32xf32, #tpu.memory_space<vmem>>, %arg3: memref<1x8x32xf32, #tpu.memory_space<vmem>>, %arg4: memref<1x32xf32, #tpu.memory_space<vmem>>, %arg5: memref<1x32xf32, #tpu.memory_space<vmem>>, %arg6: memref<1x32xf32, #tpu.memory_space<vmem>>, %arg7: memref<1x32xf32, #tpu.memory_space<vmem>>, %arg8: memref<1x32xf32, #tpu.memory_space<vmem>>, %arg9: memref<1x32xf32, #tpu.memory_space<vmem>>, %arg10: memref<1x8x32xf32, #tpu.memory_space<vmem>>, %arg11: memref<1x8x32xf32, #tpu.memory_space<vmem>>, %arg12: memref<1x8x32xf32, #tpu.memory_space<vmem>>, %arg13: memref<1x8x32xf32, #tpu.memory_space<vmem>>, %arg14: memref<1x8x32xf32, #tpu.memory_space<vmem>>, %arg15: memref<1x8x32xf32, #tpu.memory_space<vmem>>) attributes {dimension_semantics = [#tpu.dimension_semantics<parallel>, #tpu.dimension_semantics<parallel>], iteration_bounds = array<i64: 2, 1>, scalar_prefetch = 0 : i64, scratch_operands = 0 : i64, tpu.core_type = #tpu.core_type<tc>, window_params = [{transform_indices = @transform_0, window_bounds = array<i64: 1, 8, 32>}, {transform_indices = @transform_1, window_bounds = array<i64: 1, 8, 32>}, {pipeline_mode = #tpu.pipeline_mode<synchronous>, transform_indices = @transform_2, window_bounds = array<i64: 1, 32>}, {pipeline_mode = #tpu.pipeline_mode<synchronous>, transform_indices = @transform_3, window_bounds = array<i64: 1, 32>}, {pipeline_mode = #tpu.pipeline_mode<synchronous>, transform_indices = @transform_4, window_bounds = array<i64: 1, 32>}, {pipeline_mode = #tpu.pipeline_mode<synchronous>, transform_indices = @transform_5, window_bounds = array<i64: 1, 32>}, {pipeline_mode = #tpu.pipeline_mode<synchronous>, transform_indices = @transform_6, window_bounds = array<i64: 1, 32>}, {pipeline_mode = #tpu.pipeline_mode<synchronous>, transform_indices = @transform_7, window_bounds = array<i64: 1, 32>}, {transform_indices = @transform_8, window_bounds = array<i64: 1, 8, 32>}, {transform_indices = @transform_9, window_bounds = array<i64: 1, 8, 32>}, {transform_indices = @transform_10, window_bounds = array<i64: 1, 8, 32>}, {transform_indices = @transform_11, window_bounds = array<i64: 1, 8, 32>}, {transform_indices = @transform_12, window_bounds = array<i64: 1, 8, 32>}, {transform_indices = @transform_13, window_bounds = array<i64: 1, 8, 32>}]} {
    %c0 = arith.constant 0 : index
    %c0_0 = arith.constant 0 : index
    %c0_1 = arith.constant 0 : index
    %0 = vector.load %arg2[%c0, %c0_0, %c0_1] : memref<1x8x32xf32, #tpu.memory_space<vmem>>, vector<1x8x32xf32>
    %1 = vector.shape_cast %0 : vector<1x8x32xf32> to vector<8x32xf32>
    %c0_2 = arith.constant 0 : index
    %c0_3 = arith.constant 0 : index
    %c0_4 = arith.constant 0 : index
    %2 = vector.load %arg3[%c0_2, %c0_3, %c0_4] : memref<1x8x32xf32, #tpu.memory_space<vmem>>, vector<1x8x32xf32>
    %3 = vector.shape_cast %2 : vector<1x8x32xf32> to vector<8x32xf32>
    %4 = arith.subf %3, %1 : vector<8x32xf32>
    %c0_5 = arith.constant 0 : index
    %c0_6 = arith.constant 0 : index
    %5 = vector.load %arg4[%c0_5, %c0_6] : memref<1x32xf32, #tpu.memory_space<vmem>>, vector<1x32xf32>
    %6 = vector.broadcast %5 : vector<1x32xf32> to vector<8x32xf32>
    %7 = arith.mulf %6, %4 : vector<8x32xf32>
    %8 = arith.addf %1, %7 : vector<8x32xf32>
    %c0_7 = arith.constant 0 : index
    %c0_8 = arith.constant 0 : index
    %c0_9 = arith.constant 0 : index
    %9 = vector.load %arg10[%c0_7, %c0_8, %c0_9] : memref<1x8x32xf32, #tpu.memory_space<vmem>>, vector<1x8x32xf32>
    %10 = vector.shape_cast %9 : vector<1x8x32xf32> to vector<8x32xf32>
    %11 = vector.shape_cast %8 : vector<8x32xf32> to vector<1x8x32xf32>
    tpu.vector_store %arg10[%c0_7, %c0_8, %c0_9], %11 {strides = array<i32>} : memref<1x8x32xf32, #tpu.memory_space<vmem>>, vector<1x8x32xf32>,
    %c0_10 = arith.constant 0 : index
    %c0_11 = arith.constant 0 : index
    %12 = vector.load %arg5[%c0_10, %c0_11] : memref<1x32xf32, #tpu.memory_space<vmem>>, vector<1x32xf32>
    %13 = vector.broadcast %12 : vector<1x32xf32> to vector<8x32xf32>
    %14 = arith.mulf %13, %4 : vector<8x32xf32>
    %15 = arith.addf %1, %14 : vector<8x32xf32>
    %c0_12 = arith.constant 0 : index
    %c0_13 = arith.constant 0 : index
    %c0_14 = arith.constant 0 : index
    %16 = vector.load %arg11[%c0_12, %c0_13, %c0_14] : memref<1x8x32xf32, #tpu.memory_space<vmem>>, vector<1x8x32xf32>
    %17 = vector.shape_cast %16 : vector<1x8x32xf32> to vector<8x32xf32>
    %18 = vector.shape_cast %15 : vector<8x32xf32> to vector<1x8x32xf32>
    tpu.vector_store %arg11[%c0_12, %c0_13, %c0_14], %18 {strides = array<i32>} : memref<1x8x32xf32, #tpu.memory_space<vmem>>, vector<1x8x32xf32>,
    %c0_15 = arith.constant 0 : index
    %c0_16 = arith.constant 0 : index
    %19 = vector.load %arg6[%c0_15, %c0_16] : memref<1x32xf32, #tpu.memory_space<vmem>>, vector<1x32xf32>
    %20 = vector.broadcast %19 : vector<1x32xf32> to vector<8x32xf32>
    %21 = arith.mulf %20, %4 : vector<8x32xf32>
    %22 = arith.addf %1, %21 : vector<8x32xf32>
    %c0_17 = arith.constant 0 : index
    %c0_18 = arith.constant 0 : index
    %c0_19 = arith.constant 0 : index
    %23 = vector.load %arg12[%c0_17, %c0_18, %c0_19] : memref<1x8x32xf32, #tpu.memory_space<vmem>>, vector<1x8x32xf32>
    %24 = vector.shape_cast %23 : vector<1x8x32xf32> to vector<8x32xf32>
    %25 = vector.shape_cast %22 : vector<8x32xf32> to vector<1x8x32xf32>
    tpu.vector_store %arg12[%c0_17, %c0_18, %c0_19], %25 {strides = array<i32>} : memref<1x8x32xf32, #tpu.memory_space<vmem>>, vector<1x8x32xf32>,
    %c0_20 = arith.constant 0 : index
    %c0_21 = arith.constant 0 : index
    %26 = vector.load %arg7[%c0_20, %c0_21] : memref<1x32xf32, #tpu.memory_space<vmem>>, vector<1x32xf32>
    %27 = vector.broadcast %26 : vector<1x32xf32> to vector<8x32xf32>
    %28 = arith.mulf %27, %4 : vector<8x32xf32>
    %29 = arith.addf %1, %28 : vector<8x32xf32>
    %c0_22 = arith.constant 0 : index
    %c0_23 = arith.constant 0 : index
    %c0_24 = arith.constant 0 : index
    %30 = vector.load %arg13[%c0_22, %c0_23, %c0_24] : memref<1x8x32xf32, #tpu.memory_space<vmem>>, vector<1x8x32xf32>
    %31 = vector.shape_cast %30 : vector<1x8x32xf32> to vector<8x32xf32>
    %32 = vector.shape_cast %29 : vector<8x32xf32> to vector<1x8x32xf32>
    tpu.vector_store %arg13[%c0_22, %c0_23, %c0_24], %32 {strides = array<i32>} : memref<1x8x32xf32, #tpu.memory_space<vmem>>, vector<1x8x32xf32>,
    %c0_25 = arith.constant 0 : index
    %c0_26 = arith.constant 0 : index
    %33 = vector.load %arg8[%c0_25, %c0_26] : memref<1x32xf32, #tpu.memory_space<vmem>>, vector<1x32xf32>
    %34 = vector.broadcast %33 : vector<1x32xf32> to vector<8x32xf32>
    %35 = arith.mulf %34, %4 : vector<8x32xf32>
    %36 = arith.addf %1, %35 : vector<8x32xf32>
    %c0_27 = arith.constant 0 : index
    %c0_28 = arith.constant 0 : index
    %c0_29 = arith.constant 0 : index
    %37 = vector.load %arg14[%c0_27, %c0_28, %c0_29] : memref<1x8x32xf32, #tpu.memory_space<vmem>>, vector<1x8x32xf32>
    %38 = vector.shape_cast %37 : vector<1x8x32xf32> to vector<8x32xf32>
    %39 = vector.shape_cast %36 : vector<8x32xf32> to vector<1x8x32xf32>
    tpu.vector_store %arg14[%c0_27, %c0_28, %c0_29], %39 {strides = array<i32>} : memref<1x8x32xf32, #tpu.memory_space<vmem>>, vector<1x8x32xf32>,
    %c0_30 = arith.constant 0 : index
    %c0_31 = arith.constant 0 : index
    %40 = vector.load %arg9[%c0_30, %c0_31] : memref<1x32xf32, #tpu.memory_space<vmem>>, vector<1x32xf32>
    %41 = vector.broadcast %40 : vector<1x32xf32> to vector<8x32xf32>
    %42 = arith.mulf %41, %4 : vector<8x32xf32>
    %43 = arith.addf %1, %42 : vector<8x32xf32>
    %c0_32 = arith.constant 0 : index
    %c0_33 = arith.constant 0 : index
    %c0_34 = arith.constant 0 : index
    %44 = vector.load %arg15[%c0_32, %c0_33, %c0_34] : memref<1x8x32xf32, #tpu.memory_space<vmem>>, vector<1x8x32xf32>
    %45 = vector.shape_cast %44 : vector<1x8x32xf32> to vector<8x32xf32>
    %46 = vector.shape_cast %43 : vector<8x32xf32> to vector<1x8x32xf32>
    tpu.vector_store %arg15[%c0_32, %c0_33, %c0_34], %46 {strides = array<i32>} : memref<1x8x32xf32, #tpu.memory_space<vmem>>, vector<1x8x32xf32>,
    return
  }
  func.func @transform_0(%arg0: i32, %arg1: i32) -> (i32, i32, i32) {
    %c0_i32 = arith.constant 0 : i32
    %c0_i32_0 = arith.constant 0 : i32
    return %arg0, %arg1, %c0_i32 : i32, i32, i32
  }
  func.func @transform_1(%arg0: i32, %arg1: i32) -> (i32, i32, i32) {
    %c0_i32 = arith.constant 0 : i32
    %c0_i32_0 = arith.constant 0 : i32
    return %arg0, %arg1, %c0_i32 : i32, i32, i32
  }
  func.func @transform_2(%arg0: i32, %arg1: i32) -> (i32, i32) {
    %c0_i32 = arith.constant 0 : i32
    %c0_i32_0 = arith.constant 0 : i32
    %c0_i32_1 = arith.constant 0 : i32
    return %c0_i32, %c0_i32_0 : i32, i32
  }
  func.func @transform_3(%arg0: i32, %arg1: i32) -> (i32, i32) {
    %c0_i32 = arith.constant 0 : i32
    %c0_i32_0 = arith.constant 0 : i32
    %c0_i32_1 = arith.constant 0 : i32
    return %c0_i32, %c0_i32_0 : i32, i32
  }
  func.func @transform_4(%arg0: i32, %arg1: i32) -> (i32, i32) {
    %c0_i32 = arith.constant 0 : i32
    %c0_i32_0 = arith.constant 0 : i32
    %c0_i32_1 = arith.constant 0 : i32
    return %c0_i32, %c0_i32_0 : i32, i32
  }
  func.func @transform_5(%arg0: i32, %arg1: i32) -> (i32, i32) {
    %c0_i32 = arith.constant 0 : i32
    %c0_i32_0 = arith.constant 0 : i32
    %c0_i32_1 = arith.constant 0 : i32
    return %c0_i32, %c0_i32_0 : i32, i32
  }
  func.func @transform_6(%arg0: i32, %arg1: i32) -> (i32, i32) {
    %c0_i32 = arith.constant 0 : i32
    %c0_i32_0 = arith.constant 0 : i32
    %c0_i32_1 = arith.constant 0 : i32
    return %c0_i32, %c0_i32_0 : i32, i32
  }
  func.func @transform_7(%arg0: i32, %arg1: i32) -> (i32, i32) {
    %c0_i32 = arith.constant 0 : i32
    %c0_i32_0 = arith.constant 0 : i32
    %c0_i32_1 = arith.constant 0 : i32
    return %c0_i32, %c0_i32_0 : i32, i32
  }
  func.func @transform_8(%arg0: i32, %arg1: i32) -> (i32, i32, i32) {
    %c0_i32 = arith.constant 0 : i32
    %c0_i32_0 = arith.constant 0 : i32
    return %arg0, %arg1, %c0_i32 : i32, i32, i32
  }
  func.func @transform_9(%arg0: i32, %arg1: i32) -> (i32, i32, i32) {
    %c0_i32 = arith.constant 0 : i32
    %c0_i32_0 = arith.constant 0 : i32
    return %arg0, %arg1, %c0_i32 : i32, i32, i32
  }
  func.func @transform_10(%arg0: i32, %arg1: i32) -> (i32, i32, i32) {
    %c0_i32 = arith.constant 0 : i32
    %c0_i32_0 = arith.constant 0 : i32
    return %arg0, %arg1, %c0_i32 : i32, i32, i32
  }
  func.func @transform_11(%arg0: i32, %arg1: i32) -> (i32, i32, i32) {
    %c0_i32 = arith.constant 0 : i32
    %c0_i32_0 = arith.constant 0 : i32
    return %arg0, %arg1, %c0_i32 : i32, i32, i32
  }
  func.func @transform_12(%arg0: i32, %arg1: i32) -> (i32, i32, i32) {
    %c0_i32 = arith.constant 0 : i32
    %c0_i32_0 = arith.constant 0 : i32
    return %arg0, %arg1, %c0_i32 : i32, i32, i32
  }
  func.func @transform_13(%arg0: i32, %arg1: i32) -> (i32, i32, i32) {
    %c0_i32 = arith.constant 0 : i32
    %c0_i32_0 = arith.constant 0 : i32
    return %arg0, %arg1, %c0_i32 : i32, i32, i32
  }
}

module attributes {stable_mosaic.version = 11 : i64} {
  func.func @_matmul_kernel(%arg0: i32, %arg1: i32, %arg2: i32, %arg3: memref<16x32xf32, #tpu.memory_space<vmem>>, %arg4: memref<32x32xf32, #tpu.memory_space<vmem>>, %arg5: memref<16x32xf32, #tpu.memory_space<vmem>>, %arg6: memref<16x32xf32, #tpu.memory_space<vmem>>) attributes {dimension_semantics = [#tpu.dimension_semantics<parallel>, #tpu.dimension_semantics<parallel>, #tpu.dimension_semantics<arbitrary>], iteration_bounds = array<i64: 1, 1, 1>, scalar_prefetch = 0 : i64, scratch_operands = 1 : i64, tpu.core_type = #tpu.core_type<tc>, window_params = [{transform_indices = @transform_0, window_bounds = array<i64: 16, 32>}, {transform_indices = @transform_1, window_bounds = array<i64: 32, 32>}, {transform_indices = @transform_2, window_bounds = array<i64: 16, 32>}]} {
    %c0_i32 = arith.constant 0 : i32
    %0 = arith.cmpi eq, %arg2, %c0_i32 : i32
    %1 = arith.extui %0 : i1 to i32
    %c0_i32_0 = arith.constant 0 : i32
    %2 = arith.cmpi ne, %1, %c0_i32_0 : i32
    scf.if %2 {
      %cst_10 = arith.constant 0.000000e+00 : f32
      %12 = vector.broadcast %cst_10 : f32 to vector<16x32xf32>
      %c0_11 = arith.constant 0 : index
      %c0_12 = arith.constant 0 : index
      %13 = vector.load %arg6[%c0_11, %c0_12] : memref<16x32xf32, #tpu.memory_space<vmem>>, vector<16x32xf32>
      tpu.vector_store %arg6[%c0_11, %c0_12], %12 {strides = array<i32>} : memref<16x32xf32, #tpu.memory_space<vmem>>, vector<16x32xf32>,
    } else {
    }
    %c0 = arith.constant 0 : index
    %c0_1 = arith.constant 0 : index
    %3 = vector.load %arg6[%c0, %c0_1] : memref<16x32xf32, #tpu.memory_space<vmem>>, vector<16x32xf32>
    %c0_2 = arith.constant 0 : index
    %c0_3 = arith.constant 0 : index
    %4 = vector.load %arg3[%c0_2, %c0_3] : memref<16x32xf32, #tpu.memory_space<vmem>>, vector<16x32xf32>
    %c0_4 = arith.constant 0 : index
    %c0_5 = arith.constant 0 : index
    %5 = vector.load %arg4[%c0_4, %c0_5] : memref<32x32xf32, #tpu.memory_space<vmem>>, vector<32x32xf32>
    %cst = arith.constant dense<0.000000e+00> : vector<16x32xf32>
    %6 = tpu.matmul %4, %5, %cst {dimension_numbers = #tpu.dot_dimension_numbers<[1], [0], [0], [1], [0, 0, 1, 1], [], []>} : vector<16x32xf32>, vector<32x32xf32>, vector<16x32xf32> -> vector<16x32xf32>
    %7 = arith.addf %3, %6 : vector<16x32xf32>
    %c0_6 = arith.constant 0 : index
    %c0_7 = arith.constant 0 : index
    %8 = vector.load %arg6[%c0_6, %c0_7] : memref<16x32xf32, #tpu.memory_space<vmem>>, vector<16x32xf32>
    tpu.vector_store %arg6[%c0_6, %c0_7], %7 {strides = array<i32>} : memref<16x32xf32, #tpu.memory_space<vmem>>, vector<16x32xf32>,
    %c0_i32_8 = arith.constant 0 : i32
    %9 = arith.cmpi eq, %arg2, %c0_i32_8 : i32
    %10 = arith.extui %9 : i1 to i32
    %c0_i32_9 = arith.constant 0 : i32
    %11 = arith.cmpi ne, %10, %c0_i32_9 : i32
    scf.if %11 {
      %c0_10 = arith.constant 0 : index
      %c0_11 = arith.constant 0 : index
      %12 = vector.load %arg6[%c0_10, %c0_11] : memref<16x32xf32, #tpu.memory_space<vmem>>, vector<16x32xf32>
      %c0_12 = arith.constant 0 : index
      %c0_13 = arith.constant 0 : index
      %13 = vector.load %arg5[%c0_12, %c0_13] : memref<16x32xf32, #tpu.memory_space<vmem>>, vector<16x32xf32>
      tpu.vector_store %arg5[%c0_12, %c0_13], %12 {strides = array<i32>} : memref<16x32xf32, #tpu.memory_space<vmem>>, vector<16x32xf32>,
    } else {
    }
    return
  }
  func.func @transform_0(%arg0: i32, %arg1: i32, %arg2: i32) -> (i32, i32) {
    %c0_i32 = arith.constant 0 : i32
    return %arg0, %arg2 : i32, i32
  }
  func.func @transform_1(%arg0: i32, %arg1: i32, %arg2: i32) -> (i32, i32) {
    %c0_i32 = arith.constant 0 : i32
    return %arg2, %arg1 : i32, i32
  }
  func.func @transform_2(%arg0: i32, %arg1: i32, %arg2: i32) -> (i32, i32) {
    %c0_i32 = arith.constant 0 : i32
    return %arg0, %arg1 : i32, i32
  }
}

module attributes {stable_mosaic.version = 11 : i64} {
  func.func @_wkv7_gn_kernel(%arg0: i32, %arg1: i32, %arg2: memref<1x8x32xf32, #tpu.memory_space<vmem>>, %arg3: memref<1x8x32xf32, #tpu.memory_space<vmem>>, %arg4: memref<1x8x32xf32, #tpu.memory_space<vmem>>, %arg5: memref<1x8x32xf32, #tpu.memory_space<vmem>>, %arg6: memref<1x8x32xf32, #tpu.memory_space<vmem>>, %arg7: memref<1x32xf32, #tpu.memory_space<vmem>>, %arg8: memref<1x32xf32, #tpu.memory_space<vmem>>, %arg9: memref<2x16xf32, #tpu.memory_space<vmem>>, %arg10: memref<2x16xf32, #tpu.memory_space<vmem>>, %arg11: memref<2x16xf32, #tpu.memory_space<vmem>>, %arg12: memref<1x8x32xf32, #tpu.memory_space<vmem>>, %arg13: memref<2x16x16xf32, #tpu.memory_space<vmem>>) attributes {dimension_semantics = [#tpu.dimension_semantics<parallel>, #tpu.dimension_semantics<arbitrary>], iteration_bounds = array<i64: 2, 1>, scalar_prefetch = 0 : i64, scratch_operands = 1 : i64, tpu.core_type = #tpu.core_type<tc>, window_params = [{transform_indices = @transform_0, window_bounds = array<i64: 1, 8, 32>}, {transform_indices = @transform_1, window_bounds = array<i64: 1, 8, 32>}, {transform_indices = @transform_2, window_bounds = array<i64: 1, 8, 32>}, {transform_indices = @transform_3, window_bounds = array<i64: 1, 8, 32>}, {transform_indices = @transform_4, window_bounds = array<i64: 1, 8, 32>}, {pipeline_mode = #tpu.pipeline_mode<synchronous>, transform_indices = @transform_5, window_bounds = array<i64: 1, 32>}, {pipeline_mode = #tpu.pipeline_mode<synchronous>, transform_indices = @transform_6, window_bounds = array<i64: 1, 32>}, {pipeline_mode = #tpu.pipeline_mode<synchronous>, transform_indices = @transform_7, window_bounds = array<i64: 2, 16>}, {pipeline_mode = #tpu.pipeline_mode<synchronous>, transform_indices = @transform_8, window_bounds = array<i64: 2, 16>}, {pipeline_mode = #tpu.pipeline_mode<synchronous>, transform_indices = @transform_9, window_bounds = array<i64: 2, 16>}, {transform_indices = @transform_10, window_bounds = array<i64: 1, 8, 32>}]} {
    %c0_i32 = arith.constant 0 : i32
    %0 = arith.cmpi eq, %arg1, %c0_i32 : i32
    %1 = arith.extui %0 : i1 to i32
    %c0_i32_0 = arith.constant 0 : i32
    %2 = arith.cmpi ne, %1, %c0_i32_0 : i32
    scf.if %2 {
      %cst_109 = arith.constant 0.000000e+00 : f32
      %260 = vector.broadcast %cst_109 : f32 to vector<2x16x16xf32>
      %c0_110 = arith.constant 0 : index
      %c0_111 = arith.constant 0 : index
      %c0_112 = arith.constant 0 : index
      %261 = vector.load %arg13[%c0_110, %c0_111, %c0_112] : memref<2x16x16xf32, #tpu.memory_space<vmem>>, vector<2x16x16xf32>
      tpu.vector_store %arg13[%c0_110, %c0_111, %c0_112], %260 {strides = array<i32>} : memref<2x16x16xf32, #tpu.memory_space<vmem>>, vector<2x16x16xf32>,
    } else {
    }
    %c0 = arith.constant 0 : index
    %c0_1 = arith.constant 0 : index
    %c0_2 = arith.constant 0 : index
    %3 = vector.load %arg2[%c0, %c0_1, %c0_2] : memref<1x8x32xf32, #tpu.memory_space<vmem>>, vector<1x8x32xf32>
    %4 = vector.shape_cast %3 : vector<1x8x32xf32> to vector<8x32xf32>
    %c0_3 = arith.constant 0 : index
    %c0_4 = arith.constant 0 : index
    %c0_5 = arith.constant 0 : index
    %5 = vector.load %arg6[%c0_3, %c0_4, %c0_5] : memref<1x8x32xf32, #tpu.memory_space<vmem>>, vector<1x8x32xf32>
    %6 = vector.shape_cast %5 : vector<1x8x32xf32> to vector<8x32xf32>
    %cst = arith.constant 0.000000e+00 : f32
    %7 = vector.broadcast %cst : f32 to vector<8x32xf32>
    %8 = arith.subf %7, %6 : vector<8x32xf32>
    %9 = math.exp %8 : vector<8x32xf32>
    %cst_6 = arith.constant 1.000000e+00 : f32
    %10 = vector.broadcast %cst_6 : f32 to vector<8x32xf32>
    %11 = arith.addf %10, %9 : vector<8x32xf32>
    %cst_7 = arith.constant 1.000000e+00 : f32
    %12 = vector.broadcast %cst_7 : f32 to vector<8x32xf32>
    %13 = arith.divf %12, %11 : vector<8x32xf32>
    %c0_8 = arith.constant 0 : index
    %c0_9 = arith.constant 0 : index
    %c0_10 = arith.constant 0 : index
    %14 = vector.load %arg3[%c0_8, %c0_9, %c0_10] : memref<1x8x32xf32, #tpu.memory_space<vmem>>, vector<1x8x32xf32>
    %15 = vector.shape_cast %14 : vector<1x8x32xf32> to vector<8x32xf32>
    %cst_11 = arith.constant 0.000000e+00 : f32
    %16 = vector.broadcast %cst_11 : f32 to vector<8x32xf32>
    %17 = arith.subf %16, %15 : vector<8x32xf32>
    %18 = math.exp %17 : vector<8x32xf32>
    %cst_12 = arith.constant 1.000000e+00 : f32
    %19 = vector.broadcast %cst_12 : f32 to vector<8x32xf32>
    %20 = arith.addf %19, %18 : vector<8x32xf32>
    %cst_13 = arith.constant 1.000000e+00 : f32
    %21 = vector.broadcast %cst_13 : f32 to vector<8x32xf32>
    %22 = arith.divf %21, %20 : vector<8x32xf32>
    %cst_14 = arith.constant 0.606530666 : f32
    %23 = vector.broadcast %cst_14 : f32 to vector<8x32xf32>
    %24 = arith.mulf %23, %22 : vector<8x32xf32>
    %c0_15 = arith.constant 0 : index
    %c0_16 = arith.constant 0 : index
    %c0_17 = arith.constant 0 : index
    %25 = vector.load %arg4[%c0_15, %c0_16, %c0_17] : memref<1x8x32xf32, #tpu.memory_space<vmem>>, vector<1x8x32xf32>
    %26 = vector.shape_cast %25 : vector<1x8x32xf32> to vector<8x32xf32>
    %c0_18 = arith.constant 0 : index
    %c0_19 = arith.constant 0 : index
    %c0_20 = arith.constant 0 : index
    %27 = vector.load %arg5[%c0_18, %c0_19, %c0_20] : memref<1x8x32xf32, #tpu.memory_space<vmem>>, vector<1x8x32xf32>
    %28 = vector.shape_cast %27 : vector<1x8x32xf32> to vector<8x32xf32>
    %c0_21 = arith.constant 0 : index
    %c0_22 = arith.constant 0 : index
    %29 = vector.load %arg7[%c0_21, %c0_22] : memref<1x32xf32, #tpu.memory_space<vmem>>, vector<1x32xf32>
    %30 = vector.broadcast %29 : vector<1x32xf32> to vector<8x32xf32>
    %31 = arith.mulf %26, %30 : vector<8x32xf32>
    %cst_23 = arith.constant 1.000000e+00 : f32
    %32 = vector.broadcast %cst_23 : f32 to vector<8x32xf32>
    %33 = arith.subf %13, %32 : vector<8x32xf32>
    %c0_24 = arith.constant 0 : index
    %c0_25 = arith.constant 0 : index
    %34 = vector.load %arg8[%c0_24, %c0_25] : memref<1x32xf32, #tpu.memory_space<vmem>>, vector<1x32xf32>
    %35 = vector.broadcast %34 : vector<1x32xf32> to vector<8x32xf32>
    %36 = arith.mulf %33, %35 : vector<8x32xf32>
    %cst_26 = arith.constant 1.000000e+00 : f32
    %37 = vector.broadcast %cst_26 : f32 to vector<8x32xf32>
    %38 = arith.addf %37, %36 : vector<8x32xf32>
    %39 = arith.mulf %26, %38 : vector<8x32xf32>
    %40 = tpu.iota {dimensions = array<i32: 0>} : vector<8x8xi32>
    %41 = tpu.iota {dimensions = array<i32: 1>} : vector<8x8xi32>
    %42 = arith.cmpi sle, %41, %40 : vector<8x8xi32>
    %43 = arith.extui %42 : vector<8x8xi1> to vector<8x8xi32>
    %44 = arith.sitofp %43 : vector<8x8xi32> to vector<8x8xf32>
    %45 = arith.cmpi slt, %41, %40 : vector<8x8xi32>
    %46 = arith.extui %45 : vector<8x8xi1> to vector<8x8xi32>
    %47 = arith.sitofp %46 : vector<8x8xi32> to vector<8x8xf32>
    %48 = arith.cmpi eq, %41, %40 : vector<8x8xi32>
    %49 = arith.extui %48 : vector<8x8xi1> to vector<8x8xi32>
    %50 = arith.sitofp %49 : vector<8x8xi32> to vector<8x8xf32>
    %51 = tpu.iota {dimensions = array<i32: 0>} : vector<16x16xi32>
    %52 = tpu.iota {dimensions = array<i32: 1>} : vector<16x16xi32>
    %53 = arith.cmpi eq, %51, %52 : vector<16x16xi32>
    %54 = arith.extui %53 : vector<16x16xi1> to vector<16x16xi32>
    %55 = arith.sitofp %54 : vector<16x16xi32> to vector<16x16xf32>
    %56 = vector.extract_strided_slice %4 {offsets = [0, 0], sizes = [8, 16], strides = [1, 1]} : vector<8x32xf32> to vector<8x16xf32>
    %57 = vector.extract_strided_slice %24 {offsets = [0, 0], sizes = [8, 16], strides = [1, 1]} : vector<8x32xf32> to vector<8x16xf32>
    %58 = vector.extract_strided_slice %39 {offsets = [0, 0], sizes = [8, 16], strides = [1, 1]} : vector<8x32xf32> to vector<8x16xf32>
    %59 = vector.extract_strided_slice %28 {offsets = [0, 0], sizes = [8, 16], strides = [1, 1]} : vector<8x32xf32> to vector<8x16xf32>
    %60 = vector.extract_strided_slice %31 {offsets = [0, 0], sizes = [8, 16], strides = [1, 1]} : vector<8x32xf32> to vector<8x16xf32>
    %61 = vector.extract_strided_slice %13 {offsets = [0, 0], sizes = [8, 16], strides = [1, 1]} : vector<8x32xf32> to vector<8x16xf32>
    %62 = arith.mulf %60, %60 : vector<8x16xf32>
    %cst_27 = arith.constant dense<0.000000e+00> : vector<8xf32>
    %63 = vector.multi_reduction <add>, %62, %cst_27 [1] : vector<8x16xf32> to vector<8xf32>
    %64 = vector.shape_cast %63 : vector<8xf32> to vector<8x1xf32>
    %65 = math.sqrt %64 : vector<8x1xf32>
    %cst_28 = arith.constant 9.99999996E-13 : f32
    %66 = vector.broadcast %cst_28 : f32 to vector<8x1xf32>
    %67 = arith.maximumf %65, %66 : vector<8x1xf32>
    %68 = vector.broadcast %67 : vector<8x1xf32> to vector<8x16xf32>
    %69 = arith.divf %60, %68 : vector<8x16xf32>
    %cst_29 = arith.constant 0.000000e+00 : f32
    %70 = vector.broadcast %cst_29 : f32 to vector<8x16xf32>
    %71 = arith.subf %70, %69 : vector<8x16xf32>
    %72 = arith.mulf %71, %61 : vector<8x16xf32>
    %cst_30 = arith.constant dense<0.000000e+00> : vector<8x16xf32>
    %73 = tpu.matmul %44, %57, %cst_30 {dimension_numbers = #tpu.dot_dimension_numbers<[1], [0], [0], [1], [0, 0, 1, 1], [], []>} : vector<8x8xf32>, vector<8x16xf32>, vector<8x16xf32> -> vector<8x16xf32>
    %cst_31 = arith.constant 0.000000e+00 : f32
    %74 = vector.broadcast %cst_31 : f32 to vector<8x16xf32>
    %75 = arith.subf %74, %73 : vector<8x16xf32>
    %76 = math.exp %75 : vector<8x16xf32>
    %77 = arith.subf %57, %73 : vector<8x16xf32>
    %78 = math.exp %77 : vector<8x16xf32>
    %79 = math.exp %73 : vector<8x16xf32>
    %80 = arith.mulf %69, %78 : vector<8x16xf32>
    %81 = arith.mulf %72, %79 : vector<8x16xf32>
    %82 = arith.mulf %58, %79 : vector<8x16xf32>
    %83 = arith.mulf %56, %76 : vector<8x16xf32>
    %c0_32 = arith.constant 0 : index
    %c0_33 = arith.constant 0 : index
    %c0_34 = arith.constant 0 : index
    %84 = vector.load %arg13[%c0_32, %c0_33, %c0_34] : memref<2x16x16xf32, #tpu.memory_space<vmem>>, vector<1x16x16xf32>
    %85 = vector.shape_cast %84 : vector<1x16x16xf32> to vector<16x16xf32>
    %cst_35 = arith.constant dense<0.000000e+00> : vector<8x8xf32>
    %86 = tpu.matmul %80, %81, %cst_35 {dimension_numbers = #tpu.dot_dimension_numbers<[1], [1], [0], [0], [0, 0, 1, 0], [], []>} : vector<8x16xf32>, vector<8x16xf32>, vector<8x8xf32> -> vector<8x8xf32>
    %87 = arith.mulf %47, %86 : vector<8x8xf32>
    %cst_36 = arith.constant dense<0.000000e+00> : vector<8x8xf32>
    %88 = tpu.matmul %80, %82, %cst_36 {dimension_numbers = #tpu.dot_dimension_numbers<[1], [1], [0], [0], [0, 0, 1, 0], [], []>} : vector<8x16xf32>, vector<8x16xf32>, vector<8x8xf32> -> vector<8x8xf32>
    %89 = arith.mulf %47, %88 : vector<8x8xf32>
    %cst_37 = arith.constant dense<0.000000e+00> : vector<8x16xf32>
    %90 = tpu.matmul %80, %85, %cst_37 {dimension_numbers = #tpu.dot_dimension_numbers<[1], [0], [0], [1], [0, 0, 1, 1], [], []>} : vector<8x16xf32>, vector<16x16xf32>, vector<8x16xf32> -> vector<8x16xf32>
    %cst_38 = arith.constant dense<0.000000e+00> : vector<8x16xf32>
    %91 = tpu.matmul %89, %59, %cst_38 {dimension_numbers = #tpu.dot_dimension_numbers<[1], [0], [0], [1], [0, 0, 1, 1], [], []>} : vector<8x8xf32>, vector<8x16xf32>, vector<8x16xf32> -> vector<8x16xf32>
    %92 = arith.addf %90, %91 : vector<8x16xf32>
    %93 = arith.addf %50, %87 : vector<8x8xf32>
    %cst_39 = arith.constant dense<0.000000e+00> : vector<8x8xf32>
    %94 = tpu.matmul %87, %87, %cst_39 {dimension_numbers = #tpu.dot_dimension_numbers<[1], [0], [0], [1], [0, 0, 1, 1], [], []>} : vector<8x8xf32>, vector<8x8xf32>, vector<8x8xf32> -> vector<8x8xf32>
    %cst_40 = arith.constant dense<0.000000e+00> : vector<8x8xf32>
    %95 = tpu.matmul %93, %94, %cst_40 {dimension_numbers = #tpu.dot_dimension_numbers<[1], [0], [0], [1], [0, 0, 1, 1], [], []>} : vector<8x8xf32>, vector<8x8xf32>, vector<8x8xf32> -> vector<8x8xf32>
    %96 = arith.addf %93, %95 : vector<8x8xf32>
    %cst_41 = arith.constant dense<0.000000e+00> : vector<8x8xf32>
    %97 = tpu.matmul %94, %94, %cst_41 {dimension_numbers = #tpu.dot_dimension_numbers<[1], [0], [0], [1], [0, 0, 1, 1], [], []>} : vector<8x8xf32>, vector<8x8xf32>, vector<8x8xf32> -> vector<8x8xf32>
    %cst_42 = arith.constant dense<0.000000e+00> : vector<8x8xf32>
    %98 = tpu.matmul %96, %97, %cst_42 {dimension_numbers = #tpu.dot_dimension_numbers<[1], [0], [0], [1], [0, 0, 1, 1], [], []>} : vector<8x8xf32>, vector<8x8xf32>, vector<8x8xf32> -> vector<8x8xf32>
    %99 = arith.addf %96, %98 : vector<8x8xf32>
    %cst_43 = arith.constant dense<0.000000e+00> : vector<8x16xf32>
    %100 = tpu.matmul %99, %92, %cst_43 {dimension_numbers = #tpu.dot_dimension_numbers<[1], [0], [0], [1], [0, 0, 1, 1], [], []>} : vector<8x8xf32>, vector<8x16xf32>, vector<8x16xf32> -> vector<8x16xf32>
    %cst_44 = arith.constant dense<0.000000e+00> : vector<8x8xf32>
    %101 = tpu.matmul %83, %81, %cst_44 {dimension_numbers = #tpu.dot_dimension_numbers<[1], [1], [0], [0], [0, 0, 1, 0], [], []>} : vector<8x16xf32>, vector<8x16xf32>, vector<8x8xf32> -> vector<8x8xf32>
    %102 = arith.mulf %44, %101 : vector<8x8xf32>
    %cst_45 = arith.constant dense<0.000000e+00> : vector<8x8xf32>
    %103 = tpu.matmul %83, %82, %cst_45 {dimension_numbers = #tpu.dot_dimension_numbers<[1], [1], [0], [0], [0, 0, 1, 0], [], []>} : vector<8x16xf32>, vector<8x16xf32>, vector<8x8xf32> -> vector<8x8xf32>
    %104 = arith.mulf %44, %103 : vector<8x8xf32>
    %cst_46 = arith.constant dense<0.000000e+00> : vector<8x16xf32>
    %105 = tpu.matmul %83, %85, %cst_46 {dimension_numbers = #tpu.dot_dimension_numbers<[1], [0], [0], [1], [0, 0, 1, 1], [], []>} : vector<8x16xf32>, vector<16x16xf32>, vector<8x16xf32> -> vector<8x16xf32>
    %cst_47 = arith.constant dense<0.000000e+00> : vector<8x16xf32>
    %106 = tpu.matmul %102, %100, %cst_47 {dimension_numbers = #tpu.dot_dimension_numbers<[1], [0], [0], [1], [0, 0, 1, 1], [], []>} : vector<8x8xf32>, vector<8x16xf32>, vector<8x16xf32> -> vector<8x16xf32>
    %107 = arith.addf %105, %106 : vector<8x16xf32>
    %cst_48 = arith.constant dense<0.000000e+00> : vector<8x16xf32>
    %108 = tpu.matmul %104, %59, %cst_48 {dimension_numbers = #tpu.dot_dimension_numbers<[1], [0], [0], [1], [0, 0, 1, 1], [], []>} : vector<8x8xf32>, vector<8x16xf32>, vector<8x16xf32> -> vector<8x16xf32>
    %109 = arith.addf %107, %108 : vector<8x16xf32>
    %110 = vector.extract_strided_slice %76 {offsets = [7, 0], sizes = [1, 16], strides = [1, 1]} : vector<8x16xf32> to vector<1x16xf32>
    %111 = vector.broadcast %110 : vector<1x16xf32> to vector<8x16xf32>
    %112 = arith.mulf %81, %111 : vector<8x16xf32>
    %113 = vector.broadcast %110 : vector<1x16xf32> to vector<8x16xf32>
    %114 = arith.mulf %82, %113 : vector<8x16xf32>
    %115 = vector.broadcast %110 : vector<1x16xf32> to vector<16x16xf32>
    %116 = arith.mulf %55, %115 : vector<16x16xf32>
    %cst_49 = arith.constant dense<0.000000e+00> : vector<16x16xf32>
    %117 = tpu.matmul %116, %85, %cst_49 {dimension_numbers = #tpu.dot_dimension_numbers<[1], [0], [0], [1], [0, 0, 1, 1], [], []>} : vector<16x16xf32>, vector<16x16xf32>, vector<16x16xf32> -> vector<16x16xf32>
    %cst_50 = arith.constant dense<0.000000e+00> : vector<16x16xf32>
    %118 = tpu.matmul %112, %100, %cst_50 {dimension_numbers = #tpu.dot_dimension_numbers<[0], [0], [1], [1], [0, 1, 1, 1], [], []>} : vector<8x16xf32>, vector<8x16xf32>, vector<16x16xf32> -> vector<16x16xf32>
    %119 = arith.addf %117, %118 : vector<16x16xf32>
    %cst_51 = arith.constant dense<0.000000e+00> : vector<16x16xf32>
    %120 = tpu.matmul %114, %59, %cst_51 {dimension_numbers = #tpu.dot_dimension_numbers<[0], [0], [1], [1], [0, 1, 1, 1], [], []>} : vector<8x16xf32>, vector<8x16xf32>, vector<16x16xf32> -> vector<16x16xf32>
    %121 = arith.addf %119, %120 : vector<16x16xf32>
    %c0_52 = arith.constant 0 : index
    %c0_53 = arith.constant 0 : index
    %c0_54 = arith.constant 0 : index
    %122 = vector.load %arg13[%c0_52, %c0_53, %c0_54] : memref<2x16x16xf32, #tpu.memory_space<vmem>>, vector<1x16x16xf32>
    %123 = vector.shape_cast %122 : vector<1x16x16xf32> to vector<16x16xf32>
    %124 = vector.shape_cast %121 : vector<16x16xf32> to vector<1x16x16xf32>
    tpu.vector_store %arg13[%c0_52, %c0_53, %c0_54], %124 {strides = array<i32>} : memref<2x16x16xf32, #tpu.memory_space<vmem>>, vector<1x16x16xf32>,
    %cst_55 = arith.constant dense<0.000000e+00> : vector<8xf32>
    %125 = vector.multi_reduction <add>, %109, %cst_55 [1] : vector<8x16xf32> to vector<8xf32>
    %126 = vector.shape_cast %125 : vector<8xf32> to vector<8x1xf32>
    %cst_56 = arith.constant 1.600000e+01 : f32
    %127 = vector.broadcast %cst_56 : f32 to vector<8x1xf32>
    %128 = arith.divf %126, %127 : vector<8x1xf32>
    %129 = vector.broadcast %128 : vector<8x1xf32> to vector<8x16xf32>
    %130 = arith.subf %109, %129 : vector<8x16xf32>
    %131 = arith.mulf %130, %130 : vector<8x16xf32>
    %cst_57 = arith.constant dense<0.000000e+00> : vector<8xf32>
    %132 = vector.multi_reduction <add>, %131, %cst_57 [1] : vector<8x16xf32> to vector<8xf32>
    %133 = vector.shape_cast %132 : vector<8xf32> to vector<8x1xf32>
    %cst_58 = arith.constant 1.600000e+01 : f32
    %134 = vector.broadcast %cst_58 : f32 to vector<8x1xf32>
    %135 = arith.divf %133, %134 : vector<8x1xf32>
    %cst_59 = arith.constant 6.400000e-04 : f32
    %136 = vector.broadcast %cst_59 : f32 to vector<8x1xf32>
    %137 = arith.addf %135, %136 : vector<8x1xf32>
    %138 = math.rsqrt %137 : vector<8x1xf32>
    %139 = vector.broadcast %138 : vector<8x1xf32> to vector<8x16xf32>
    %140 = arith.mulf %130, %139 : vector<8x16xf32>
    %c0_60 = arith.constant 0 : index
    %c0_61 = arith.constant 0 : index
    %141 = vector.load %arg10[%c0_60, %c0_61] : memref<2x16xf32, #tpu.memory_space<vmem>>, vector<1x16xf32>
    %142 = vector.broadcast %141 : vector<1x16xf32> to vector<8x16xf32>
    %143 = arith.mulf %140, %142 : vector<8x16xf32>
    %c0_62 = arith.constant 0 : index
    %c0_63 = arith.constant 0 : index
    %144 = vector.load %arg11[%c0_62, %c0_63] : memref<2x16xf32, #tpu.memory_space<vmem>>, vector<1x16xf32>
    %145 = vector.broadcast %144 : vector<1x16xf32> to vector<8x16xf32>
    %146 = arith.addf %143, %145 : vector<8x16xf32>
    %147 = arith.mulf %56, %58 : vector<8x16xf32>
    %c0_64 = arith.constant 0 : index
    %c0_65 = arith.constant 0 : index
    %148 = vector.load %arg9[%c0_64, %c0_65] : memref<2x16xf32, #tpu.memory_space<vmem>>, vector<1x16xf32>
    %149 = vector.broadcast %148 : vector<1x16xf32> to vector<8x16xf32>
    %150 = arith.mulf %147, %149 : vector<8x16xf32>
    %cst_66 = arith.constant dense<0.000000e+00> : vector<8xf32>
    %151 = vector.multi_reduction <add>, %150, %cst_66 [1] : vector<8x16xf32> to vector<8xf32>
    %152 = vector.shape_cast %151 : vector<8xf32> to vector<8x1xf32>
    %153 = vector.broadcast %152 : vector<8x1xf32> to vector<8x16xf32>
    %154 = arith.mulf %153, %59 : vector<8x16xf32>
    %155 = arith.addf %146, %154 : vector<8x16xf32>
    %156 = vector.extract_strided_slice %4 {offsets = [0, 16], sizes = [8, 16], strides = [1, 1]} : vector<8x32xf32> to vector<8x16xf32>
    %157 = vector.extract_strided_slice %24 {offsets = [0, 16], sizes = [8, 16], strides = [1, 1]} : vector<8x32xf32> to vector<8x16xf32>
    %158 = vector.extract_strided_slice %39 {offsets = [0, 16], sizes = [8, 16], strides = [1, 1]} : vector<8x32xf32> to vector<8x16xf32>
    %159 = vector.extract_strided_slice %28 {offsets = [0, 16], sizes = [8, 16], strides = [1, 1]} : vector<8x32xf32> to vector<8x16xf32>
    %160 = vector.extract_strided_slice %31 {offsets = [0, 16], sizes = [8, 16], strides = [1, 1]} : vector<8x32xf32> to vector<8x16xf32>
    %161 = vector.extract_strided_slice %13 {offsets = [0, 16], sizes = [8, 16], strides = [1, 1]} : vector<8x32xf32> to vector<8x16xf32>
    %162 = arith.mulf %160, %160 : vector<8x16xf32>
    %cst_67 = arith.constant dense<0.000000e+00> : vector<8xf32>
    %163 = vector.multi_reduction <add>, %162, %cst_67 [1] : vector<8x16xf32> to vector<8xf32>
    %164 = vector.shape_cast %163 : vector<8xf32> to vector<8x1xf32>
    %165 = math.sqrt %164 : vector<8x1xf32>
    %cst_68 = arith.constant 9.99999996E-13 : f32
    %166 = vector.broadcast %cst_68 : f32 to vector<8x1xf32>
    %167 = arith.maximumf %165, %166 : vector<8x1xf32>
    %168 = vector.broadcast %167 : vector<8x1xf32> to vector<8x16xf32>
    %169 = arith.divf %160, %168 : vector<8x16xf32>
    %cst_69 = arith.constant 0.000000e+00 : f32
    %170 = vector.broadcast %cst_69 : f32 to vector<8x16xf32>
    %171 = arith.subf %170, %169 : vector<8x16xf32>
    %172 = arith.mulf %171, %161 : vector<8x16xf32>
    %cst_70 = arith.constant dense<0.000000e+00> : vector<8x16xf32>
    %173 = tpu.matmul %44, %157, %cst_70 {dimension_numbers = #tpu.dot_dimension_numbers<[1], [0], [0], [1], [0, 0, 1, 1], [], []>} : vector<8x8xf32>, vector<8x16xf32>, vector<8x16xf32> -> vector<8x16xf32>
    %cst_71 = arith.constant 0.000000e+00 : f32
    %174 = vector.broadcast %cst_71 : f32 to vector<8x16xf32>
    %175 = arith.subf %174, %173 : vector<8x16xf32>
    %176 = math.exp %175 : vector<8x16xf32>
    %177 = arith.subf %157, %173 : vector<8x16xf32>
    %178 = math.exp %177 : vector<8x16xf32>
    %179 = math.exp %173 : vector<8x16xf32>
    %180 = arith.mulf %169, %178 : vector<8x16xf32>
    %181 = arith.mulf %172, %179 : vector<8x16xf32>
    %182 = arith.mulf %158, %179 : vector<8x16xf32>
    %183 = arith.mulf %156, %176 : vector<8x16xf32>
    %c1 = arith.constant 1 : index
    %c0_72 = arith.constant 0 : index
    %c0_73 = arith.constant 0 : index
    %184 = vector.load %arg13[%c1, %c0_72, %c0_73] : memref<2x16x16xf32, #tpu.memory_space<vmem>>, vector<1x16x16xf32>
    %185 = vector.shape_cast %184 : vector<1x16x16xf32> to vector<16x16xf32>
    %cst_74 = arith.constant dense<0.000000e+00> : vector<8x8xf32>
    %186 = tpu.matmul %180, %181, %cst_74 {dimension_numbers = #tpu.dot_dimension_numbers<[1], [1], [0], [0], [0, 0, 1, 0], [], []>} : vector<8x16xf32>, vector<8x16xf32>, vector<8x8xf32> -> vector<8x8xf32>
    %187 = arith.mulf %47, %186 : vector<8x8xf32>
    %cst_75 = arith.constant dense<0.000000e+00> : vector<8x8xf32>
    %188 = tpu.matmul %180, %182, %cst_75 {dimension_numbers = #tpu.dot_dimension_numbers<[1], [1], [0], [0], [0, 0, 1, 0], [], []>} : vector<8x16xf32>, vector<8x16xf32>, vector<8x8xf32> -> vector<8x8xf32>
    %189 = arith.mulf %47, %188 : vector<8x8xf32>
    %cst_76 = arith.constant dense<0.000000e+00> : vector<8x16xf32>
    %190 = tpu.matmul %180, %185, %cst_76 {dimension_numbers = #tpu.dot_dimension_numbers<[1], [0], [0], [1], [0, 0, 1, 1], [], []>} : vector<8x16xf32>, vector<16x16xf32>, vector<8x16xf32> -> vector<8x16xf32>
    %cst_77 = arith.constant dense<0.000000e+00> : vector<8x16xf32>
    %191 = tpu.matmul %189, %159, %cst_77 {dimension_numbers = #tpu.dot_dimension_numbers<[1], [0], [0], [1], [0, 0, 1, 1], [], []>} : vector<8x8xf32>, vector<8x16xf32>, vector<8x16xf32> -> vector<8x16xf32>
    %192 = arith.addf %190, %191 : vector<8x16xf32>
    %193 = arith.addf %50, %187 : vector<8x8xf32>
    %cst_78 = arith.constant dense<0.000000e+00> : vector<8x8xf32>
    %194 = tpu.matmul %187, %187, %cst_78 {dimension_numbers = #tpu.dot_dimension_numbers<[1], [0], [0], [1], [0, 0, 1, 1], [], []>} : vector<8x8xf32>, vector<8x8xf32>, vector<8x8xf32> -> vector<8x8xf32>
    %cst_79 = arith.constant dense<0.000000e+00> : vector<8x8xf32>
    %195 = tpu.matmul %193, %194, %cst_79 {dimension_numbers = #tpu.dot_dimension_numbers<[1], [0], [0], [1], [0, 0, 1, 1], [], []>} : vector<8x8xf32>, vector<8x8xf32>, vector<8x8xf32> -> vector<8x8xf32>
    %196 = arith.addf %193, %195 : vector<8x8xf32>
    %cst_80 = arith.constant dense<0.000000e+00> : vector<8x8xf32>
    %197 = tpu.matmul %194, %194, %cst_80 {dimension_numbers = #tpu.dot_dimension_numbers<[1], [0], [0], [1], [0, 0, 1, 1], [], []>} : vector<8x8xf32>, vector<8x8xf32>, vector<8x8xf32> -> vector<8x8xf32>
    %cst_81 = arith.constant dense<0.000000e+00> : vector<8x8xf32>
    %198 = tpu.matmul %196, %197, %cst_81 {dimension_numbers = #tpu.dot_dimension_numbers<[1], [0], [0], [1], [0, 0, 1, 1], [], []>} : vector<8x8xf32>, vector<8x8xf32>, vector<8x8xf32> -> vector<8x8xf32>
    %199 = arith.addf %196, %198 : vector<8x8xf32>
    %cst_82 = arith.constant dense<0.000000e+00> : vector<8x16xf32>
    %200 = tpu.matmul %199, %192, %cst_82 {dimension_numbers = #tpu.dot_dimension_numbers<[1], [0], [0], [1], [0, 0, 1, 1], [], []>} : vector<8x8xf32>, vector<8x16xf32>, vector<8x16xf32> -> vector<8x16xf32>
    %cst_83 = arith.constant dense<0.000000e+00> : vector<8x8xf32>
    %201 = tpu.matmul %183, %181, %cst_83 {dimension_numbers = #tpu.dot_dimension_numbers<[1], [1], [0], [0], [0, 0, 1, 0], [], []>} : vector<8x16xf32>, vector<8x16xf32>, vector<8x8xf32> -> vector<8x8xf32>
    %202 = arith.mulf %44, %201 : vector<8x8xf32>
    %cst_84 = arith.constant dense<0.000000e+00> : vector<8x8xf32>
    %203 = tpu.matmul %183, %182, %cst_84 {dimension_numbers = #tpu.dot_dimension_numbers<[1], [1], [0], [0], [0, 0, 1, 0], [], []>} : vector<8x16xf32>, vector<8x16xf32>, vector<8x8xf32> -> vector<8x8xf32>
    %204 = arith.mulf %44, %203 : vector<8x8xf32>
    %cst_85 = arith.constant dense<0.000000e+00> : vector<8x16xf32>
    %205 = tpu.matmul %183, %185, %cst_85 {dimension_numbers = #tpu.dot_dimension_numbers<[1], [0], [0], [1], [0, 0, 1, 1], [], []>} : vector<8x16xf32>, vector<16x16xf32>, vector<8x16xf32> -> vector<8x16xf32>
    %cst_86 = arith.constant dense<0.000000e+00> : vector<8x16xf32>
    %206 = tpu.matmul %202, %200, %cst_86 {dimension_numbers = #tpu.dot_dimension_numbers<[1], [0], [0], [1], [0, 0, 1, 1], [], []>} : vector<8x8xf32>, vector<8x16xf32>, vector<8x16xf32> -> vector<8x16xf32>
    %207 = arith.addf %205, %206 : vector<8x16xf32>
    %cst_87 = arith.constant dense<0.000000e+00> : vector<8x16xf32>
    %208 = tpu.matmul %204, %159, %cst_87 {dimension_numbers = #tpu.dot_dimension_numbers<[1], [0], [0], [1], [0, 0, 1, 1], [], []>} : vector<8x8xf32>, vector<8x16xf32>, vector<8x16xf32> -> vector<8x16xf32>
    %209 = arith.addf %207, %208 : vector<8x16xf32>
    %210 = vector.extract_strided_slice %176 {offsets = [7, 0], sizes = [1, 16], strides = [1, 1]} : vector<8x16xf32> to vector<1x16xf32>
    %211 = vector.broadcast %210 : vector<1x16xf32> to vector<8x16xf32>
    %212 = arith.mulf %181, %211 : vector<8x16xf32>
    %213 = vector.broadcast %210 : vector<1x16xf32> to vector<8x16xf32>
    %214 = arith.mulf %182, %213 : vector<8x16xf32>
    %215 = vector.broadcast %210 : vector<1x16xf32> to vector<16x16xf32>
    %216 = arith.mulf %55, %215 : vector<16x16xf32>
    %cst_88 = arith.constant dense<0.000000e+00> : vector<16x16xf32>
    %217 = tpu.matmul %216, %185, %cst_88 {dimension_numbers = #tpu.dot_dimension_numbers<[1], [0], [0], [1], [0, 0, 1, 1], [], []>} : vector<16x16xf32>, vector<16x16xf32>, vector<16x16xf32> -> vector<16x16xf32>
    %cst_89 = arith.constant dense<0.000000e+00> : vector<16x16xf32>
    %218 = tpu.matmul %212, %200, %cst_89 {dimension_numbers = #tpu.dot_dimension_numbers<[0], [0], [1], [1], [0, 1, 1, 1], [], []>} : vector<8x16xf32>, vector<8x16xf32>, vector<16x16xf32> -> vector<16x16xf32>
    %219 = arith.addf %217, %218 : vector<16x16xf32>
    %cst_90 = arith.constant dense<0.000000e+00> : vector<16x16xf32>
    %220 = tpu.matmul %214, %159, %cst_90 {dimension_numbers = #tpu.dot_dimension_numbers<[0], [0], [1], [1], [0, 1, 1, 1], [], []>} : vector<8x16xf32>, vector<8x16xf32>, vector<16x16xf32> -> vector<16x16xf32>
    %221 = arith.addf %219, %220 : vector<16x16xf32>
    %c1_91 = arith.constant 1 : index
    %c0_92 = arith.constant 0 : index
    %c0_93 = arith.constant 0 : index
    %222 = vector.load %arg13[%c1_91, %c0_92, %c0_93] : memref<2x16x16xf32, #tpu.memory_space<vmem>>, vector<1x16x16xf32>
    %223 = vector.shape_cast %222 : vector<1x16x16xf32> to vector<16x16xf32>
    %224 = vector.shape_cast %221 : vector<16x16xf32> to vector<1x16x16xf32>
    tpu.vector_store %arg13[%c1_91, %c0_92, %c0_93], %224 {strides = array<i32>} : memref<2x16x16xf32, #tpu.memory_space<vmem>>, vector<1x16x16xf32>,
    %cst_94 = arith.constant dense<0.000000e+00> : vector<8xf32>
    %225 = vector.multi_reduction <add>, %209, %cst_94 [1] : vector<8x16xf32> to vector<8xf32>
    %226 = vector.shape_cast %225 : vector<8xf32> to vector<8x1xf32>
    %cst_95 = arith.constant 1.600000e+01 : f32
    %227 = vector.broadcast %cst_95 : f32 to vector<8x1xf32>
    %228 = arith.divf %226, %227 : vector<8x1xf32>
    %229 = vector.broadcast %228 : vector<8x1xf32> to vector<8x16xf32>
    %230 = arith.subf %209, %229 : vector<8x16xf32>
    %231 = arith.mulf %230, %230 : vector<8x16xf32>
    %cst_96 = arith.constant dense<0.000000e+00> : vector<8xf32>
    %232 = vector.multi_reduction <add>, %231, %cst_96 [1] : vector<8x16xf32> to vector<8xf32>
    %233 = vector.shape_cast %232 : vector<8xf32> to vector<8x1xf32>
    %cst_97 = arith.constant 1.600000e+01 : f32
    %234 = vector.broadcast %cst_97 : f32 to vector<8x1xf32>
    %235 = arith.divf %233, %234 : vector<8x1xf32>
    %cst_98 = arith.constant 6.400000e-04 : f32
    %236 = vector.broadcast %cst_98 : f32 to vector<8x1xf32>
    %237 = arith.addf %235, %236 : vector<8x1xf32>
    %238 = math.rsqrt %237 : vector<8x1xf32>
    %239 = vector.broadcast %238 : vector<8x1xf32> to vector<8x16xf32>
    %240 = arith.mulf %230, %239 : vector<8x16xf32>
    %c1_99 = arith.constant 1 : index
    %c0_100 = arith.constant 0 : index
    %241 = vector.load %arg10[%c1_99, %c0_100] : memref<2x16xf32, #tpu.memory_space<vmem>>, vector<1x16xf32>
    %242 = vector.broadcast %241 : vector<1x16xf32> to vector<8x16xf32>
    %243 = arith.mulf %240, %242 : vector<8x16xf32>
    %c1_101 = arith.constant 1 : index
    %c0_102 = arith.constant 0 : index
    %244 = vector.load %arg11[%c1_101, %c0_102] : memref<2x16xf32, #tpu.memory_space<vmem>>, vector<1x16xf32>
    %245 = vector.broadcast %244 : vector<1x16xf32> to vector<8x16xf32>
    %246 = arith.addf %243, %245 : vector<8x16xf32>
    %247 = arith.mulf %156, %158 : vector<8x16xf32>
    %c1_103 = arith.constant 1 : index
    %c0_104 = arith.constant 0 : index
    %248 = vector.load %arg9[%c1_103, %c0_104] : memref<2x16xf32, #tpu.memory_space<vmem>>, vector<1x16xf32>
    %249 = vector.broadcast %248 : vector<1x16xf32> to vector<8x16xf32>
    %250 = arith.mulf %247, %249 : vector<8x16xf32>
    %cst_105 = arith.constant dense<0.000000e+00> : vector<8xf32>
    %251 = vector.multi_reduction <add>, %250, %cst_105 [1] : vector<8x16xf32> to vector<8xf32>
    %252 = vector.shape_cast %251 : vector<8xf32> to vector<8x1xf32>
    %253 = vector.broadcast %252 : vector<8x1xf32> to vector<8x16xf32>
    %254 = arith.mulf %253, %159 : vector<8x16xf32>
    %255 = arith.addf %246, %254 : vector<8x16xf32>
    %256 = tpu.concatenate %155, %255 in 1 : vector<8x16xf32>, vector<8x16xf32> -> vector<8x32xf32>
    %c0_106 = arith.constant 0 : index
    %c0_107 = arith.constant 0 : index
    %c0_108 = arith.constant 0 : index
    %257 = vector.load %arg12[%c0_106, %c0_107, %c0_108] : memref<1x8x32xf32, #tpu.memory_space<vmem>>, vector<1x8x32xf32>
    %258 = vector.shape_cast %257 : vector<1x8x32xf32> to vector<8x32xf32>
    %259 = vector.shape_cast %256 : vector<8x32xf32> to vector<1x8x32xf32>
    tpu.vector_store %arg12[%c0_106, %c0_107, %c0_108], %259 {strides = array<i32>} : memref<1x8x32xf32, #tpu.memory_space<vmem>>, vector<1x8x32xf32>,
    return
  }
  func.func @transform_0(%arg0: i32, %arg1: i32) -> (i32, i32, i32) {
    %c0_i32 = arith.constant 0 : i32
    %c0_i32_0 = arith.constant 0 : i32
    return %arg0, %arg1, %c0_i32 : i32, i32, i32
  }
  func.func @transform_1(%arg0: i32, %arg1: i32) -> (i32, i32, i32) {
    %c0_i32 = arith.constant 0 : i32
    %c0_i32_0 = arith.constant 0 : i32
    return %arg0, %arg1, %c0_i32 : i32, i32, i32
  }
  func.func @transform_2(%arg0: i32, %arg1: i32) -> (i32, i32, i32) {
    %c0_i32 = arith.constant 0 : i32
    %c0_i32_0 = arith.constant 0 : i32
    return %arg0, %arg1, %c0_i32 : i32, i32, i32
  }
  func.func @transform_3(%arg0: i32, %arg1: i32) -> (i32, i32, i32) {
    %c0_i32 = arith.constant 0 : i32
    %c0_i32_0 = arith.constant 0 : i32
    return %arg0, %arg1, %c0_i32 : i32, i32, i32
  }
  func.func @transform_4(%arg0: i32, %arg1: i32) -> (i32, i32, i32) {
    %c0_i32 = arith.constant 0 : i32
    %c0_i32_0 = arith.constant 0 : i32
    return %arg0, %arg1, %c0_i32 : i32, i32, i32
  }
  func.func @transform_5(%arg0: i32, %arg1: i32) -> (i32, i32) {
    %c0_i32 = arith.constant 0 : i32
    %c0_i32_0 = arith.constant 0 : i32
    %c0_i32_1 = arith.constant 0 : i32
    return %c0_i32, %c0_i32_0 : i32, i32
  }
  func.func @transform_6(%arg0: i32, %arg1: i32) -> (i32, i32) {
    %c0_i32 = arith.constant 0 : i32
    %c0_i32_0 = arith.constant 0 : i32
    %c0_i32_1 = arith.constant 0 : i32
    return %c0_i32, %c0_i32_0 : i32, i32
  }
  func.func @transform_7(%arg0: i32, %arg1: i32) -> (i32, i32) {
    %c0_i32 = arith.constant 0 : i32
    %c0_i32_0 = arith.constant 0 : i32
    %c0_i32_1 = arith.constant 0 : i32
    return %c0_i32, %c0_i32_0 : i32, i32
  }
  func.func @transform_8(%arg0: i32, %arg1: i32) -> (i32, i32) {
    %c0_i32 = arith.constant 0 : i32
    %c0_i32_0 = arith.constant 0 : i32
    %c0_i32_1 = arith.constant 0 : i32
    return %c0_i32, %c0_i32_0 : i32, i32
  }
  func.func @transform_9(%arg0: i32, %arg1: i32) -> (i32, i32) {
    %c0_i32 = arith.constant 0 : i32
    %c0_i32_0 = arith.constant 0 : i32
    %c0_i32_1 = arith.constant 0 : i32
    return %c0_i32, %c0_i32_0 : i32, i32
  }
  func.func @transform_10(%arg0: i32, %arg1: i32) -> (i32, i32, i32) {
    %c0_i32 = arith.constant 0 : i32
    %c0_i32_0 = arith.constant 0 : i32
    return %arg0, %arg1, %c0_i32 : i32, i32, i32
  }
}

</mosaic_0001>

<llo_original>
// kernel: forward.16
$region0: #{forward.16}
  #allocation0 [shape = 'u32[]', space=smem, size = 0x4, offset = 0x4, fixed_abs, tag = 'smem constant byte address 0x4 - core index']
  #allocation1 [shape = 'u32[144,128]{1,0:T(1,128)}', space=vmem, size = 0x12000, scoped, tag = 'internal scratch']
  #allocation2 [shape = 'f32[16,32]{1,0:T(8,128)}', space=vmem, size = 0x2000, scoped, tag = 'scratch operand']
  %s0 = inlined_call_operand.vmem [shape: f32[16,32], index: 0, kind: input, shape index: {}]
  %s1 = inlined_call_operand.vmem [shape: f32[32,32], index: 1, kind: input, shape index: {}]
  %s2 = inlined_call_operand.vmem [shape: f32[16,32], index: 2, kind: output, shape index: {}]
  %s3 = sld [smem:[#allocation0]]
  $region26: #{forward.16} parent=0
    _
  %s5 = ssub.s32 1, %s3
  %s6 = scalar_select 0, %s5, %s3
  // Predicated region
  $region2: #{forward.16} parent=0 // pred_check
    _
  $region3: #{forward.16} parent=0 // pred_check_branch
    %8 = sbr.rel (0) target = $region5
  $region4: #{forward.16} parent=0 // pred_region
    _
  $region5: #{forward.16} parent=0 // pred_fallthru
    _
  // Predicated region
  $region6: #{forward.16} parent=0 // pred_check
    _
  $region7: #{forward.16} parent=0 // pred_check_branch
    %10 = sbr.rel (0) target = $region9
  $region8: #{forward.16} parent=0 // pred_region
    _
  $region9: #{forward.16} parent=0 // pred_fallthru
    _
  %p11 = scmp.eq.s32.totalorder 0, 0
  // Predicated region
  $region10: #{forward.16} parent=0 // pred_check
    %p12 = pneg %p11
  $region11: #{forward.16} parent=0 // pred_check_branch
    %14 = sbr.rel (%p12) target = $region13
  $region12: #{forward.16} parent=0 // pred_region
    %vm15 = vcmask 261120
    %16 = vst.msk [vmem:[#allocation2] sm:$0xff] %vm15, 0.0
    %17 = vst.msk [vmem:[#allocation2 + $0x8] sm:$0xff] %vm15, 0.0
  $region13: #{forward.16} parent=0 // pred_fallthru
    _
  %v18 = vld [vmem:[#allocation2] sm:$0xff]
  %v19 = vld [vmem:[#allocation2 + $0x8] sm:$0xff]
  %v20 = vld [vmem:[%s0] sm:$0xff]
  %v21 = vld [vmem:[%s0 + $0x8] sm:$0xff]
  %v22 = vld [vmem:[%s1] sm:$0xff]
  %v23 = vld [vmem:[%s1 + $0x8] sm:$0xff]
  %v24 = vld [vmem:[%s1 + $0x10] sm:$0xff]
  %v25 = vld [vmem:[%s1 + $0x18] sm:$0xff]
  %vm26 = vcmask 261120
  %v28 = vsel %vm26, %v20, 0
  %v31 = vsel %vm26, %v21, 0
  %33 = vmatprep.subr.mxu0 0.0
  %34 = vmatpush1.msra.mxu0 %v22
  %35 = vmatprep.subr.mxu0 0.0
  %36 = vmatpush1.msra.mxu0 %v23
  %37 = vmatprep.subr.mxu0 0.0
  %38 = vmatpush1.msra.mxu0 %v24
  %39 = vmatprep.subr.mxu0 0.0
  %40 = vmatpush1.msra.mxu0 %v25
  %41 = vmatprep.subr.mxu0 0.0
  %42 = vmatpush1.msra.mxu0 0.0
  %43 = vmatprep.subr.mxu0 0.0
  %44 = vmatpush1.msra.mxu0 0.0
  %45 = vmatprep.subr.mxu0 0.0
  %46 = vmatpush1.msra.mxu0 0.0
  %47 = vmatprep.subr.mxu0 0.0
  %48 = vmatpush1.msra.mxu0 0.0
  %49 = vmatprep.subr.mxu0 0.0
  %50 = vmatpush1.msra.mxu0 0.0
  %51 = vmatprep.subr.mxu0 0.0
  %52 = vmatpush1.msra.mxu0 0.0
  %53 = vmatprep.subr.mxu0 0.0
  %54 = vmatpush1.msra.mxu0 0.0
  %55 = vmatprep.subr.mxu0 0.0
  %56 = vmatpush1.msra.mxu0 0.0
  %57 = vmatprep.subr.mxu0 0.0
  %58 = vmatpush1.msra.mxu0 0.0
  %59 = vmatprep.subr.mxu0 0.0
  %60 = vmatpush1.msra.mxu0 0.0
  %61 = vmatprep.subr.mxu0 0.0
  %62 = vmatpush1.msra.mxu0 0.0
  %63 = vmatprep.subr.mxu0 0.0
  %64 = vmatpush1.msra.mxu0 0.0
  %65 = vmatprep.subr.mxu0 0.0
  %66 = vmatpush1.msra.mxu0 0.0
  %67 = vmatprep.subr.mxu0 0.0
  %68 = vmatpush1.msra.mxu0 0.0
  %69 = vmatprep.subr.mxu0 0.0
  %70 = vmatpush1.msra.mxu0 0.0
  %71 = vmatprep.subr.mxu0 0.0
  %72 = vmatpush1.msra.mxu0 0.0
  %73 = vmatprep.subr.mxu0 0.0
  %74 = vmatpush1.msra.mxu0 0.0
  %75 = vmatprep.subr.mxu0 0.0
  %76 = vmatpush1.msra.mxu0 0.0
  %77 = vmatprep.subr.mxu0 0.0
  %78 = vmatpush1.msra.mxu0 0.0
  %79 = vmatprep.subr.mxu0 0.0
  %80 = vmatpush1.msra.mxu0 0.0
  %81 = vmatprep.subr.mxu0 0.0
  %82 = vmatpush1.msra.mxu0 0.0
  %83 = vmatprep.subr.mxu0 0.0
  %84 = vmatpush1.msra.mxu0 0.0
  %85 = vmatprep.subr.mxu0 0.0
  %86 = vmatpush1.msra.mxu0 0.0
  %87 = vmatprep.subr.mxu0 0.0
  %88 = vmatpush1.msra.mxu0 0.0
  %89 = vmatprep.subr.mxu0 0.0
  %90 = vmatpush1.msra.mxu0 0.0
  %91 = vmatprep.subr.mxu0 0.0
  %92 = vmatpush1.msra.mxu0 0.0
  %93 = vmatprep.subr.mxu0 0.0
  %94 = vmatpush1.msra.mxu0 0.0
  %95 = vmatprep.subr.mxu0 0.0
  %96 = vmatpush1.msra.mxu0 0.0
  %97 = vmatprep.mubr.f32.mxu0 0.0
  %98 = vmatmul.mubr.f32.gmra.mrb[0].mxu0 %v28
  %v99 = vpop.f32.mrb[0].mxu0
  %v100 = vadd.f32 0.0, %v99
  %v101 = vpop.f32.mrb[0].mxu0
  %102 = vmatprep.mubr.f32.mxu0 0.0
  %103 = vmatmul.mubr.f32.gmra.mrb[0].mxu0 %v31
  %v104 = vpop.f32.mrb[0].mxu0
  %v105 = vadd.f32 0.0, %v104
  %v106 = vpop.f32.mrb[0].mxu0
  %107 = vdwg.mxu0
  %v108 = vadd.f32 %v18, %v100
  %v109 = vadd.f32 %v19, %v105
  %110 = vst.msk [vmem:[#allocation2] sm:$0xff] %vm26, %v108
  %111 = vst.msk [vmem:[#allocation2 + $0x8] sm:$0xff] %vm26, %v109
  // Predicated region
  $region14: #{forward.16} parent=0 // pred_check
    %p112 = pneg %p11
  $region15: #{forward.16} parent=0 // pred_check_branch
    %114 = sbr.rel (%p112) target = $region17
  $region16: #{forward.16} parent=0 // pred_region
    %v115 = vld [vmem:[#allocation2] sm:$0xff]
    %v116 = vld [vmem:[#allocation2 + $0x8] sm:$0xff]
    %117 = vst.msk [vmem:[%s2] sm:$0xff] %vm26, %v115
    %118 = vst.msk [vmem:[%s2 + $0x8] sm:$0xff] %vm26, %v116
  $region17: #{forward.16} parent=0 // pred_fallthru
    _
  // Predicated region
  $region18: #{forward.16} parent=0 // pred_check
    _
  $region19: #{forward.16} parent=0 // pred_check_branch
    %120 = sbr.rel (0) target = $region21
  $region20: #{forward.16} parent=0 // pred_region
    _
  $region21: #{forward.16} parent=0 // pred_fallthru
    _
  // Predicated region
  $region22: #{forward.16} parent=0 // pred_check
    _
  $region23: #{forward.16} parent=0 // pred_check_branch
    %122 = sbr.rel (0) target = $region25
  $region24: #{forward.16} parent=0 // pred_region
    _
  $region25: #{forward.16} parent=0 // pred_fallthru
    _

// kernel: forward.12
$region0: #{forward.12}
  #allocation0 [shape = 'u32[]', space=smem, size = 0x4, offset = 0x4, fixed_abs, tag = 'smem constant byte address 0x4 - core index']
  #allocation1 [shape = 'u32[144,128]{1,0:T(1,128)}', space=vmem, size = 0x12000, scoped, tag = 'internal scratch']
  %s0 = inlined_call_operand.vmem [shape: f32[2,8,32], index: 0, kind: input, shape index: {}]
  %s1 = inlined_call_operand.vmem [shape: f32[2,8,32], index: 1, kind: input, shape index: {}]
  %s2 = inlined_call_operand.vmem [shape: f32[1,32], index: 2, kind: input, shape index: {}]
  %s3 = inlined_call_operand.vmem [shape: f32[1,32], index: 3, kind: input, shape index: {}]
  %s4 = inlined_call_operand.vmem [shape: f32[1,32], index: 4, kind: input, shape index: {}]
  %s5 = inlined_call_operand.vmem [shape: f32[1,32], index: 5, kind: input, shape index: {}]
  %s6 = inlined_call_operand.vmem [shape: f32[1,32], index: 6, kind: input, shape index: {}]
  %s7 = inlined_call_operand.vmem [shape: f32[1,32], index: 7, kind: input, shape index: {}]
  %s8 = inlined_call_operand.vmem [shape: f32[2,8,32], index: 8, kind: output, shape index: {0}]
  %s9 = inlined_call_operand.vmem [shape: f32[2,8,32], index: 9, kind: output, shape index: {1}]
  %s10 = inlined_call_operand.vmem [shape: f32[2,8,32], index: 10, kind: output, shape index: {2}]
  %s11 = inlined_call_operand.vmem [shape: f32[2,8,32], index: 11, kind: output, shape index: {3}]
  %s12 = inlined_call_operand.vmem [shape: f32[2,8,32], index: 12, kind: output, shape index: {4}]
  %s13 = inlined_call_operand.vmem [shape: f32[2,8,32], index: 13, kind: output, shape index: {5}]
  %14 = xla_tuple %s8, %s9, %s10, %s11, %s12, %s13
  %s15 = sld [smem:[#allocation0]]
  $region105: #{forward.12} parent=0
    _
  %s17 = ssub.s32 1, %s15
  %s18 = scalar_select 0, %s17, %s15
  loop: start=0, step=1, limit=4
  $region2: #{forward.12} parent=0 // loop_pre_header
    _
  $region3: #{forward.12} parent=0 // loop_header
    %s20 = sphi 0, %s24
    %p21 = scmp.ge.s32.totalorder %s20, 4
    %s27 = sphi 0, %s39
    %s28 = sphi 0, %s35
    %s29 = sphi 0, %s27
    %s30 = sphi 0, %s28
    %s31 = sphi 0, %s29
    %s32 = sphi 0, %s30
    %s44 = sphi 0, %s46
    %s47 = sphi 0, %s44
    %s48 = sphi 0, %s47
    %s64 = sphi 0, %s48
    %s72 = sphi 0, %s74
    %s75 = sphi 0, %s72
    %s76 = sphi 0, %s75
    %s92 = sphi 0, %s76
    %s96 = sphi 0, %s96
    %s98 = sphi 0, %s96
    %s99 = sphi 0, %s98
    %s113 = sphi 0, %s99
    %s117 = sphi 0, %s117
    %s119 = sphi 0, %s117
    %s120 = sphi 0, %s119
    %s134 = sphi 0, %s120
    %s138 = sphi 0, %s138
    %s140 = sphi 0, %s138
    %s141 = sphi 0, %s140
    %s155 = sphi 0, %s141
    %s159 = sphi 0, %s159
    %s161 = sphi 0, %s159
    %s162 = sphi 0, %s161
    %s176 = sphi 0, %s162
    %s180 = sphi 0, %s180
    %s182 = sphi 0, %s180
    %s183 = sphi 0, %s182
    %s197 = sphi 0, %s183
    %s201 = sphi 0, %s201
    %s203 = sphi 0, %s201
    %s204 = sphi 0, %s203
    %s218 = sphi 0, %s204
    %s226 = sphi 0, %s228
    %s229 = sphi 0, %s226
    %s230 = sphi 0, %s229
    %s246 = sphi 0, %s230
    %s254 = sphi 0, %s256
    %s257 = sphi 0, %s254
    %s258 = sphi 0, %s257
    %s274 = sphi 0, %s258
    %s282 = sphi 0, %s284
    %s285 = sphi 0, %s282
    %s286 = sphi 0, %s285
    %s302 = sphi 0, %s286
    %s310 = sphi 0, %s312
    %s313 = sphi 0, %s310
    %s314 = sphi 0, %s313
    %s330 = sphi 0, %s314
    %s338 = sphi 0, %s340
    %s341 = sphi 0, %s338
    %s342 = sphi 0, %s341
    %s358 = sphi 0, %s342
    %s366 = sphi 0, %s368
    %s369 = sphi 0, %s366
    %s370 = sphi 0, %s369
    %s386 = sphi 0, %s370
  $region4: #{forward.12} parent=0 // loop_header_branch
    %23 = sbr.rel (%p21) target = $region8
  $region5: #{forward.12} parent=0 // loop_body
    %s25 = ssub.s32 %s20, 1
    %s26 = ssub.s32 %s20, 2
    %s33 = sadd.s32 1, %s28
    %p34 = scmp.ge.s32.totalorder %s33, 1
    %s35 = scalar_select %p34, 0, %s33
    %s36 = sadd.s32 1, %s27
    %s37 = scalar_select %p34, %s36, %s27
    %p38 = scmp.ge.s32.totalorder %s37, 2
    %s39 = scalar_select %p38, 0, %s37
    %s40 = ssub.s32 %s27, %s39
    %s41 = ssub.s32 %s28, %s35
    %s42 = sor.u32 %s40, %s41
    %p43 = scmp.eq.s32.totalorder %s42, 0
    %s45 = sadd.s32 %s44, 1
    %s46 = scalar_select %p43, %s44, %s45
    %p49 = pneg %p43
    %p50 = scmp.eq.s32.totalorder %s20, 1
    %p51 = por %p49, %p50
    %p52 = scmp.ne.s32.totalorder %s44, %s47
    %p53 = scmp.eq.s32.totalorder %s20, 0
    %p54 = por %p52, %p53
    %p55 = scmp.ne.s32.totalorder %s44, %s47
    %p56 = scmp.eq.s32.totalorder %s25, 1
    %p57 = por %p55, %p56
    %p58 = scmp.ne.s32.totalorder %s47, %s48
    %p59 = scmp.eq.s32.totalorder %s25, 0
    %p60 = por %p58, %p59
    %p61 = scmp.ne.s32.totalorder %s47, %s48
    %p62 = scmp.eq.s32.totalorder %s26, 1
    %p63 = por %p61, %p62
    %p65 = scmp.ne.s32.totalorder %s48, %s64
    %p66 = scmp.eq.s32.totalorder %s26, 0
    %p67 = por %p65, %p66
    %s68 = ssub.s32 %s27, %s39
    %s69 = ssub.s32 %s28, %s35
    %s70 = sor.u32 %s68, %s69
    %p71 = scmp.eq.s32.totalorder %s70, 0
    %s73 = sadd.s32 %s72, 1
    %s74 = scalar_select %p71, %s72, %s73
    %p77 = pneg %p71
    %p78 = scmp.eq.s32.totalorder %s20, 1
    %p79 = por %p77, %p78
    %p80 = scmp.ne.s32.totalorder %s72, %s75
    %p81 = scmp.eq.s32.totalorder %s20, 0
    %p82 = por %p80, %p81
    %p83 = scmp.ne.s32.totalorder %s72, %s75
    %p84 = scmp.eq.s32.totalorder %s25, 1
    %p85 = por %p83, %p84
    %p86 = scmp.ne.s32.totalorder %s75, %s76
    %p87 = scmp.eq.s32.totalorder %s25, 0
    %p88 = por %p86, %p87
    %p89 = scmp.ne.s32.totalorder %s75, %s76
    %p90 = scmp.eq.s32.totalorder %s26, 1
    %p91 = por %p89, %p90
    %p93 = scmp.ne.s32.totalorder %s76, %s92
    %p94 = scmp.eq.s32.totalorder %s26, 0
    %p95 = por %p93, %p94
    %s97 = sadd.s32 %s96, 1
    %p100 = scmp.eq.s32.totalorder %s20, 1
    %p101 = scmp.ne.s32.totalorder %s96, %s98
    %p102 = scmp.eq.s32.totalorder %s20, 0
    %p103 = por %p101, %p102
    %p104 = scmp.ne.s32.totalorder %s96, %s98
    %p105 = scmp.eq.s32.totalorder %s25, 1
    %p106 = por %p104, %p105
    %p107 = scmp.ne.s32.totalorder %s98, %s99
    %p108 = scmp.eq.s32.totalorder %s25, 0
    %p109 = por %p107, %p108
    %p110 = scmp.ne.s32.totalorder %s98, %s99
    %p111 = scmp.eq.s32.totalorder %s26, 1
    %p112 = por %p110, %p111
    %p114 = scmp.ne.s32.totalorder %s99, %s113
    %p115 = scmp.eq.s32.totalorder %s26, 0
    %p116 = por %p114, %p115
    %s118 = sadd.s32 %s117, 1
    %p121 = scmp.eq.s32.totalorder %s20, 1
    %p122 = scmp.ne.s32.totalorder %s117, %s119
    %p123 = scmp.eq.s32.totalorder %s20, 0
    %p124 = por %p122, %p123
    %p125 = scmp.ne.s32.totalorder %s117, %s119
    %p126 = scmp.eq.s32.totalorder %s25, 1
    %p127 = por %p125, %p126
    %p128 = scmp.ne.s32.totalorder %s119, %s120
    %p129 = scmp.eq.s32.totalorder %s25, 0
    %p130 = por %p128, %p129
    %p131 = scmp.ne.s32.totalorder %s119, %s120
    %p132 = scmp.eq.s32.totalorder %s26, 1
    %p133 = por %p131, %p132
    %p135 = scmp.ne.s32.totalorder %s120, %s134
    %p136 = scmp.eq.s32.totalorder %s26, 0
    %p137 = por %p135, %p136
    %s139 = sadd.s32 %s138, 1
    %p142 = scmp.eq.s32.totalorder %s20, 1
    %p143 = scmp.ne.s32.totalorder %s138, %s140
    %p144 = scmp.eq.s32.totalorder %s20, 0
    %p145 = por %p143, %p144
    %p146 = scmp.ne.s32.totalorder %s138, %s140
    %p147 = scmp.eq.s32.totalorder %s25, 1
    %p148 = por %p146, %p147
    %p149 = scmp.ne.s32.totalorder %s140, %s141
    %p150 = scmp.eq.s32.totalorder %s25, 0
    %p151 = por %p149, %p150
    %p152 = scmp.ne.s32.totalorder %s140, %s141
    %p153 = scmp.eq.s32.totalorder %s26, 1
    %p154 = por %p152, %p153
    %p156 = scmp.ne.s32.totalorder %s141, %s155
    %p157 = scmp.eq.s32.totalorder %s26, 0
    %p158 = por %p156, %p157
    %s160 = sadd.s32 %s159, 1
    %p163 = scmp.eq.s32.totalorder %s20, 1
    %p164 = scmp.ne.s32.totalorder %s159, %s161
    %p165 = scmp.eq.s32.totalorder %s20, 0
    %p166 = por %p164, %p165
    %p167 = scmp.ne.s32.totalorder %s159, %s161
    %p168 = scmp.eq.s32.totalorder %s25, 1
    %p169 = por %p167, %p168
    %p170 = scmp.ne.s32.totalorder %s161, %s162
    %p171 = scmp.eq.s32.totalorder %s25, 0
    %p172 = por %p170, %p171
    %p173 = scmp.ne.s32.totalorder %s161, %s162
    %p174 = scmp.eq.s32.totalorder %s26, 1
    %p175 = por %p173, %p174
    %p177 = scmp.ne.s32.totalorder %s162, %s176
    %p178 = scmp.eq.s32.totalorder %s26, 0
    %p179 = por %p177, %p178
    %s181 = sadd.s32 %s180, 1
    %p184 = scmp.eq.s32.totalorder %s20, 1
    %p185 = scmp.ne.s32.totalorder %s180, %s182
    %p186 = scmp.eq.s32.totalorder %s20, 0
    %p187 = por %p185, %p186
    %p188 = scmp.ne.s32.totalorder %s180, %s182
    %p189 = scmp.eq.s32.totalorder %s25, 1
    %p190 = por %p188, %p189
    %p191 = scmp.ne.s32.totalorder %s182, %s183
    %p192 = scmp.eq.s32.totalorder %s25, 0
    %p193 = por %p191, %p192
    %p194 = scmp.ne.s32.totalorder %s182, %s183
    %p195 = scmp.eq.s32.totalorder %s26, 1
    %p196 = por %p194, %p195
    %p198 = scmp.ne.s32.totalorder %s183, %s197
    %p199 = scmp.eq.s32.totalorder %s26, 0
    %p200 = por %p198, %p199
    %s202 = sadd.s32 %s201, 1
    %p205 = scmp.eq.s32.totalorder %s20, 1
    %p206 = scmp.ne.s32.totalorder %s201, %s203
    %p207 = scmp.eq.s32.totalorder %s20, 0
    %p208 = por %p206, %p207
    %p209 = scmp.ne.s32.totalorder %s201, %s203
    %p210 = scmp.eq.s32.totalorder %s25, 1
    %p211 = por %p209, %p210
    %p212 = scmp.ne.s32.totalorder %s203, %s204
    %p213 = scmp.eq.s32.totalorder %s25, 0
    %p214 = por %p212, %p213
    %p215 = scmp.ne.s32.totalorder %s203, %s204
    %p216 = scmp.eq.s32.totalorder %s26, 1
    %p217 = por %p215, %p216
    %p219 = scmp.ne.s32.totalorder %s204, %s218
    %p220 = scmp.eq.s32.totalorder %s26, 0
    %p221 = por %p219, %p220
    %s222 = ssub.s32 %s27, %s39
    %s223 = ssub.s32 %s28, %s35
    %s224 = sor.u32 %s222, %s223
    %p225 = scmp.eq.s32.totalorder %s224, 0
    %s227 = sadd.s32 %s226, 1
    %s228 = scalar_select %p225, %s226, %s227
    %p231 = pneg %p225
    %p232 = scmp.eq.s32.totalorder %s20, 1
    %p233 = por %p231, %p232
    %p234 = scmp.ne.s32.totalorder %s226, %s229
    %p235 = scmp.eq.s32.totalorder %s20, 0
    %p236 = por %p234, %p235
    %p237 = scmp.ne.s32.totalorder %s226, %s229
    %p238 = scmp.eq.s32.totalorder %s25, 1
    %p239 = por %p237, %p238
    %p240 = scmp.ne.s32.totalorder %s229, %s230
    %p241 = scmp.eq.s32.totalorder %s25, 0
    %p242 = por %p240, %p241
    %p243 = scmp.ne.s32.totalorder %s229, %s230
    %p244 = scmp.eq.s32.totalorder %s26, 1
    %p245 = por %p243, %p244
    %p247 = scmp.ne.s32.totalorder %s230, %s246
    %p248 = scmp.eq.s32.totalorder %s26, 0
    %p249 = por %p247, %p248
    %s250 = ssub.s32 %s27, %s39
    %s251 = ssub.s32 %s28, %s35
    %s252 = sor.u32 %s250, %s251
    %p253 = scmp.eq.s32.totalorder %s252, 0
    %s255 = sadd.s32 %s254, 1
    %s256 = scalar_select %p253, %s254, %s255
    %p259 = pneg %p253
    %p260 = scmp.eq.s32.totalorder %s20, 1
    %p261 = por %p259, %p260
    %p262 = scmp.ne.s32.totalorder %s254, %s257
    %p263 = scmp.eq.s32.totalorder %s20, 0
    %p264 = por %p262, %p263
    %p265 = scmp.ne.s32.totalorder %s254, %s257
    %p266 = scmp.eq.s32.totalorder %s25, 1
    %p267 = por %p265, %p266
    %p268 = scmp.ne.s32.totalorder %s257, %s258
    %p269 = scmp.eq.s32.totalorder %s25, 0
    %p270 = por %p268, %p269
    %p271 = scmp.ne.s32.totalorder %s257, %s258
    %p272 = scmp.eq.s32.totalorder %s26, 1
    %p273 = por %p271, %p272
    %p275 = scmp.ne.s32.totalorder %s258, %s274
    %p276 = scmp.eq.s32.totalorder %s26, 0
    %p277 = por %p275, %p276
    %s278 = ssub.s32 %s27, %s39
    %s279 = ssub.s32 %s28, %s35
    %s280 = sor.u32 %s278, %s279
    %p281 = scmp.eq.s32.totalorder %s280, 0
    %s283 = sadd.s32 %s282, 1
    %s284 = scalar_select %p281, %s282, %s283
    %p287 = pneg %p281
    %p288 = scmp.eq.s32.totalorder %s20, 1
    %p289 = por %p287, %p288
    %p290 = scmp.ne.s32.totalorder %s282, %s285
    %p291 = scmp.eq.s32.totalorder %s20, 0
    %p292 = por %p290, %p291
    %p293 = scmp.ne.s32.totalorder %s282, %s285
    %p294 = scmp.eq.s32.totalorder %s25, 1
    %p295 = por %p293, %p294
    %p296 = scmp.ne.s32.totalorder %s285, %s286
    %p297 = scmp.eq.s32.totalorder %s25, 0
    %p298 = por %p296, %p297
    %p299 = scmp.ne.s32.totalorder %s285, %s286
    %p300 = scmp.eq.s32.totalorder %s26, 1
    %p301 = por %p299, %p300
    %p303 = scmp.ne.s32.totalorder %s286, %s302
    %p304 = scmp.eq.s32.totalorder %s26, 0
    %p305 = por %p303, %p304
    %s306 = ssub.s32 %s27, %s39
    %s307 = ssub.s32 %s28, %s35
    %s308 = sor.u32 %s306, %s307
    %p309 = scmp.eq.s32.totalorder %s308, 0
    %s311 = sadd.s32 %s310, 1
    %s312 = scalar_select %p309, %s310, %s311
    %p315 = pneg %p309
    %p316 = scmp.eq.s32.totalorder %s20, 1
    %p317 = por %p315, %p316
    %p318 = scmp.ne.s32.totalorder %s310, %s313
    %p319 = scmp.eq.s32.totalorder %s20, 0
    %p320 = por %p318, %p319
    %p321 = scmp.ne.s32.totalorder %s310, %s313
    %p322 = scmp.eq.s32.totalorder %s25, 1
    %p323 = por %p321, %p322
    %p324 = scmp.ne.s32.totalorder %s313, %s314
    %p325 = scmp.eq.s32.totalorder %s25, 0
    %p326 = por %p324, %p325
    %p327 = scmp.ne.s32.totalorder %s313, %s314
    %p328 = scmp.eq.s32.totalorder %s26, 1
    %p329 = por %p327, %p328
    %p331 = scmp.ne.s32.totalorder %s314, %s330
    %p332 = scmp.eq.s32.totalorder %s26, 0
    %p333 = por %p331, %p332
    %s334 = ssub.s32 %s27, %s39
    %s335 = ssub.s32 %s28, %s35
    %s336 = sor.u32 %s334, %s335
    %p337 = scmp.eq.s32.totalorder %s336, 0
    %s339 = sadd.s32 %s338, 1
    %s340 = scalar_select %p337, %s338, %s339
    %p343 = pneg %p337
    %p344 = scmp.eq.s32.totalorder %s20, 1
    %p345 = por %p343, %p344
    %p346 = scmp.ne.s32.totalorder %s338, %s341
    %p347 = scmp.eq.s32.totalorder %s20, 0
    %p348 = por %p346, %p347
    %p349 = scmp.ne.s32.totalorder %s338, %s341
    %p350 = scmp.eq.s32.totalorder %s25, 1
    %p351 = por %p349, %p350
    %p352 = scmp.ne.s32.totalorder %s341, %s342
    %p353 = scmp.eq.s32.totalorder %s25, 0
    %p354 = por %p352, %p353
    %p355 = scmp.ne.s32.totalorder %s341, %s342
    %p356 = scmp.eq.s32.totalorder %s26, 1
    %p357 = por %p355, %p356
    %p359 = scmp.ne.s32.totalorder %s342, %s358
    %p360 = scmp.eq.s32.totalorder %s26, 0
    %p361 = por %p359, %p360
    %s362 = ssub.s32 %s27, %s39
    %s363 = ssub.s32 %s28, %s35
    %s364 = sor.u32 %s362, %s363
    %p365 = scmp.eq.s32.totalorder %s364, 0
    %s367 = sadd.s32 %s366, 1
    %s368 = scalar_select %p365, %s366, %s367
    %p371 = pneg %p365
    %p372 = scmp.eq.s32.totalorder %s20, 1
    %p373 = por %p371, %p372
    %p374 = scmp.ne.s32.totalorder %s366, %s369
    %p375 = scmp.eq.s32.totalorder %s20, 0
    %p376 = por %p374, %p375
    %p377 = scmp.ne.s32.totalorder %s366, %s369
    %p378 = scmp.eq.s32.totalorder %s25, 1
    %p379 = por %p377, %p378
    %p380 = scmp.ne.s32.totalorder %s369, %s370
    %p381 = scmp.eq.s32.totalorder %s25, 0
    %p382 = por %p380, %p381
    %p383 = scmp.ne.s32.totalorder %s369, %s370
    %p384 = scmp.eq.s32.totalorder %s26, 1
    %p385 = por %p383, %p384
    %p387 = scmp.ne.s32.totalorder %s370, %s386
    %p388 = scmp.eq.s32.totalorder %s26, 0
    %p389 = por %p387, %p388
    %p390 = scmp.le.s32.totalorder 1, %s20
    %p391 = scmp.lt.s32.totalorder %s20, 3
    %p392 = pnand %p390, %p391
    %p393 = pneg %p392
    // Predicated region
    $region9: #{forward.12} parent=5 // pred_check
      _
    $region10: #{forward.12} parent=5 // pred_check_branch
      %395 = sbr.rel (%p392) target = $region12
    $region11: #{forward.12} parent=5 // pred_region
      %s396 = ssub.s32 %s20, 1
      // Predicated region
      $region13: #{forward.12} parent=11 // pred_check
        %p397 = pneg %p109
      $region14: #{forward.12} parent=11 // pred_check_branch
        %399 = sbr.rel (%p397) target = $region16
      $region15: #{forward.12} parent=11 // pred_region
        _
      $region16: #{forward.12} parent=11 // pred_fallthru
        _
      // Predicated region
      $region17: #{forward.12} parent=11 // pred_check
        %p400 = pneg %p130
      $region18: #{forward.12} parent=11 // pred_check_branch
        %402 = sbr.rel (%p400) target = $region20
      $region19: #{forward.12} parent=11 // pred_region
        _
      $region20: #{forward.12} parent=11 // pred_fallthru
        _
      // Predicated region
      $region21: #{forward.12} parent=11 // pred_check
        %p403 = pneg %p151
      $region22: #{forward.12} parent=11 // pred_check_branch
        %405 = sbr.rel (%p403) target = $region24
      $region23: #{forward.12} parent=11 // pred_region
        _
      $region24: #{forward.12} parent=11 // pred_fallthru
        _
      // Predicated region
      $region25: #{forward.12} parent=11 // pred_check
        %p406 = pneg %p172
      $region26: #{forward.12} parent=11 // pred_check_branch
        %408 = sbr.rel (%p406) target = $region28
      $region27: #{forward.12} parent=11 // pred_region
        _
      $region28: #{forward.12} parent=11 // pred_fallthru
        _
      // Predicated region
      $region29: #{forward.12} parent=11 // pred_check
        %p409 = pneg %p193
      $region30: #{forward.12} parent=11 // pred_check_branch
        %411 = sbr.rel (%p409) target = $region32
      $region31: #{forward.12} parent=11 // pred_region
        _
      $region32: #{forward.12} parent=11 // pred_fallthru
        _
      // Predicated region
      $region33: #{forward.12} parent=11 // pred_check
        %p412 = pneg %p214
      $region34: #{forward.12} parent=11 // pred_check_branch
        %414 = sbr.rel (%p412) target = $region36
      $region35: #{forward.12} parent=11 // pred_region
        _
      $region36: #{forward.12} parent=11 // pred_fallthru
        _
    $region12: #{forward.12} parent=5 // pred_fallthru
      _
    %p415 = scmp.lt.s32.totalorder %s20, 2
    // Predicated region
    $region37: #{forward.12} parent=5 // pred_check
      %p416 = pneg %p415
    $region38: #{forward.12} parent=5 // pred_check_branch
      %418 = sbr.rel (%p416) target = $region40
    $region39: #{forward.12} parent=5 // pred_region
      // Predicated region
      $region41: #{forward.12} parent=39 // pred_check
        %p419 = pneg %p54
      $region42: #{forward.12} parent=39 // pred_check_branch
        %421 = sbr.rel (%p419) target = $region44
      $region43: #{forward.12} parent=39 // pred_region
        %p422 = scmp.lt.s32.totalorder %s27, 1
        %s423 = scalar_select %p422, %s27, 1
        %p424 = scmp.lt.s32.totalorder %s28, 0
        %s425 = scalar_select %p424, %s28, 0
        %s426 = sadd.s32 %s425, %s423
        %s427 = smul.addr %s426, 8
        %s428 = scalar_lea.vmem %s0, %s427
      $region44: #{forward.12} parent=39 // pred_fallthru
        _
      // Predicated region
      $region45: #{forward.12} parent=39 // pred_check
        %p429 = pneg %p82
      $region46: #{forward.12} parent=39 // pred_check_branch
        %431 = sbr.rel (%p429) target = $region48
      $region47: #{forward.12} parent=39 // pred_region
        %p432 = scmp.lt.s32.totalorder %s27, 1
        %s433 = scalar_select %p432, %s27, 1
        %p434 = scmp.lt.s32.totalorder %s28, 0
        %s435 = scalar_select %p434, %s28, 0
        %s436 = sadd.s32 %s435, %s433
        %s437 = smul.addr %s436, 8
        %s438 = scalar_lea.vmem %s1, %s437
      $region48: #{forward.12} parent=39 // pred_fallthru
        _
    $region40: #{forward.12} parent=5 // pred_fallthru
      _
    %p439 = scmp.le.s32.totalorder 1, %s20
    %p440 = scmp.lt.s32.totalorder %s20, 3
    %p441 = pnand %p439, %p440
    %p442 = pneg %p441
    // Predicated region
    $region49: #{forward.12} parent=5 // pred_check
      _
    $region50: #{forward.12} parent=5 // pred_check_branch
      %444 = sbr.rel (%p441) target = $region52
    $region51: #{forward.12} parent=5 // pred_region
      %s445 = ssub.s32 %s20, 1
      %p446 = scmp.lt.s32.totalorder %s29, 1
      %s447 = scalar_select %p446, %s29, 1
      %p448 = scmp.lt.s32.totalorder %s30, 0
      %s449 = scalar_select %p448, %s30, 0
      %s450 = sadd.s32 %s449, %s447
      %s451 = smul.addr %s450, 8
      %s452 = scalar_lea.vmem %s0, %s451
      %p453 = pneg %p60
      %p454 = pneg %p57
      %p455 = scmp.lt.s32.totalorder %s29, 1
      %s456 = scalar_select %p455, %s29, 1
      %p457 = scmp.lt.s32.totalorder %s30, 0
      %s458 = scalar_select %p457, %s30, 0
      %s459 = sadd.s32 %s458, %s456
      %s460 = smul.addr %s459, 8
      %s461 = scalar_lea.vmem %s1, %s460
      %p462 = pneg %p88
      %p463 = pneg %p85
      %p464 = pneg %p109
      %p465 = pneg %p106
      %p466 = pneg %p130
      %p467 = pneg %p127
      %p468 = pneg %p151
      %p469 = pneg %p148
      %p470 = pneg %p172
      %p471 = pneg %p169
      %p472 = pneg %p193
      %p473 = pneg %p190
      %p474 = pneg %p214
      %p475 = pneg %p211
      %p476 = pneg %p242
      %p477 = pneg %p239
      %p478 = scmp.lt.s32.totalorder %s29, 1
      %s479 = scalar_select %p478, %s29, 1
      %p480 = scmp.lt.s32.totalorder %s30, 0
      %s481 = scalar_select %p480, %s30, 0
      %s482 = sadd.s32 %s481, %s479
      %s483 = smul.addr %s482, 8
      %s484 = scalar_lea.vmem %s8, %s483
      %p485 = pneg %p270
      %p486 = pneg %p267
      %p487 = scmp.lt.s32.totalorder %s29, 1
      %s488 = scalar_select %p487, %s29, 1
      %p489 = scmp.lt.s32.totalorder %s30, 0
      %s490 = scalar_select %p489, %s30, 0
      %s491 = sadd.s32 %s490, %s488
      %s492 = smul.addr %s491, 8
      %s493 = scalar_lea.vmem %s9, %s492
      %p494 = pneg %p298
      %p495 = pneg %p295
      %p496 = scmp.lt.s32.totalorder %s29, 1
      %s497 = scalar_select %p496, %s29, 1
      %p498 = scmp.lt.s32.totalorder %s30, 0
      %s499 = scalar_select %p498, %s30, 0
      %s500 = sadd.s32 %s499, %s497
      %s501 = smul.addr %s500, 8
      %s502 = scalar_lea.vmem %s10, %s501
      %p503 = pneg %p326
      %p504 = pneg %p323
      %p505 = scmp.lt.s32.totalorder %s29, 1
      %s506 = scalar_select %p505, %s29, 1
      %p507 = scmp.lt.s32.totalorder %s30, 0
      %s508 = scalar_select %p507, %s30, 0
      %s509 = sadd.s32 %s508, %s506
      %s510 = smul.addr %s509, 8
      %s511 = scalar_lea.vmem %s11, %s510
      %p512 = pneg %p354
      %p513 = pneg %p351
      %p514 = scmp.lt.s32.totalorder %s29, 1
      %s515 = scalar_select %p514, %s29, 1
      %p516 = scmp.lt.s32.totalorder %s30, 0
      %s517 = scalar_select %p516, %s30, 0
      %s518 = sadd.s32 %s517, %s515
      %s519 = smul.addr %s518, 8
      %s520 = scalar_lea.vmem %s12, %s519
      %p521 = pneg %p382
      %p522 = pneg %p379
      %p523 = scmp.lt.s32.totalorder %s29, 1
      %s524 = scalar_select %p523, %s29, 1
      %p525 = scmp.lt.s32.totalorder %s30, 0
      %s526 = scalar_select %p525, %s30, 0
      %s527 = sadd.s32 %s526, %s524
      %s528 = smul.addr %s527, 8
      %s529 = scalar_lea.vmem %s13, %s528
      %p530 = scmp.lt.s32.totalorder %s29, 1
      %s531 = scalar_select %p530, %s29, 1
      %p532 = scmp.lt.s32.totalorder %s30, 0
      %s533 = scalar_select %p532, %s30, 0
      %s534 = sadd.s32 %s533, %s531
      %s535 = smul.addr %s534, 8
      %s536 = scalar_lea.vmem %s0, %s535
      %p537 = scmp.lt.s32.totalorder %s29, 1
      %s538 = scalar_select %p537, %s29, 1
      %p539 = scmp.lt.s32.totalorder %s30, 0
      %s540 = scalar_select %p539, %s30, 0
      %s541 = sadd.s32 %s540, %s538
      %s542 = smul.addr %s541, 8
      %s543 = scalar_lea.vmem %s1, %s542
      %p544 = scmp.lt.s32.totalorder %s29, 1
      %s545 = scalar_select %p544, %s29, 1
      %p546 = scmp.lt.s32.totalorder %s30, 0
      %s547 = scalar_select %p546, %s30, 0
      %s548 = sadd.s32 %s547, %s545
      %s549 = smul.addr %s548, 8
      %s550 = scalar_lea.vmem %s8, %s549
      %p551 = scmp.lt.s32.totalorder %s29, 1
      %s552 = scalar_select %p551, %s29, 1
      %p553 = scmp.lt.s32.totalorder %s30, 0
      %s554 = scalar_select %p553, %s30, 0
      %s555 = sadd.s32 %s554, %s552
      %s556 = smul.addr %s555, 8
      %s557 = scalar_lea.vmem %s9, %s556
      %p558 = scmp.lt.s32.totalorder %s29, 1
      %s559 = scalar_select %p558, %s29, 1
      %p560 = scmp.lt.s32.totalorder %s30, 0
      %s561 = scalar_select %p560, %s30, 0
      %s562 = sadd.s32 %s561, %s559
      %s563 = smul.addr %s562, 8
      %s564 = scalar_lea.vmem %s10, %s563
      %p565 = scmp.lt.s32.totalorder %s29, 1
      %s566 = scalar_select %p565, %s29, 1
      %p567 = scmp.lt.s32.totalorder %s30, 0
      %s568 = scalar_select %p567, %s30, 0
      %s569 = sadd.s32 %s568, %s566
      %s570 = smul.addr %s569, 8
      %s571 = scalar_lea.vmem %s11, %s570
      %p572 = scmp.lt.s32.totalorder %s29, 1
      %s573 = scalar_select %p572, %s29, 1
      %p574 = scmp.lt.s32.totalorder %s30, 0
      %s575 = scalar_select %p574, %s30, 0
      %s576 = sadd.s32 %s575, %s573
      %s577 = smul.addr %s576, 8
      %s578 = scalar_lea.vmem %s12, %s577
      %p579 = scmp.lt.s32.totalorder %s29, 1
      %s580 = scalar_select %p579, %s29, 1
      %p581 = scmp.lt.s32.totalorder %s30, 0
      %s582 = scalar_select %p581, %s30, 0
      %s583 = sadd.s32 %s582, %s580
      %s584 = smul.addr %s583, 8
      %s585 = scalar_lea.vmem %s13, %s584
      %v586 = vld [vmem:[%s536] sm:$0xff]
      %v587 = vld [vmem:[%s543] sm:$0xff]
      %v588 = vsub.f32 %v587, %v586
      %v589 = vld [vmem:[%s2] sm:$0x1]
      %v591 = vlaneseq
      %v592 = vshrl.u32 %v591, 7
      %v593 = vsub.s32 0, %v592
      %v594 = vrot.slane %v589, %v593
      %v596 = vmul.f32 %v594, %v588
      %v597 = vadd.f32 %v586, %v596
      %vm598 = vcmask 261120
      %599 = vst.msk [vmem:[%s550] sm:$0xff] %vm598, %v597
      %v600 = vld [vmem:[%s3] sm:$0x1]
      %v602 = vlaneseq
      %v603 = vshrl.u32 %v602, 7
      %v604 = vsub.s32 0, %v603
      %v605 = vrot.slane %v600, %v604
      %v607 = vmul.f32 %v605, %v588
      %v608 = vadd.f32 %v586, %v607
      %609 = vst.msk [vmem:[%s557] sm:$0xff] %vm598, %v608
      %v610 = vld [vmem:[%s4] sm:$0x1]
      %v612 = vlaneseq
      %v613 = vshrl.u32 %v612, 7
      %v614 = vsub.s32 0, %v613
      %v615 = vrot.slane %v610, %v614
      %v617 = vmul.f32 %v615, %v588
      %v618 = vadd.f32 %v586, %v617
      %619 = vst.msk [vmem:[%s564] sm:$0xff] %vm598, %v618
      %v620 = vld [vmem:[%s5] sm:$0x1]
      %v622 = vlaneseq
      %v623 = vshrl.u32 %v622, 7
      %v624 = vsub.s32 0, %v623
      %v625 = vrot.slane %v620, %v624
      %v627 = vmul.f32 %v625, %v588
      %v628 = vadd.f32 %v586, %v627
      %629 = vst.msk [vmem:[%s571] sm:$0xff] %vm598, %v628
      %v630 = vld [vmem:[%s6] sm:$0x1]
      %v632 = vlaneseq
      %v633 = vshrl.u32 %v632, 7
      %v634 = vsub.s32 0, %v633
      %v635 = vrot.slane %v630, %v634
      %v637 = vmul.f32 %v635, %v588
      %v638 = vadd.f32 %v586, %v637
      %639 = vst.msk [vmem:[%s578] sm:$0xff] %vm598, %v638
      %v640 = vld [vmem:[%s7] sm:$0x1]
      %v642 = vlaneseq
      %v643 = vshrl.u32 %v642, 7
      %v644 = vsub.s32 0, %v643
      %v645 = vrot.slane %v640, %v644
      %v647 = vmul.f32 %v645, %v588
      %v648 = vadd.f32 %v586, %v647
      %649 = vst.msk [vmem:[%s585] sm:$0xff] %vm598, %v648
      %p650 = scmp.lt.s32.totalorder %s29, 1
      %s651 = scalar_select %p650, %s29, 1
      %p652 = scmp.lt.s32.totalorder %s30, 0
      %s653 = scalar_select %p652, %s30, 0
      %s654 = sadd.s32 %s653, %s651
      %s655 = smul.addr %s654, 8
      %s656 = scalar_lea.vmem %s8, %s655
      %p657 = scmp.lt.s32.totalorder %s29, 1
      %s658 = scalar_select %p657, %s29, 1
      %p659 = scmp.lt.s32.totalorder %s30, 0
      %s660 = scalar_select %p659, %s30, 0
      %s661 = sadd.s32 %s660, %s658
      %s662 = smul.addr %s661, 8
      %s663 = scalar_lea.vmem %s9, %s662
      %p664 = scmp.lt.s32.totalorder %s29, 1
      %s665 = scalar_select %p664, %s29, 1
      %p666 = scmp.lt.s32.totalorder %s30, 0
      %s667 = scalar_select %p666, %s30, 0
      %s668 = sadd.s32 %s667, %s665
      %s669 = smul.addr %s668, 8
      %s670 = scalar_lea.vmem %s10, %s669
      %p671 = scmp.lt.s32.totalorder %s29, 1
      %s672 = scalar_select %p671, %s29, 1
      %p673 = scmp.lt.s32.totalorder %s30, 0
      %s674 = scalar_select %p673, %s30, 0
      %s675 = sadd.s32 %s674, %s672
      %s676 = smul.addr %s675, 8
      %s677 = scalar_lea.vmem %s11, %s676
      %p678 = scmp.lt.s32.totalorder %s29, 1
      %s679 = scalar_select %p678, %s29, 1
      %p680 = scmp.lt.s32.totalorder %s30, 0
      %s681 = scalar_select %p680, %s30, 0
      %s682 = sadd.s32 %s681, %s679
      %s683 = smul.addr %s682, 8
      %s684 = scalar_lea.vmem %s12, %s683
      %p685 = scmp.lt.s32.totalorder %s29, 1
      %s686 = scalar_select %p685, %s29, 1
      %p687 = scmp.lt.s32.totalorder %s30, 0
      %s688 = scalar_select %p687, %s30, 0
      %s689 = sadd.s32 %s688, %s686
      %s690 = smul.addr %s689, 8
      %s691 = scalar_lea.vmem %s13, %s690
      // Predicated region
      $region53: #{forward.12} parent=51 // pred_check
        %p692 = pneg %p239
      $region54: #{forward.12} parent=51 // pred_check_branch
        %694 = sbr.rel (%p692) target = $region56
      $region55: #{forward.12} parent=51 // pred_region
        _
      $region56: #{forward.12} parent=51 // pred_fallthru
        _
      // Predicated region
      $region57: #{forward.12} parent=51 // pred_check
        %p695 = pneg %p267
      $region58: #{forward.12} parent=51 // pred_check_branch
        %697 = sbr.rel (%p695) target = $region60
      $region59: #{forward.12} parent=51 // pred_region
        _
      $region60: #{forward.12} parent=51 // pred_fallthru
        _
      // Predicated region
      $region61: #{forward.12} parent=51 // pred_check
        %p698 = pneg %p295
      $region62: #{forward.12} parent=51 // pred_check_branch
        %700 = sbr.rel (%p698) target = $region64
      $region63: #{forward.12} parent=51 // pred_region
        _
      $region64: #{forward.12} parent=51 // pred_fallthru
        _
      // Predicated region
      $region65: #{forward.12} parent=51 // pred_check
        %p701 = pneg %p323
      $region66: #{forward.12} parent=51 // pred_check_branch
        %703 = sbr.rel (%p701) target = $region68
      $region67: #{forward.12} parent=51 // pred_region
        _
      $region68: #{forward.12} parent=51 // pred_fallthru
        _
      // Predicated region
      $region69: #{forward.12} parent=51 // pred_check
        %p704 = pneg %p351
      $region70: #{forward.12} parent=51 // pred_check_branch
        %706 = sbr.rel (%p704) target = $region72
      $region71: #{forward.12} parent=51 // pred_region
        _
      $region72: #{forward.12} parent=51 // pred_fallthru
        _
      // Predicated region
      $region73: #{forward.12} parent=51 // pred_check
        %p707 = pneg %p379
      $region74: #{forward.12} parent=51 // pred_check_branch
        %709 = sbr.rel (%p707) target = $region76
      $region75: #{forward.12} parent=51 // pred_region
        _
      $region76: #{forward.12} parent=51 // pred_fallthru
        _
    $region52: #{forward.12} parent=5 // pred_fallthru
      _
    %p710 = scmp.le.s32.totalorder 2, %s20
    // Predicated region
    $region77: #{forward.12} parent=5 // pred_check
      %p711 = pneg %p710
    $region78: #{forward.12} parent=5 // pred_check_branch
      %713 = sbr.rel (%p711) target = $region80
    $region79: #{forward.12} parent=5 // pred_region
      %s714 = ssub.s32 %s20, 2
      // Predicated region
      $region81: #{forward.12} parent=79 // pred_check
        %p715 = pneg %p245
      $region82: #{forward.12} parent=79 // pred_check_branch
        %717 = sbr.rel (%p715) target = $region84
      $region83: #{forward.12} parent=79 // pred_region
        %p718 = scmp.lt.s32.totalorder %s31, 1
        %s719 = scalar_select %p718, %s31, 1
        %p720 = scmp.lt.s32.totalorder %s32, 0
        %s721 = scalar_select %p720, %s32, 0
        %s722 = sadd.s32 %s721, %s719
        %s723 = smul.addr %s722, 8
        %s724 = scalar_lea.vmem %s8, %s723
      $region84: #{forward.12} parent=79 // pred_fallthru
        _
      // Predicated region
      $region85: #{forward.12} parent=79 // pred_check
        %p725 = pneg %p273
      $region86: #{forward.12} parent=79 // pred_check_branch
        %727 = sbr.rel (%p725) target = $region88
      $region87: #{forward.12} parent=79 // pred_region
        %p728 = scmp.lt.s32.totalorder %s31, 1
        %s729 = scalar_select %p728, %s31, 1
        %p730 = scmp.lt.s32.totalorder %s32, 0
        %s731 = scalar_select %p730, %s32, 0
        %s732 = sadd.s32 %s731, %s729
        %s733 = smul.addr %s732, 8
        %s734 = scalar_lea.vmem %s9, %s733
      $region88: #{forward.12} parent=79 // pred_fallthru
        _
      // Predicated region
      $region89: #{forward.12} parent=79 // pred_check
        %p735 = pneg %p301
      $region90: #{forward.12} parent=79 // pred_check_branch
        %737 = sbr.rel (%p735) target = $region92
      $region91: #{forward.12} parent=79 // pred_region
        %p738 = scmp.lt.s32.totalorder %s31, 1
        %s739 = scalar_select %p738, %s31, 1
        %p740 = scmp.lt.s32.totalorder %s32, 0
        %s741 = scalar_select %p740, %s32, 0
        %s742 = sadd.s32 %s741, %s739
        %s743 = smul.addr %s742, 8
        %s744 = scalar_lea.vmem %s10, %s743
      $region92: #{forward.12} parent=79 // pred_fallthru
        _
      // Predicated region
      $region93: #{forward.12} parent=79 // pred_check
        %p745 = pneg %p329
      $region94: #{forward.12} parent=79 // pred_check_branch
        %747 = sbr.rel (%p745) target = $region96
      $region95: #{forward.12} parent=79 // pred_region
        %p748 = scmp.lt.s32.totalorder %s31, 1
        %s749 = scalar_select %p748, %s31, 1
        %p750 = scmp.lt.s32.totalorder %s32, 0
        %s751 = scalar_select %p750, %s32, 0
        %s752 = sadd.s32 %s751, %s749
        %s753 = smul.addr %s752, 8
        %s754 = scalar_lea.vmem %s11, %s753
      $region96: #{forward.12} parent=79 // pred_fallthru
        _
      // Predicated region
      $region97: #{forward.12} parent=79 // pred_check
        %p755 = pneg %p357
      $region98: #{forward.12} parent=79 // pred_check_branch
        %757 = sbr.rel (%p755) target = $region100
      $region99: #{forward.12} parent=79 // pred_region
        %p758 = scmp.lt.s32.totalorder %s31, 1
        %s759 = scalar_select %p758, %s31, 1
        %p760 = scmp.lt.s32.totalorder %s32, 0
        %s761 = scalar_select %p760, %s32, 0
        %s762 = sadd.s32 %s761, %s759
        %s763 = smul.addr %s762, 8
        %s764 = scalar_lea.vmem %s12, %s763
      $region100: #{forward.12} parent=79 // pred_fallthru
        _
      // Predicated region
      $region101: #{forward.12} parent=79 // pred_check
        %p765 = pneg %p385
      $region102: #{forward.12} parent=79 // pred_check_branch
        %767 = sbr.rel (%p765) target = $region104
      $region103: #{forward.12} parent=79 // pred_region
        %p768 = scmp.lt.s32.totalorder %s31, 1
        %s769 = scalar_select %p768, %s31, 1
        %p770 = scmp.lt.s32.totalorder %s32, 0
        %s771 = scalar_select %p770, %s32, 0
        %s772 = sadd.s32 %s771, %s769
        %s773 = smul.addr %s772, 8
        %s774 = scalar_lea.vmem %s13, %s773
      $region104: #{forward.12} parent=79 // pred_fallthru
        _
    $region80: #{forward.12} parent=5 // pred_fallthru
      _
  $region6: #{forward.12} parent=0 // loop_footer
    %s24 = sadd.s32 1, %s20
  $region7: #{forward.12} parent=0 // loop_footer_branch
    %19 = sbr.rel target = $region3
  $region8: #{forward.12} parent=0 // loop_exit
    _

// kernel: forward.23
$region0: #{forward.23}
  #allocation0 [shape = 'u32[]', space=smem, size = 0x4, offset = 0x4, fixed_abs, tag = 'smem constant byte address 0x4 - core index']
  #allocation1 [shape = 'u32[144,128]{1,0:T(1,128)}', space=vmem, size = 0x12000, scoped, tag = 'internal scratch']
  #allocation2 [shape = 'f32[16,32]{1,0:T(8,128)}', space=vmem, size = 0x2000, scoped, tag = 'scratch operand']
  %s0 = inlined_call_operand.vmem [shape: f32[16,32], index: 0, kind: input, shape index: {}]
  %s1 = inlined_call_operand.vmem [shape: f32[32,32], index: 1, kind: input, shape index: {}]
  %s2 = inlined_call_operand.hbm [shape: f32[16,32], index: 2, kind: output, shape index: {}]
  %s3 = sld [smem:[#allocation0]]
  $region26: #{forward.23} parent=0
    _
  %s5 = ssub.s32 1, %s3
  %s6 = scalar_select 0, %s5, %s3
  $region1: #{forward.23} parent=0
    #allocation3 [shape = 'u8[8192]{0}', space=vmem, size = 0x2000, scoped, tag = 'output window, operand 0, single buffered']
    #allocation4 [shape = 's32[1]{0}', space=sflag, size = 0x4, scoped, tag = 'scoped memory for forward.23']
    %7 = vsyncpa [#allocation4], 0
    // Predicated region
    $region2: #{forward.23} parent=1 // pred_check
      _
    $region3: #{forward.23} parent=1 // pred_check_branch
      %9 = sbr.rel (0) target = $region5
    $region4: #{forward.23} parent=1 // pred_region
      _
    $region5: #{forward.23} parent=1 // pred_fallthru
      _
    // Predicated region
    $region6: #{forward.23} parent=1 // pred_check
      _
    $region7: #{forward.23} parent=1 // pred_check_branch
      %11 = sbr.rel (0) target = $region9
    $region8: #{forward.23} parent=1 // pred_region
      _
    $region9: #{forward.23} parent=1 // pred_fallthru
      _
    %p12 = scmp.eq.s32.totalorder 0, 0
    // Predicated region
    $region10: #{forward.23} parent=1 // pred_check
      %p13 = pneg %p12
    $region11: #{forward.23} parent=1 // pred_check_branch
      %15 = sbr.rel (%p13) target = $region13
    $region12: #{forward.23} parent=1 // pred_region
      %vm16 = vcmask 261120
      %17 = vst.msk [vmem:[#allocation2] sm:$0xff] %vm16, 0.0
      %18 = vst.msk [vmem:[#allocation2 + $0x8] sm:$0xff] %vm16, 0.0
    $region13: #{forward.23} parent=1 // pred_fallthru
      _
    %v19 = vld [vmem:[#allocation2] sm:$0xff]
    %v20 = vld [vmem:[#allocation2 + $0x8] sm:$0xff]
    %v21 = vld [vmem:[%s0] sm:$0xff]
    %v22 = vld [vmem:[%s0 + $0x8] sm:$0xff]
    %v23 = vld [vmem:[%s1] sm:$0xff]
    %v24 = vld [vmem:[%s1 + $0x8] sm:$0xff]
    %v25 = vld [vmem:[%s1 + $0x10] sm:$0xff]
    %v26 = vld [vmem:[%s1 + $0x18] sm:$0xff]
    %vm27 = vcmask 261120
    %v29 = vsel %vm27, %v21, 0
    %v32 = vsel %vm27, %v22, 0
    %34 = vmatprep.subr.mxu0 0.0
    %35 = vmatpush1.msra.mxu0 %v23
    %36 = vmatprep.subr.mxu0 0.0
    %37 = vmatpush1.msra.mxu0 %v24
    %38 = vmatprep.subr.mxu0 0.0
    %39 = vmatpush1.msra.mxu0 %v25
    %40 = vmatprep.subr.mxu0 0.0
    %41 = vmatpush1.msra.mxu0 %v26
    %42 = vmatprep.subr.mxu0 0.0
    %43 = vmatpush1.msra.mxu0 0.0
    %44 = vmatprep.subr.mxu0 0.0
    %45 = vmatpush1.msra.mxu0 0.0
    %46 = vmatprep.subr.mxu0 0.0
    %47 = vmatpush1.msra.mxu0 0.0
    %48 = vmatprep.subr.mxu0 0.0
    %49 = vmatpush1.msra.mxu0 0.0
    %50 = vmatprep.subr.mxu0 0.0
    %51 = vmatpush1.msra.mxu0 0.0
    %52 = vmatprep.subr.mxu0 0.0
    %53 = vmatpush1.msra.mxu0 0.0
    %54 = vmatprep.subr.mxu0 0.0
    %55 = vmatpush1.msra.mxu0 0.0
    %56 = vmatprep.subr.mxu0 0.0
    %57 = vmatpush1.msra.mxu0 0.0
    %58 = vmatprep.subr.mxu0 0.0
    %59 = vmatpush1.msra.mxu0 0.0
    %60 = vmatprep.subr.mxu0 0.0
    %61 = vmatpush1.msra.mxu0 0.0
    %62 = vmatprep.subr.mxu0 0.0
    %63 = vmatpush1.msra.mxu0 0.0
    %64 = vmatprep.subr.mxu0 0.0
    %65 = vmatpush1.msra.mxu0 0.0
    %66 = vmatprep.subr.mxu0 0.0
    %67 = vmatpush1.msra.mxu0 0.0
    %68 = vmatprep.subr.mxu0 0.0
    %69 = vmatpush1.msra.mxu0 0.0
    %70 = vmatprep.subr.mxu0 0.0
    %71 = vmatpush1.msra.mxu0 0.0
    %72 = vmatprep.subr.mxu0 0.0
    %73 = vmatpush1.msra.mxu0 0.0
    %74 = vmatprep.subr.mxu0 0.0
    %75 = vmatpush1.msra.mxu0 0.0
    %76 = vmatprep.subr.mxu0 0.0
    %77 = vmatpush1.msra.mxu0 0.0
    %78 = vmatprep.subr.mxu0 0.0
    %79 = vmatpush1.msra.mxu0 0.0
    %80 = vmatprep.subr.mxu0 0.0
    %81 = vmatpush1.msra.mxu0 0.0
    %82 = vmatprep.subr.mxu0 0.0
    %83 = vmatpush1.msra.mxu0 0.0
    %84 = vmatprep.subr.mxu0 0.0
    %85 = vmatpush1.msra.mxu0 0.0
    %86 = vmatprep.subr.mxu0 0.0
    %87 = vmatpush1.msra.mxu0 0.0
    %88 = vmatprep.subr.mxu0 0.0
    %89 = vmatpush1.msra.mxu0 0.0
    %90 = vmatprep.subr.mxu0 0.0
    %91 = vmatpush1.msra.mxu0 0.0
    %92 = vmatprep.subr.mxu0 0.0
    %93 = vmatpush1.msra.mxu0 0.0
    %94 = vmatprep.subr.mxu0 0.0
    %95 = vmatpush1.msra.mxu0 0.0
    %96 = vmatprep.subr.mxu0 0.0
    %97 = vmatpush1.msra.mxu0 0.0
    %98 = vmatprep.mubr.f32.mxu0 0.0
    %99 = vmatmul.mubr.f32.gmra.mrb[0].mxu0 %v29
    %v100 = vpop.f32.mrb[0].mxu0
    %v101 = vadd.f32 0.0, %v100
    %v102 = vpop.f32.mrb[0].mxu0
    %103 = vmatprep.mubr.f32.mxu0 0.0
    %104 = vmatmul.mubr.f32.gmra.mrb[0].mxu0 %v32
    %v105 = vpop.f32.mrb[0].mxu0
    %v106 = vadd.f32 0.0, %v105
    %v107 = vpop.f32.mrb[0].mxu0
    %108 = vdwg.mxu0
    %v109 = vadd.f32 %v19, %v101
    %v110 = vadd.f32 %v20, %v106
    %111 = vst.msk [vmem:[#allocation2] sm:$0xff] %vm27, %v109
    %112 = vst.msk [vmem:[#allocation2 + $0x8] sm:$0xff] %vm27, %v110
    // Predicated region
    $region14: #{forward.23} parent=1 // pred_check
      %p113 = pneg %p12
    $region15: #{forward.23} parent=1 // pred_check_branch
      %115 = sbr.rel (%p113) target = $region17
    $region16: #{forward.23} parent=1 // pred_region
      %v116 = vld [vmem:[#allocation2] sm:$0xff]
      %v117 = vld [vmem:[#allocation2 + $0x8] sm:$0xff]
      %118 = vst.msk [vmem:[#allocation3] sm:$0xff] %vm27, %v116
      %119 = vst.msk [vmem:[#allocation3 + $0x8] sm:$0xff] %vm27, %v117
    $region17: #{forward.23} parent=1 // pred_fallthru
      _
    // Predicated region
    $region18: #{forward.23} parent=1 // pred_check
      _
    $region19: #{forward.23} parent=1 // pred_check_branch
      %121 = sbr.rel (0) target = $region21
    $region20: #{forward.23} parent=1 // pred_region
      %s123 = ssub.s32 256, 256
      %124 = vsyncadd [#allocation4], %s123
      %s125 = sshll.u32 [#allocation3], 4
      %s126 = int_to_ptr.vmem [resolvable:$true] %s125
      %131 = dma.vmem_to_hbm [thread:$0]  %s126, 256, %s2, [#allocation4], 128, 128, 8
    $region21: #{forward.23} parent=1 // pred_fallthru
      _
    // Predicated region
    $region22: #{forward.23} parent=1 // pred_check
      _
    $region23: #{forward.23} parent=1 // pred_check_branch
      %133 = sbr.rel (0) target = $region25
    $region24: #{forward.23} parent=1 // pred_region
      %134 = dma.done [#allocation4], 256
    $region25: #{forward.23} parent=1 // pred_fallthru
      _
    %135 = vsyncpa [#allocation4], 1

// kernel: forward.22
$region0: #{forward.22}
  #allocation0 [shape = 'u32[]', space=smem, size = 0x4, offset = 0x4, fixed_abs, tag = 'smem constant byte address 0x4 - core index']
  #allocation1 [shape = 'u32[144,128]{1,0:T(1,128)}', space=vmem, size = 0x12000, scoped, tag = 'internal scratch']
  #allocation2 [shape = 'f32[2,16,16]{2,1,0:T(8,128)}', space=vmem, size = 0x4000, scoped, tag = 'scratch operand']
  %s0 = inlined_call_operand.vmem [shape: f32[2,8,32], index: 0, kind: input, shape index: {}]
  %s1 = inlined_call_operand.vmem [shape: f32[2,8,32], index: 1, kind: input, shape index: {}]
  %s2 = inlined_call_operand.vmem [shape: f32[2,8,32], index: 2, kind: input, shape index: {}]
  %s3 = inlined_call_operand.vmem [shape: f32[2,8,32], index: 3, kind: input, shape index: {}]
  %s4 = inlined_call_operand.vmem [shape: f32[2,8,32], index: 4, kind: input, shape index: {}]
  %s5 = inlined_call_operand.vmem [shape: f32[1,32], index: 5, kind: input, shape index: {}]
  %s6 = inlined_call_operand.vmem [shape: f32[1,32], index: 6, kind: input, shape index: {}]
  %s7 = inlined_call_operand.vmem [shape: f32[2,16], index: 7, kind: input, shape index: {}]
  %s8 = inlined_call_operand.vmem [shape: f32[2,16], index: 8, kind: input, shape index: {}]
  %s9 = inlined_call_operand.vmem [shape: f32[2,16], index: 9, kind: input, shape index: {}]
  %s10 = inlined_call_operand.vmem [shape: f32[2,8,32], index: 10, kind: output, shape index: {}]
  %s11 = sld [smem:[#allocation0]]
  $region77: #{forward.22} parent=0
    _
  %s13 = ssub.s32 1, %s11
  %s14 = scalar_select 0, %s13, %s11
  loop: start=0, step=1, limit=4
  $region2: #{forward.22} parent=0 // loop_pre_header
    _
  $region3: #{forward.22} parent=0 // loop_header
    %s16 = sphi 0, %s20
    %p17 = scmp.ge.s32.totalorder %s16, 4
    %s23 = sphi 0, %s35
    %s24 = sphi 0, %s31
    %s25 = sphi 0, %s23
    %s26 = sphi 0, %s24
    %s27 = sphi 0, %s25
    %s28 = sphi 0, %s26
    %s40 = sphi 0, %s42
    %s43 = sphi 0, %s40
    %s44 = sphi 0, %s43
    %s60 = sphi 0, %s44
    %s68 = sphi 0, %s70
    %s71 = sphi 0, %s68
    %s72 = sphi 0, %s71
    %s88 = sphi 0, %s72
    %s96 = sphi 0, %s98
    %s99 = sphi 0, %s96
    %s100 = sphi 0, %s99
    %s116 = sphi 0, %s100
    %s124 = sphi 0, %s126
    %s127 = sphi 0, %s124
    %s128 = sphi 0, %s127
    %s144 = sphi 0, %s128
    %s152 = sphi 0, %s154
    %s155 = sphi 0, %s152
    %s156 = sphi 0, %s155
    %s172 = sphi 0, %s156
    %s176 = sphi 0, %s176
    %s178 = sphi 0, %s176
    %s179 = sphi 0, %s178
    %s193 = sphi 0, %s179
    %s197 = sphi 0, %s197
    %s199 = sphi 0, %s197
    %s200 = sphi 0, %s199
    %s214 = sphi 0, %s200
    %s218 = sphi 0, %s218
    %s220 = sphi 0, %s218
    %s221 = sphi 0, %s220
    %s235 = sphi 0, %s221
    %s239 = sphi 0, %s239
    %s241 = sphi 0, %s239
    %s242 = sphi 0, %s241
    %s256 = sphi 0, %s242
    %s260 = sphi 0, %s260
    %s262 = sphi 0, %s260
    %s263 = sphi 0, %s262
    %s277 = sphi 0, %s263
    %s285 = sphi 0, %s287
    %s288 = sphi 0, %s285
    %s289 = sphi 0, %s288
    %s305 = sphi 0, %s289
  $region4: #{forward.22} parent=0 // loop_header_branch
    %19 = sbr.rel (%p17) target = $region8
  $region5: #{forward.22} parent=0 // loop_body
    %s21 = ssub.s32 %s16, 1
    %s22 = ssub.s32 %s16, 2
    %s29 = sadd.s32 1, %s24
    %p30 = scmp.ge.s32.totalorder %s29, 1
    %s31 = scalar_select %p30, 0, %s29
    %s32 = sadd.s32 1, %s23
    %s33 = scalar_select %p30, %s32, %s23
    %p34 = scmp.ge.s32.totalorder %s33, 2
    %s35 = scalar_select %p34, 0, %s33
    %s36 = ssub.s32 %s23, %s35
    %s37 = ssub.s32 %s24, %s31
    %s38 = sor.u32 %s36, %s37
    %p39 = scmp.eq.s32.totalorder %s38, 0
    %s41 = sadd.s32 %s40, 1
    %s42 = scalar_select %p39, %s40, %s41
    %p45 = pneg %p39
    %p46 = scmp.eq.s32.totalorder %s16, 1
    %p47 = por %p45, %p46
    %p48 = scmp.ne.s32.totalorder %s40, %s43
    %p49 = scmp.eq.s32.totalorder %s16, 0
    %p50 = por %p48, %p49
    %p51 = scmp.ne.s32.totalorder %s40, %s43
    %p52 = scmp.eq.s32.totalorder %s21, 1
    %p53 = por %p51, %p52
    %p54 = scmp.ne.s32.totalorder %s43, %s44
    %p55 = scmp.eq.s32.totalorder %s21, 0
    %p56 = por %p54, %p55
    %p57 = scmp.ne.s32.totalorder %s43, %s44
    %p58 = scmp.eq.s32.totalorder %s22, 1
    %p59 = por %p57, %p58
    %p61 = scmp.ne.s32.totalorder %s44, %s60
    %p62 = scmp.eq.s32.totalorder %s22, 0
    %p63 = por %p61, %p62
    %s64 = ssub.s32 %s23, %s35
    %s65 = ssub.s32 %s24, %s31
    %s66 = sor.u32 %s64, %s65
    %p67 = scmp.eq.s32.totalorder %s66, 0
    %s69 = sadd.s32 %s68, 1
    %s70 = scalar_select %p67, %s68, %s69
    %p73 = pneg %p67
    %p74 = scmp.eq.s32.totalorder %s16, 1
    %p75 = por %p73, %p74
    %p76 = scmp.ne.s32.totalorder %s68, %s71
    %p77 = scmp.eq.s32.totalorder %s16, 0
    %p78 = por %p76, %p77
    %p79 = scmp.ne.s32.totalorder %s68, %s71
    %p80 = scmp.eq.s32.totalorder %s21, 1
    %p81 = por %p79, %p80
    %p82 = scmp.ne.s32.totalorder %s71, %s72
    %p83 = scmp.eq.s32.totalorder %s21, 0
    %p84 = por %p82, %p83
    %p85 = scmp.ne.s32.totalorder %s71, %s72
    %p86 = scmp.eq.s32.totalorder %s22, 1
    %p87 = por %p85, %p86
    %p89 = scmp.ne.s32.totalorder %s72, %s88
    %p90 = scmp.eq.s32.totalorder %s22, 0
    %p91 = por %p89, %p90
    %s92 = ssub.s32 %s23, %s35
    %s93 = ssub.s32 %s24, %s31
    %s94 = sor.u32 %s92, %s93
    %p95 = scmp.eq.s32.totalorder %s94, 0
    %s97 = sadd.s32 %s96, 1
    %s98 = scalar_select %p95, %s96, %s97
    %p101 = pneg %p95
    %p102 = scmp.eq.s32.totalorder %s16, 1
    %p103 = por %p101, %p102
    %p104 = scmp.ne.s32.totalorder %s96, %s99
    %p105 = scmp.eq.s32.totalorder %s16, 0
    %p106 = por %p104, %p105
    %p107 = scmp.ne.s32.totalorder %s96, %s99
    %p108 = scmp.eq.s32.totalorder %s21, 1
    %p109 = por %p107, %p108
    %p110 = scmp.ne.s32.totalorder %s99, %s100
    %p111 = scmp.eq.s32.totalorder %s21, 0
    %p112 = por %p110, %p111
    %p113 = scmp.ne.s32.totalorder %s99, %s100
    %p114 = scmp.eq.s32.totalorder %s22, 1
    %p115 = por %p113, %p114
    %p117 = scmp.ne.s32.totalorder %s100, %s116
    %p118 = scmp.eq.s32.totalorder %s22, 0
    %p119 = por %p117, %p118
    %s120 = ssub.s32 %s23, %s35
    %s121 = ssub.s32 %s24, %s31
    %s122 = sor.u32 %s120, %s121
    %p123 = scmp.eq.s32.totalorder %s122, 0
    %s125 = sadd.s32 %s124, 1
    %s126 = scalar_select %p123, %s124, %s125
    %p129 = pneg %p123
    %p130 = scmp.eq.s32.totalorder %s16, 1
    %p131 = por %p129, %p130
    %p132 = scmp.ne.s32.totalorder %s124, %s127
    %p133 = scmp.eq.s32.totalorder %s16, 0
    %p134 = por %p132, %p133
    %p135 = scmp.ne.s32.totalorder %s124, %s127
    %p136 = scmp.eq.s32.totalorder %s21, 1
    %p137 = por %p135, %p136
    %p138 = scmp.ne.s32.totalorder %s127, %s128
    %p139 = scmp.eq.s32.totalorder %s21, 0
    %p140 = por %p138, %p139
    %p141 = scmp.ne.s32.totalorder %s127, %s128
    %p142 = scmp.eq.s32.totalorder %s22, 1
    %p143 = por %p141, %p142
    %p145 = scmp.ne.s32.totalorder %s128, %s144
    %p146 = scmp.eq.s32.totalorder %s22, 0
    %p147 = por %p145, %p146
    %s148 = ssub.s32 %s23, %s35
    %s149 = ssub.s32 %s24, %s31
    %s150 = sor.u32 %s148, %s149
    %p151 = scmp.eq.s32.totalorder %s150, 0
    %s153 = sadd.s32 %s152, 1
    %s154 = scalar_select %p151, %s152, %s153
    %p157 = pneg %p151
    %p158 = scmp.eq.s32.totalorder %s16, 1
    %p159 = por %p157, %p158
    %p160 = scmp.ne.s32.totalorder %s152, %s155
    %p161 = scmp.eq.s32.totalorder %s16, 0
    %p162 = por %p160, %p161
    %p163 = scmp.ne.s32.totalorder %s152, %s155
    %p164 = scmp.eq.s32.totalorder %s21, 1
    %p165 = por %p163, %p164
    %p166 = scmp.ne.s32.totalorder %s155, %s156
    %p167 = scmp.eq.s32.totalorder %s21, 0
    %p168 = por %p166, %p167
    %p169 = scmp.ne.s32.totalorder %s155, %s156
    %p170 = scmp.eq.s32.totalorder %s22, 1
    %p171 = por %p169, %p170
    %p173 = scmp.ne.s32.totalorder %s156, %s172
    %p174 = scmp.eq.s32.totalorder %s22, 0
    %p175 = por %p173, %p174
    %s177 = sadd.s32 %s176, 1
    %p180 = scmp.eq.s32.totalorder %s16, 1
    %p181 = scmp.ne.s32.totalorder %s176, %s178
    %p182 = scmp.eq.s32.totalorder %s16, 0
    %p183 = por %p181, %p182
    %p184 = scmp.ne.s32.totalorder %s176, %s178
    %p185 = scmp.eq.s32.totalorder %s21, 1
    %p186 = por %p184, %p185
    %p187 = scmp.ne.s32.totalorder %s178, %s179
    %p188 = scmp.eq.s32.totalorder %s21, 0
    %p189 = por %p187, %p188
    %p190 = scmp.ne.s32.totalorder %s178, %s179
    %p191 = scmp.eq.s32.totalorder %s22, 1
    %p192 = por %p190, %p191
    %p194 = scmp.ne.s32.totalorder %s179, %s193
    %p195 = scmp.eq.s32.totalorder %s22, 0
    %p196 = por %p194, %p195
    %s198 = sadd.s32 %s197, 1
    %p201 = scmp.eq.s32.totalorder %s16, 1
    %p202 = scmp.ne.s32.totalorder %s197, %s199
    %p203 = scmp.eq.s32.totalorder %s16, 0
    %p204 = por %p202, %p203
    %p205 = scmp.ne.s32.totalorder %s197, %s199
    %p206 = scmp.eq.s32.totalorder %s21, 1
    %p207 = por %p205, %p206
    %p208 = scmp.ne.s32.totalorder %s199, %s200
    %p209 = scmp.eq.s32.totalorder %s21, 0
    %p210 = por %p208, %p209
    %p211 = scmp.ne.s32.totalorder %s199, %s200
    %p212 = scmp.eq.s32.totalorder %s22, 1
    %p213 = por %p211, %p212
    %p215 = scmp.ne.s32.totalorder %s200, %s214
    %p216 = scmp.eq.s32.totalorder %s22, 0
    %p217 = por %p215, %p216
    %s219 = sadd.s32 %s218, 1
    %p222 = scmp.eq.s32.totalorder %s16, 1
    %p223 = scmp.ne.s32.totalorder %s218, %s220
    %p224 = scmp.eq.s32.totalorder %s16, 0
    %p225 = por %p223, %p224
    %p226 = scmp.ne.s32.totalorder %s218, %s220
    %p227 = scmp.eq.s32.totalorder %s21, 1
    %p228 = por %p226, %p227
    %p229 = scmp.ne.s32.totalorder %s220, %s221
    %p230 = scmp.eq.s32.totalorder %s21, 0
    %p231 = por %p229, %p230
    %p232 = scmp.ne.s32.totalorder %s220, %s221
    %p233 = scmp.eq.s32.totalorder %s22, 1
    %p234 = por %p232, %p233
    %p236 = scmp.ne.s32.totalorder %s221, %s235
    %p237 = scmp.eq.s32.totalorder %s22, 0
    %p238 = por %p236, %p237
    %s240 = sadd.s32 %s239, 1
    %p243 = scmp.eq.s32.totalorder %s16, 1
    %p244 = scmp.ne.s32.totalorder %s239, %s241
    %p245 = scmp.eq.s32.totalorder %s16, 0
    %p246 = por %p244, %p245
    %p247 = scmp.ne.s32.totalorder %s239, %s241
    %p248 = scmp.eq.s32.totalorder %s21, 1
    %p249 = por %p247, %p248
    %p250 = scmp.ne.s32.totalorder %s241, %s242
    %p251 = scmp.eq.s32.totalorder %s21, 0
    %p252 = por %p250, %p251
    %p253 = scmp.ne.s32.totalorder %s241, %s242
    %p254 = scmp.eq.s32.totalorder %s22, 1
    %p255 = por %p253, %p254
    %p257 = scmp.ne.s32.totalorder %s242, %s256
    %p258 = scmp.eq.s32.totalorder %s22, 0
    %p259 = por %p257, %p258
    %s261 = sadd.s32 %s260, 1
    %p264 = scmp.eq.s32.totalorder %s16, 1
    %p265 = scmp.ne.s32.totalorder %s260, %s262
    %p266 = scmp.eq.s32.totalorder %s16, 0
    %p267 = por %p265, %p266
    %p268 = scmp.ne.s32.totalorder %s260, %s262
    %p269 = scmp.eq.s32.totalorder %s21, 1
    %p270 = por %p268, %p269
    %p271 = scmp.ne.s32.totalorder %s262, %s263
    %p272 = scmp.eq.s32.totalorder %s21, 0
    %p273 = por %p271, %p272
    %p274 = scmp.ne.s32.totalorder %s262, %s263
    %p275 = scmp.eq.s32.totalorder %s22, 1
    %p276 = por %p274, %p275
    %p278 = scmp.ne.s32.totalorder %s263, %s277
    %p279 = scmp.eq.s32.totalorder %s22, 0
    %p280 = por %p278, %p279
    %s281 = ssub.s32 %s23, %s35
    %s282 = ssub.s32 %s24, %s31
    %s283 = sor.u32 %s281, %s282
    %p284 = scmp.eq.s32.totalorder %s283, 0
    %s286 = sadd.s32 %s285, 1
    %s287 = scalar_select %p284, %s285, %s286
    %p290 = pneg %p284
    %p291 = scmp.eq.s32.totalorder %s16, 1
    %p292 = por %p290, %p291
    %p293 = scmp.ne.s32.totalorder %s285, %s288
    %p294 = scmp.eq.s32.totalorder %s16, 0
    %p295 = por %p293, %p294
    %p296 = scmp.ne.s32.totalorder %s285, %s288
    %p297 = scmp.eq.s32.totalorder %s21, 1
    %p298 = por %p296, %p297
    %p299 = scmp.ne.s32.totalorder %s288, %s289
    %p300 = scmp.eq.s32.totalorder %s21, 0
    %p301 = por %p299, %p300
    %p302 = scmp.ne.s32.totalorder %s288, %s289
    %p303 = scmp.eq.s32.totalorder %s22, 1
    %p304 = por %p302, %p303
    %p306 = scmp.ne.s32.totalorder %s289, %s305
    %p307 = scmp.eq.s32.totalorder %s22, 0
    %p308 = por %p306, %p307
    %p309 = scmp.le.s32.totalorder 1, %s16
    %p310 = scmp.lt.s32.totalorder %s16, 3
    %p311 = pnand %p309, %p310
    %p312 = pneg %p311
    // Predicated region
    $region9: #{forward.22} parent=5 // pred_check
      _
    $region10: #{forward.22} parent=5 // pred_check_branch
      %314 = sbr.rel (%p311) target = $region12
    $region11: #{forward.22} parent=5 // pred_region
      %s315 = ssub.s32 %s16, 1
      // Predicated region
      $region13: #{forward.22} parent=11 // pred_check
        %p316 = pneg %p189
      $region14: #{forward.22} parent=11 // pred_check_branch
        %318 = sbr.rel (%p316) target = $region16
      $region15: #{forward.22} parent=11 // pred_region
        _
      $region16: #{forward.22} parent=11 // pred_fallthru
        _
      // Predicated region
      $region17: #{forward.22} parent=11 // pred_check
        %p319 = pneg %p210
      $region18: #{forward.22} parent=11 // pred_check_branch
        %321 = sbr.rel (%p319) target = $region20
      $region19: #{forward.22} parent=11 // pred_region
        _
      $region20: #{forward.22} parent=11 // pred_fallthru
        _
      // Predicated region
      $region21: #{forward.22} parent=11 // pred_check
        %p322 = pneg %p231
      $region22: #{forward.22} parent=11 // pred_check_branch
        %324 = sbr.rel (%p322) target = $region24
      $region23: #{forward.22} parent=11 // pred_region
        _
      $region24: #{forward.22} parent=11 // pred_fallthru
        _
      // Predicated region
      $region25: #{forward.22} parent=11 // pred_check
        %p325 = pneg %p252
      $region26: #{forward.22} parent=11 // pred_check_branch
        %327 = sbr.rel (%p325) target = $region28
      $region27: #{forward.22} parent=11 // pred_region
        _
      $region28: #{forward.22} parent=11 // pred_fallthru
        _
      // Predicated region
      $region29: #{forward.22} parent=11 // pred_check
        %p328 = pneg %p273
      $region30: #{forward.22} parent=11 // pred_check_branch
        %330 = sbr.rel (%p328) target = $region32
      $region31: #{forward.22} parent=11 // pred_region
        _
      $region32: #{forward.22} parent=11 // pred_fallthru
        _
    $region12: #{forward.22} parent=5 // pred_fallthru
      _
    %p331 = scmp.lt.s32.totalorder %s16, 2
    // Predicated region
    $region33: #{forward.22} parent=5 // pred_check
      %p332 = pneg %p331
    $region34: #{forward.22} parent=5 // pred_check_branch
      %334 = sbr.rel (%p332) target = $region36
    $region35: #{forward.22} parent=5 // pred_region
      // Predicated region
      $region37: #{forward.22} parent=35 // pred_check
        %p335 = pneg %p50
      $region38: #{forward.22} parent=35 // pred_check_branch
        %337 = sbr.rel (%p335) target = $region40
      $region39: #{forward.22} parent=35 // pred_region
        %p338 = scmp.lt.s32.totalorder %s23, 1
        %s339 = scalar_select %p338, %s23, 1
        %p340 = scmp.lt.s32.totalorder %s24, 0
        %s341 = scalar_select %p340, %s24, 0
        %s342 = sadd.s32 %s341, %s339
        %s343 = smul.addr %s342, 8
        %s344 = scalar_lea.vmem %s0, %s343
      $region40: #{forward.22} parent=35 // pred_fallthru
        _
      // Predicated region
      $region41: #{forward.22} parent=35 // pred_check
        %p345 = pneg %p78
      $region42: #{forward.22} parent=35 // pred_check_branch
        %347 = sbr.rel (%p345) target = $region44
      $region43: #{forward.22} parent=35 // pred_region
        %p348 = scmp.lt.s32.totalorder %s23, 1
        %s349 = scalar_select %p348, %s23, 1
        %p350 = scmp.lt.s32.totalorder %s24, 0
        %s351 = scalar_select %p350, %s24, 0
        %s352 = sadd.s32 %s351, %s349
        %s353 = smul.addr %s352, 8
        %s354 = scalar_lea.vmem %s1, %s353
      $region44: #{forward.22} parent=35 // pred_fallthru
        _
      // Predicated region
      $region45: #{forward.22} parent=35 // pred_check
        %p355 = pneg %p106
      $region46: #{forward.22} parent=35 // pred_check_branch
        %357 = sbr.rel (%p355) target = $region48
      $region47: #{forward.22} parent=35 // pred_region
        %p358 = scmp.lt.s32.totalorder %s23, 1
        %s359 = scalar_select %p358, %s23, 1
        %p360 = scmp.lt.s32.totalorder %s24, 0
        %s361 = scalar_select %p360, %s24, 0
        %s362 = sadd.s32 %s361, %s359
        %s363 = smul.addr %s362, 8
        %s364 = scalar_lea.vmem %s2, %s363
      $region48: #{forward.22} parent=35 // pred_fallthru
        _
      // Predicated region
      $region49: #{forward.22} parent=35 // pred_check
        %p365 = pneg %p134
      $region50: #{forward.22} parent=35 // pred_check_branch
        %367 = sbr.rel (%p365) target = $region52
      $region51: #{forward.22} parent=35 // pred_region
        %p368 = scmp.lt.s32.totalorder %s23, 1
        %s369 = scalar_select %p368, %s23, 1
        %p370 = scmp.lt.s32.totalorder %s24, 0
        %s371 = scalar_select %p370, %s24, 0
        %s372 = sadd.s32 %s371, %s369
        %s373 = smul.addr %s372, 8
        %s374 = scalar_lea.vmem %s3, %s373
      $region52: #{forward.22} parent=35 // pred_fallthru
        _
      // Predicated region
      $region53: #{forward.22} parent=35 // pred_check
        %p375 = pneg %p162
      $region54: #{forward.22} parent=35 // pred_check_branch
        %377 = sbr.rel (%p375) target = $region56
      $region55: #{forward.22} parent=35 // pred_region
        %p378 = scmp.lt.s32.totalorder %s23, 1
        %s379 = scalar_select %p378, %s23, 1
        %p380 = scmp.lt.s32.totalorder %s24, 0
        %s381 = scalar_select %p380, %s24, 0
        %s382 = sadd.s32 %s381, %s379
        %s383 = smul.addr %s382, 8
        %s384 = scalar_lea.vmem %s4, %s383
      $region56: #{forward.22} parent=35 // pred_fallthru
        _
    $region36: #{forward.22} parent=5 // pred_fallthru
      _
    %p385 = scmp.le.s32.totalorder 1, %s16
    %p386 = scmp.lt.s32.totalorder %s16, 3
    %p387 = pnand %p385, %p386
    %p388 = pneg %p387
    // Predicated region
    $region57: #{forward.22} parent=5 // pred_check
      _
    $region58: #{forward.22} parent=5 // pred_check_branch
      %390 = sbr.rel (%p387) target = $region60
    $region59: #{forward.22} parent=5 // pred_region
      %s391 = ssub.s32 %s16, 1
      %p392 = scmp.lt.s32.totalorder %s25, 1
      %s393 = scalar_select %p392, %s25, 1
      %p394 = scmp.lt.s32.totalorder %s26, 0
      %s395 = scalar_select %p394, %s26, 0
      %s396 = sadd.s32 %s395, %s393
      %s397 = smul.addr %s396, 8
      %s398 = scalar_lea.vmem %s0, %s397
      %p399 = pneg %p56
      %p400 = pneg %p53
      %p401 = scmp.lt.s32.totalorder %s25, 1
      %s402 = scalar_select %p401, %s25, 1
      %p403 = scmp.lt.s32.totalorder %s26, 0
      %s404 = scalar_select %p403, %s26, 0
      %s405 = sadd.s32 %s404, %s402
      %s406 = smul.addr %s405, 8
      %s407 = scalar_lea.vmem %s1, %s406
      %p408 = pneg %p84
      %p409 = pneg %p81
      %p410 = scmp.lt.s32.totalorder %s25, 1
      %s411 = scalar_select %p410, %s25, 1
      %p412 = scmp.lt.s32.totalorder %s26, 0
      %s413 = scalar_select %p412, %s26, 0
      %s414 = sadd.s32 %s413, %s411
      %s415 = smul.addr %s414, 8
      %s416 = scalar_lea.vmem %s2, %s415
      %p417 = pneg %p112
      %p418 = pneg %p109
      %p419 = scmp.lt.s32.totalorder %s25, 1
      %s420 = scalar_select %p419, %s25, 1
      %p421 = scmp.lt.s32.totalorder %s26, 0
      %s422 = scalar_select %p421, %s26, 0
      %s423 = sadd.s32 %s422, %s420
      %s424 = smul.addr %s423, 8
      %s425 = scalar_lea.vmem %s3, %s424
      %p426 = pneg %p140
      %p427 = pneg %p137
      %p428 = scmp.lt.s32.totalorder %s25, 1
      %s429 = scalar_select %p428, %s25, 1
      %p430 = scmp.lt.s32.totalorder %s26, 0
      %s431 = scalar_select %p430, %s26, 0
      %s432 = sadd.s32 %s431, %s429
      %s433 = smul.addr %s432, 8
      %s434 = scalar_lea.vmem %s4, %s433
      %p435 = pneg %p168
      %p436 = pneg %p165
      %p437 = pneg %p189
      %p438 = pneg %p186
      %p439 = pneg %p210
      %p440 = pneg %p207
      %p441 = pneg %p231
      %p442 = pneg %p228
      %p443 = pneg %p252
      %p444 = pneg %p249
      %p445 = pneg %p273
      %p446 = pneg %p270
      %p447 = pneg %p301
      %p448 = pneg %p298
      %p449 = scmp.lt.s32.totalorder %s25, 1
      %s450 = scalar_select %p449, %s25, 1
      %p451 = scmp.lt.s32.totalorder %s26, 0
      %s452 = scalar_select %p451, %s26, 0
      %s453 = sadd.s32 %s452, %s450
      %s454 = smul.addr %s453, 8
      %s455 = scalar_lea.vmem %s10, %s454
      %p456 = scmp.lt.s32.totalorder %s25, 1
      %s457 = scalar_select %p456, %s25, 1
      %p458 = scmp.lt.s32.totalorder %s26, 0
      %s459 = scalar_select %p458, %s26, 0
      %s460 = sadd.s32 %s459, %s457
      %s461 = smul.addr %s460, 8
      %s462 = scalar_lea.vmem %s0, %s461
      %p463 = scmp.lt.s32.totalorder %s25, 1
      %s464 = scalar_select %p463, %s25, 1
      %p465 = scmp.lt.s32.totalorder %s26, 0
      %s466 = scalar_select %p465, %s26, 0
      %s467 = sadd.s32 %s466, %s464
      %s468 = smul.addr %s467, 8
      %s469 = scalar_lea.vmem %s1, %s468
      %p470 = scmp.lt.s32.totalorder %s25, 1
      %s471 = scalar_select %p470, %s25, 1
      %p472 = scmp.lt.s32.totalorder %s26, 0
      %s473 = scalar_select %p472, %s26, 0
      %s474 = sadd.s32 %s473, %s471
      %s475 = smul.addr %s474, 8
      %s476 = scalar_lea.vmem %s2, %s475
      %p477 = scmp.lt.s32.totalorder %s25, 1
      %s478 = scalar_select %p477, %s25, 1
      %p479 = scmp.lt.s32.totalorder %s26, 0
      %s480 = scalar_select %p479, %s26, 0
      %s481 = sadd.s32 %s480, %s478
      %s482 = smul.addr %s481, 8
      %s483 = scalar_lea.vmem %s3, %s482
      %p484 = scmp.lt.s32.totalorder %s25, 1
      %s485 = scalar_select %p484, %s25, 1
      %p486 = scmp.lt.s32.totalorder %s26, 0
      %s487 = scalar_select %p486, %s26, 0
      %s488 = sadd.s32 %s487, %s485
      %s489 = smul.addr %s488, 8
      %s490 = scalar_lea.vmem %s4, %s489
      %p491 = scmp.lt.s32.totalorder %s25, 1
      %s492 = scalar_select %p491, %s25, 1
      %p493 = scmp.lt.s32.totalorder %s26, 0
      %s494 = scalar_select %p493, %s26, 0
      %s495 = sadd.s32 %s494, %s492
      %s496 = smul.addr %s495, 8
      %s497 = scalar_lea.vmem %s10, %s496
      %p498 = scmp.eq.s32.totalorder %s26, 0
      // Predicated region
      $region61: #{forward.22} parent=59 // pred_check
        %p499 = pneg %p498
      $region62: #{forward.22} parent=59 // pred_check_branch
        %501 = sbr.rel (%p499) target = $region64
      $region63: #{forward.22} parent=59 // pred_region
        %vm502 = vcmask 130048
        %503 = vst.msk [vmem:[#allocation2] sm:$0xff] %vm502, 0.0
        %504 = vst.msk [vmem:[#allocation2 + $0x8] sm:$0xff] %vm502, 0.0
        %505 = vst.msk [vmem:[#allocation2 + $0x10] sm:$0xff] %vm502, 0.0
        %506 = vst.msk [vmem:[#allocation2 + $0x18] sm:$0xff] %vm502, 0.0
      $region64: #{forward.22} parent=59 // pred_fallthru
        _
      %v507 = vld [vmem:[%s462] sm:$0xff]
      %v508 = vld [vmem:[%s490] sm:$0xff]
      %v509 = vsub.f32 0.0, %v508
      %v510 = vmul.f32 %v509, 1.442695
      %v511 = vpow.pop %v510
      %v512 = vadd.f32 %v511, 1.0
      %v513 = vrcp.pop %v512
      %v514 = vmul.f32 1.0, %v513
      %v515 = vld [vmem:[%s469] sm:$0xff]
      %v516 = vsub.f32 0.0, %v515
      %v517 = vmul.f32 %v516, 1.442695
      %v518 = vpow.pop %v517
      %v519 = vadd.f32 %v518, 1.0
      %v520 = vrcp.pop %v519
      %v521 = vmul.f32 1.0, %v520
      %v522 = vmul.f32 %v521, 0.60653067
      %v523 = vld [vmem:[%s476] sm:$0xff]
      %v524 = vld [vmem:[%s483] sm:$0xff]
      %v525 = vld [vmem:[%s5] sm:$0x1]
      %v527 = vlaneseq
      %v528 = vshrl.u32 %v527, 7
      %v529 = vsub.s32 0, %v528
      %v530 = vrot.slane %v525, %v529
      %v532 = vmul.f32 %v523, %v530
      %v533 = vsub.f32 %v514, 1.0
      %v534 = vld [vmem:[%s6] sm:$0x1]
      %v536 = vlaneseq
      %v537 = vshrl.u32 %v536, 7
      %v538 = vsub.s32 0, %v537
      %v539 = vrot.slane %v534, %v538
      %v541 = vmul.f32 %v533, %v539
      %v542 = vadd.f32 %v541, 1.0
      %v543 = vmul.f32 %v523, %v542
      %v544 = vlaneseq
      %v545 = vshrl.u32 %v544, 7
      %v546 = vlaneseq
      %v547 = vand.u32 %v546, 127
      %vm548 = vcmp.le.s32.totalorder %v547, %v545
      %v549 = vsel %vm548, 1, 0
      %v550 = vcvt.s32.f32 %v549
      %vm551 = vcmp.lt.s32.totalorder %v547, %v545
      %v552 = vsel %vm551, 1, 0
      %v553 = vcvt.s32.f32 %v552
      %vm554 = vcmp.eq.s32.totalorder %v547, %v545
      %v555 = vsel %vm554, 1, 0
      %v556 = vcvt.s32.f32 %v555
      %v557 = vadd.s32 %v545, 8
      %vm558 = vcmp.eq.s32.totalorder %v545, %v547
      %vm559 = vcmp.eq.s32.totalorder %v557, %v547
      %v560 = vsel %vm558, 1, 0
      %v561 = vsel %vm559, 1, 0
      %v562 = vcvt.s32.f32 %v560
      %v563 = vcvt.s32.f32 %v561
      %v564 = vmul.f32 %v532, %v532
      %vm565 = vcmask 130048
      %v566 = vsel %vm565, %v564, 0.0
      %567 = vadd.xlane.f32.xlu0 %v566
      %v568 = vpop.xlane.xlu0 %567
      %v569 = vrsqrt.pop %v568
      %v570 = vmul.f32 %v568, %v569
      %vm571 = vcmp.eq.f32.partialorder %v568, inf
      %v572 = vsel %vm571, %v568, %v570
      %vm573 = vcmp.eq.f32.partialorder %v568, 0.0
      %v574 = vand.u32 %v568, 2147483648
      %v575 = vsel %vm573, %v574, %v572
      %v576 = vmax.f32 %v575, 1e-12
      %v577 = vrcp.pop %v576
      %v578 = vmul.f32 %v532, %v577
      %v579 = vsub.f32 0.0, %v578
      %v580 = vmul.f32 %v579, %v514
      %vm581 = vcmask 64512
      %v583 = vsel %vm581, %v550, 0
      %585 = vmatprep.subr.mxu0 0.0
      %586 = vmatpush1.msra.mxu0 %v522
      %587 = vmatprep.subr.mxu0 0.0
      %588 = vmatpush1.msra.mxu0 0.0
      %589 = vmatprep.subr.mxu0 0.0
      %590 = vmatpush1.msra.mxu0 0.0
      %591 = vmatprep.subr.mxu0 0.0
      %592 = vmatpush1.msra.mxu0 0.0
      %593 = vmatprep.subr.mxu0 0.0
      %594 = vmatpush1.msra.mxu0 0.0
      %595 = vmatprep.subr.mxu0 0.0
      %596 = vmatpush1.msra.mxu0 0.0
      %597 = vmatprep.subr.mxu0 0.0
      %598 = vmatpush1.msra.mxu0 0.0
      %599 = vmatprep.subr.mxu0 0.0
      %600 = vmatpush1.msra.mxu0 0.0
      %601 = vmatprep.subr.mxu0 0.0
      %602 = vmatpush1.msra.mxu0 0.0
      %603 = vmatprep.subr.mxu0 0.0
      %604 = vmatpush1.msra.mxu0 0.0
      %605 = vmatprep.subr.mxu0 0.0
      %606 = vmatpush1.msra.mxu0 0.0
      %607 = vmatprep.subr.mxu0 0.0
      %608 = vmatpush1.msra.mxu0 0.0
      %609 = vmatprep.subr.mxu0 0.0
      %610 = vmatpush1.msra.mxu0 0.0
      %611 = vmatprep.subr.mxu0 0.0
      %612 = vmatpush1.msra.mxu0 0.0
      %613 = vmatprep.subr.mxu0 0.0
      %614 = vmatpush1.msra.mxu0 0.0
      %615 = vmatprep.subr.mxu0 0.0
      %616 = vmatpush1.msra.mxu0 0.0
      %617 = vmatprep.subr.mxu0 0.0
      %618 = vmatpush1.msra.mxu0 0.0
      %619 = vmatprep.subr.mxu0 0.0
      %620 = vmatpush1.msra.mxu0 0.0
      %621 = vmatprep.subr.mxu0 0.0
      %622 = vmatpush1.msra.mxu0 0.0
      %623 = vmatprep.subr.mxu0 0.0
      %624 = vmatpush1.msra.mxu0 0.0
      %625 = vmatprep.subr.mxu0 0.0
      %626 = vmatpush1.msra.mxu0 0.0
      %627 = vmatprep.subr.mxu0 0.0
      %628 = vmatpush1.msra.mxu0 0.0
      %629 = vmatprep.subr.mxu0 0.0
      %630 = vmatpush1.msra.mxu0 0.0
      %631 = vmatprep.subr.mxu0 0.0
      %632 = vmatpush1.msra.mxu0 0.0
      %633 = vmatprep.subr.mxu0 0.0
      %634 = vmatpush1.msra.mxu0 0.0
      %635 = vmatprep.subr.mxu0 0.0
      %636 = vmatpush1.msra.mxu0 0.0
      %637 = vmatprep.subr.mxu0 0.0
      %638 = vmatpush1.msra.mxu0 0.0
      %639 = vmatprep.subr.mxu0 0.0
      %640 = vmatpush1.msra.mxu0 0.0
      %641 = vmatprep.subr.mxu0 0.0
      %642 = vmatpush1.msra.mxu0 0.0
      %643 = vmatprep.subr.mxu0 0.0
      %644 = vmatpush1.msra.mxu0 0.0
      %645 = vmatprep.subr.mxu0 0.0
      %646 = vmatpush1.msra.mxu0 0.0
      %647 = vmatprep.subr.mxu0 0.0
      %648 = vmatpush1.msra.mxu0 0.0
      %649 = vmatprep.mubr.f32.mxu0 0.0
      %650 = vmatmul.mubr.f32.gmra.mrb[0].mxu0 %v583
      %v651 = vpop.f32.mrb[0].mxu0
      %v652 = vadd.f32 0.0, %v651
      %v653 = vpop.f32.mrb[0].mxu0
      %654 = vdwg.mxu0
      %v655 = vsub.f32 0.0, %v652
      %v656 = vmul.f32 %v655, 1.442695
      %v657 = vpow.pop %v656
      %v658 = vsub.f32 %v522, %v652
      %v659 = vmul.f32 %v658, 1.442695
      %v660 = vpow.pop %v659
      %v661 = vmul.f32 %v652, 1.442695
      %v662 = vpow.pop %v661
      %v663 = vmul.f32 %v578, %v660
      %v664 = vmul.f32 %v580, %v662
      %v665 = vmul.f32 %v543, %v662
      %v666 = vmul.f32 %v507, %v657
      %v667 = vld [vmem:[#allocation2] sm:$0xff]
      %v668 = vld [vmem:[#allocation2 + $0x8] sm:$0xff]
      %v670 = vsel %vm565, %v663, 0
      %v673 = vsel %vm565, %v664, 0
      %675 = vmatprep.subr.mxu0 0.0
      %676 = vmatpush1.xpose.msra.mxu0 %v673
      %677 = vmatprep.subr.mxu0 0.0
      %678 = vmatpush1.xpose.msra.mxu0 0.0
      %679 = vmatprep.subr.mxu0 0.0
      %680 = vmatpush1.xpose.msra.mxu0 0.0
      %681 = vmatprep.subr.mxu0 0.0
      %682 = vmatpush1.xpose.msra.mxu0 0.0
      %683 = vmatprep.subr.mxu0 0.0
      %684 = vmatpush1.xpose.msra.mxu0 0.0
      %685 = vmatprep.subr.mxu0 0.0
      %686 = vmatpush1.xpose.msra.mxu0 0.0
      %687 = vmatprep.subr.mxu0 0.0
      %688 = vmatpush1.xpose.msra.mxu0 0.0
      %689 = vmatprep.subr.mxu0 0.0
      %690 = vmatpush1.xpose.msra.mxu0 0.0
      %691 = vmatprep.subr.mxu0 0.0
      %692 = vmatpush1.xpose.msra.mxu0 0.0
      %693 = vmatprep.subr.mxu0 0.0
      %694 = vmatpush1.xpose.msra.mxu0 0.0
      %695 = vmatprep.subr.mxu0 0.0
      %696 = vmatpush1.xpose.msra.mxu0 0.0
      %697 = vmatprep.subr.mxu0 0.0
      %698 = vmatpush1.xpose.msra.mxu0 0.0
      %699 = vmatprep.subr.mxu0 0.0
      %700 = vmatpush1.xpose.msra.mxu0 0.0
      %701 = vmatprep.subr.mxu0 0.0
      %702 = vmatpush1.xpose.msra.mxu0 0.0
      %703 = vmatprep.subr.mxu0 0.0
      %704 = vmatpush1.xpose.msra.mxu0 0.0
      %705 = vmatprep.subr.mxu0 0.0
      %706 = vmatpush1.xpose.msra.mxu0 0.0
      %707 = vmatprep.subr.mxu0 0.0
      %708 = vmatpush1.xpose.msra.mxu0 0.0
      %709 = vmatprep.subr.mxu0 0.0
      %710 = vmatpush1.xpose.msra.mxu0 0.0
      %711 = vmatprep.subr.mxu0 0.0
      %712 = vmatpush1.xpose.msra.mxu0 0.0
      %713 = vmatprep.subr.mxu0 0.0
      %714 = vmatpush1.xpose.msra.mxu0 0.0
      %715 = vmatprep.subr.mxu0 0.0
      %716 = vmatpush1.xpose.msra.mxu0 0.0
      %717 = vmatprep.subr.mxu0 0.0
      %718 = vmatpush1.xpose.msra.mxu0 0.0
      %719 = vmatprep.subr.mxu0 0.0
      %720 = vmatpush1.xpose.msra.mxu0 0.0
      %721 = vmatprep.subr.mxu0 0.0
      %722 = vmatpush1.xpose.msra.mxu0 0.0
      %723 = vmatprep.subr.mxu0 0.0
      %724 = vmatpush1.xpose.msra.mxu0 0.0
      %725 = vmatprep.subr.mxu0 0.0
      %726 = vmatpush1.xpose.msra.mxu0 0.0
      %727 = vmatprep.subr.mxu0 0.0
      %728 = vmatpush1.xpose.msra.mxu0 0.0
      %729 = vmatprep.subr.mxu0 0.0
      %730 = vmatpush1.xpose.msra.mxu0 0.0
      %731 = vmatprep.subr.mxu0 0.0
      %732 = vmatpush1.xpose.msra.mxu0 0.0
      %733 = vmatprep.subr.mxu0 0.0
      %734 = vmatpush1.xpose.msra.mxu0 0.0
      %735 = vmatprep.subr.mxu0 0.0
      %736 = vmatpush1.xpose.msra.mxu0 0.0
      %737 = vmatprep.subr.mxu0 0.0
      %738 = vmatpush1.xpose.msra.mxu0 0.0
      %739 = vmatprep.mubr.f32.mxu0 0.0
      %740 = vmatmul.mubr.f32.gmra.mrb[0].mxu0 %v670
      %v741 = vpop.f32.mrb[0].mxu0
      %v742 = vadd.f32 0.0, %v741
      %v743 = vpop.f32.mrb[0].mxu0
      %744 = vdwg.mxu0
      %v745 = vmul.f32 %v553, %v742
      %v747 = vsel %vm565, %v665, 0
      %749 = vmatprep.subr.mxu0 0.0
      %750 = vmatpush1.xpose.msra.mxu0 %v747
      %751 = vmatprep.subr.mxu0 0.0
      %752 = vmatpush1.xpose.msra.mxu0 0.0
      %753 = vmatprep.subr.mxu0 0.0
      %754 = vmatpush1.xpose.msra.mxu0 0.0
      %755 = vmatprep.subr.mxu0 0.0
      %756 = vmatpush1.xpose.msra.mxu0 0.0
      %757 = vmatprep.subr.mxu0 0.0
      %758 = vmatpush1.xpose.msra.mxu0 0.0
      %759 = vmatprep.subr.mxu0 0.0
      %760 = vmatpush1.xpose.msra.mxu0 0.0
      %761 = vmatprep.subr.mxu0 0.0
      %762 = vmatpush1.xpose.msra.mxu0 0.0
      %763 = vmatprep.subr.mxu0 0.0
      %764 = vmatpush1.xpose.msra.mxu0 0.0
      %765 = vmatprep.subr.mxu0 0.0
      %766 = vmatpush1.xpose.msra.mxu0 0.0
      %767 = vmatprep.subr.mxu0 0.0
      %768 = vmatpush1.xpose.msra.mxu0 0.0
      %769 = vmatprep.subr.mxu0 0.0
      %770 = vmatpush1.xpose.msra.mxu0 0.0
      %771 = vmatprep.subr.mxu0 0.0
      %772 = vmatpush1.xpose.msra.mxu0 0.0
      %773 = vmatprep.subr.mxu0 0.0
      %774 = vmatpush1.xpose.msra.mxu0 0.0
      %775 = vmatprep.subr.mxu0 0.0
      %776 = vmatpush1.xpose.msra.mxu0 0.0
      %777 = vmatprep.subr.mxu0 0.0
      %778 = vmatpush1.xpose.msra.mxu0 0.0
      %779 = vmatprep.subr.mxu0 0.0
      %780 = vmatpush1.xpose.msra.mxu0 0.0
      %781 = vmatprep.subr.mxu0 0.0
      %782 = vmatpush1.xpose.msra.mxu0 0.0
      %783 = vmatprep.subr.mxu0 0.0
      %784 = vmatpush1.xpose.msra.mxu0 0.0
      %785 = vmatprep.subr.mxu0 0.0
      %786 = vmatpush1.xpose.msra.mxu0 0.0
      %787 = vmatprep.subr.mxu0 0.0
      %788 = vmatpush1.xpose.msra.mxu0 0.0
      %789 = vmatprep.subr.mxu0 0.0
      %790 = vmatpush1.xpose.msra.mxu0 0.0
      %791 = vmatprep.subr.mxu0 0.0
      %792 = vmatpush1.xpose.msra.mxu0 0.0
      %793 = vmatprep.subr.mxu0 0.0
      %794 = vmatpush1.xpose.msra.mxu0 0.0
      %795 = vmatprep.subr.mxu0 0.0
      %796 = vmatpush1.xpose.msra.mxu0 0.0
      %797 = vmatprep.subr.mxu0 0.0
      %798 = vmatpush1.xpose.msra.mxu0 0.0
      %799 = vmatprep.subr.mxu0 0.0
      %800 = vmatpush1.xpose.msra.mxu0 0.0
      %801 = vmatprep.subr.mxu0 0.0
      %802 = vmatpush1.xpose.msra.mxu0 0.0
      %803 = vmatprep.subr.mxu0 0.0
      %804 = vmatpush1.xpose.msra.mxu0 0.0
      %805 = vmatprep.subr.mxu0 0.0
      %806 = vmatpush1.xpose.msra.mxu0 0.0
      %807 = vmatprep.subr.mxu0 0.0
      %808 = vmatpush1.xpose.msra.mxu0 0.0
      %809 = vmatprep.subr.mxu0 0.0
      %810 = vmatpush1.xpose.msra.mxu0 0.0
      %811 = vmatprep.subr.mxu0 0.0
      %812 = vmatpush1.xpose.msra.mxu0 0.0
      %813 = vmatprep.mubr.f32.mxu0 0.0
      %814 = vmatmul.mubr.f32.gmra.mrb[0].mxu0 %v670
      %v815 = vpop.f32.mrb[0].mxu0
      %v816 = vadd.f32 0.0, %v815
      %v817 = vpop.f32.mrb[0].mxu0
      %818 = vdwg.mxu0
      %v819 = vmul.f32 %v553, %v816
      %v821 = vsel %vm581, %v819, 0
      %823 = vmatprep.subr.mxu0 0.0
      %824 = vmatpush1.msra.mxu0 %v524
      %825 = vmatprep.subr.mxu0 0.0
      %826 = vmatpush1.msra.mxu0 0.0
      %827 = vmatprep.subr.mxu0 0.0
      %828 = vmatpush1.msra.mxu0 0.0
      %829 = vmatprep.subr.mxu0 0.0
      %830 = vmatpush1.msra.mxu0 0.0
      %831 = vmatprep.subr.mxu0 0.0
      %832 = vmatpush1.msra.mxu0 0.0
      %833 = vmatprep.subr.mxu0 0.0
      %834 = vmatpush1.msra.mxu0 0.0
      %835 = vmatprep.subr.mxu0 0.0
      %836 = vmatpush1.msra.mxu0 0.0
      %837 = vmatprep.subr.mxu0 0.0
      %838 = vmatpush1.msra.mxu0 0.0
      %839 = vmatprep.subr.mxu0 0.0
      %840 = vmatpush1.msra.mxu0 0.0
      %841 = vmatprep.subr.mxu0 0.0
      %842 = vmatpush1.msra.mxu0 0.0
      %843 = vmatprep.subr.mxu0 0.0
      %844 = vmatpush1.msra.mxu0 0.0
      %845 = vmatprep.subr.mxu0 0.0
      %846 = vmatpush1.msra.mxu0 0.0
      %847 = vmatprep.subr.mxu0 0.0
      %848 = vmatpush1.msra.mxu0 0.0
      %849 = vmatprep.subr.mxu0 0.0
      %850 = vmatpush1.msra.mxu0 0.0
      %851 = vmatprep.subr.mxu0 0.0
      %852 = vmatpush1.msra.mxu0 0.0
      %853 = vmatprep.subr.mxu0 0.0
      %854 = vmatpush1.msra.mxu0 0.0
      %855 = vmatprep.subr.mxu0 0.0
      %856 = vmatpush1.msra.mxu0 0.0
      %857 = vmatprep.subr.mxu0 0.0
      %858 = vmatpush1.msra.mxu0 0.0
      %859 = vmatprep.subr.mxu0 0.0
      %860 = vmatpush1.msra.mxu0 0.0
      %861 = vmatprep.subr.mxu0 0.0
      %862 = vmatpush1.msra.mxu0 0.0
      %863 = vmatprep.subr.mxu0 0.0
      %864 = vmatpush1.msra.mxu0 0.0
      %865 = vmatprep.subr.mxu0 0.0
      %866 = vmatpush1.msra.mxu0 0.0
      %867 = vmatprep.subr.mxu0 0.0
      %868 = vmatpush1.msra.mxu0 0.0
      %869 = vmatprep.subr.mxu0 0.0
      %870 = vmatpush1.msra.mxu0 0.0
      %871 = vmatprep.subr.mxu0 0.0
      %872 = vmatpush1.msra.mxu0 0.0
      %873 = vmatprep.subr.mxu0 0.0
      %874 = vmatpush1.msra.mxu0 0.0
      %875 = vmatprep.subr.mxu0 0.0
      %876 = vmatpush1.msra.mxu0 0.0
      %877 = vmatprep.subr.mxu0 0.0
      %878 = vmatpush1.msra.mxu0 0.0
      %879 = vmatprep.subr.mxu0 0.0
      %880 = vmatpush1.msra.mxu0 0.0
      %881 = vmatprep.subr.mxu0 0.0
      %882 = vmatpush1.msra.mxu0 0.0
      %883 = vmatprep.subr.mxu0 0.0
      %884 = vmatpush1.msra.mxu0 0.0
      %885 = vmatprep.subr.mxu0 0.0
      %886 = vmatpush1.msra.mxu0 0.0
      %887 = vmatprep.mubr.f32.mxu0 0.0
      %888 = vmatmul.mubr.f32.gmra.mrb[0].mxu0 %v821
      %v889 = vpop.f32.mrb[0].mxu0
      %v890 = vadd.f32 0.0, %v889
      %v891 = vpop.f32.mrb[0].mxu0
      %892 = vdwg.mxu0
      %893 = vmatprep.subr.mxu0 0.0
      %894 = vmatpush1.msra.mxu0 %v667
      %895 = vmatprep.subr.mxu0 0.0
      %896 = vmatpush1.msra.mxu0 %v668
      %897 = vmatprep.subr.mxu0 0.0
      %898 = vmatpush1.msra.mxu0 0.0
      %899 = vmatprep.subr.mxu0 0.0
      %900 = vmatpush1.msra.mxu0 0.0
      %901 = vmatprep.subr.mxu0 0.0
      %902 = vmatpush1.msra.mxu0 0.0
      %903 = vmatprep.subr.mxu0 0.0
      %904 = vmatpush1.msra.mxu0 0.0
      %905 = vmatprep.subr.mxu0 0.0
      %906 = vmatpush1.msra.mxu0 0.0
      %907 = vmatprep.subr.mxu0 0.0
      %908 = vmatpush1.msra.mxu0 0.0
      %909 = vmatprep.subr.mxu0 0.0
      %910 = vmatpush1.msra.mxu0 0.0
      %911 = vmatprep.subr.mxu0 0.0
      %912 = vmatpush1.msra.mxu0 0.0
      %913 = vmatprep.subr.mxu0 0.0
      %914 = vmatpush1.msra.mxu0 0.0
      %915 = vmatprep.subr.mxu0 0.0
      %916 = vmatpush1.msra.mxu0 0.0
      %917 = vmatprep.subr.mxu0 0.0
      %918 = vmatpush1.msra.mxu0 0.0
      %919 = vmatprep.subr.mxu0 0.0
      %920 = vmatpush1.msra.mxu0 0.0
      %921 = vmatprep.subr.mxu0 0.0
      %922 = vmatpush1.msra.mxu0 0.0
      %923 = vmatprep.subr.mxu0 0.0
      %924 = vmatpush1.msra.mxu0 0.0
      %925 = vmatprep.subr.mxu0 0.0
      %926 = vmatpush1.msra.mxu0 0.0
      %927 = vmatprep.subr.mxu0 0.0
      %928 = vmatpush1.msra.mxu0 0.0
      %929 = vmatprep.subr.mxu0 0.0
      %930 = vmatpush1.msra.mxu0 0.0
      %931 = vmatprep.subr.mxu0 0.0
      %932 = vmatpush1.msra.mxu0 0.0
      %933 = vmatprep.subr.mxu0 0.0
      %934 = vmatpush1.msra.mxu0 0.0
      %935 = vmatprep.subr.mxu0 0.0
      %936 = vmatpush1.msra.mxu0 0.0
      %937 = vmatprep.subr.mxu0 0.0
      %938 = vmatpush1.msra.mxu0 0.0
      %939 = vmatprep.subr.mxu0 0.0
      %940 = vmatpush1.msra.mxu0 0.0
      %941 = vmatprep.subr.mxu0 0.0
      %942 = vmatpush1.msra.mxu0 0.0
      %943 = vmatprep.subr.mxu0 0.0
      %944 = vmatpush1.msra.mxu0 0.0
      %945 = vmatprep.subr.mxu0 0.0
      %946 = vmatpush1.msra.mxu0 0.0
      %947 = vmatprep.subr.mxu0 0.0
      %948 = vmatpush1.msra.mxu0 0.0
      %949 = vmatprep.subr.mxu0 0.0
      %950 = vmatpush1.msra.mxu0 0.0
      %951 = vmatprep.subr.mxu0 0.0
      %952 = vmatpush1.msra.mxu0 0.0
      %953 = vmatprep.subr.mxu0 0.0
      %954 = vmatpush1.msra.mxu0 0.0
      %955 = vmatprep.subr.mxu0 0.0
      %956 = vmatpush1.msra.mxu0 0.0
      %957 = vmatprep.mubr.f32.mxu0 0.0
      %958 = vmatmul.mubr.f32.gmra.mrb[0].mxu0 %v670
      %v959 = vpop.f32.mrb[0].mxu0
      %v960 = vadd.f32 %v890, %v959
      %v961 = vpop.f32.mrb[0].mxu0
      %962 = vdwg.mxu0
      %v963 = vadd.f32 %v556, %v745
      %v965 = vsel %vm581, %v745, 0
      %967 = vmatprep.subr.mxu0 0.0
      %968 = vmatpush1.msra.mxu0 %v745
      %969 = vmatprep.subr.mxu0 0.0
      %970 = vmatpush1.msra.mxu0 0.0
      %971 = vmatprep.subr.mxu0 0.0
      %972 = vmatpush1.msra.mxu0 0.0
      %973 = vmatprep.subr.mxu0 0.0
      %974 = vmatpush1.msra.mxu0 0.0
      %975 = vmatprep.subr.mxu0 0.0
      %976 = vmatpush1.msra.mxu0 0.0
      %977 = vmatprep.subr.mxu0 0.0
      %978 = vmatpush1.msra.mxu0 0.0
      %979 = vmatprep.subr.mxu0 0.0
      %980 = vmatpush1.msra.mxu0 0.0
      %981 = vmatprep.subr.mxu0 0.0
      %982 = vmatpush1.msra.mxu0 0.0
      %983 = vmatprep.subr.mxu0 0.0
      %984 = vmatpush1.msra.mxu0 0.0
      %985 = vmatprep.subr.mxu0 0.0
      %986 = vmatpush1.msra.mxu0 0.0
      %987 = vmatprep.subr.mxu0 0.0
      %988 = vmatpush1.msra.mxu0 0.0
      %989 = vmatprep.subr.mxu0 0.0
      %990 = vmatpush1.msra.mxu0 0.0
      %991 = vmatprep.subr.mxu0 0.0
      %992 = vmatpush1.msra.mxu0 0.0
      %993 = vmatprep.subr.mxu0 0.0
      %994 = vmatpush1.msra.mxu0 0.0
      %995 = vmatprep.subr.mxu0 0.0
      %996 = vmatpush1.msra.mxu0 0.0
      %997 = vmatprep.subr.mxu0 0.0
      %998 = vmatpush1.msra.mxu0 0.0
      %999 = vmatprep.subr.mxu0 0.0
      %1000 = vmatpush1.msra.mxu0 0.0
      %1001 = vmatprep.subr.mxu0 0.0
      %1002 = vmatpush1.msra.mxu0 0.0
      %1003 = vmatprep.subr.mxu0 0.0
      %1004 = vmatpush1.msra.mxu0 0.0
      %1005 = vmatprep.subr.mxu0 0.0
      %1006 = vmatpush1.msra.mxu0 0.0
      %1007 = vmatprep.subr.mxu0 0.0
      %1008 = vmatpush1.msra.mxu0 0.0
      %1009 = vmatprep.subr.mxu0 0.0
      %1010 = vmatpush1.msra.mxu0 0.0
      %1011 = vmatprep.subr.mxu0 0.0
      %1012 = vmatpush1.msra.mxu0 0.0
      %1013 = vmatprep.subr.mxu0 0.0
      %1014 = vmatpush1.msra.mxu0 0.0
      %1015 = vmatprep.subr.mxu0 0.0
      %1016 = vmatpush1.msra.mxu0 0.0
      %1017 = vmatprep.subr.mxu0 0.0
      %1018 = vmatpush1.msra.mxu0 0.0
      %1019 = vmatprep.subr.mxu0 0.0
      %1020 = vmatpush1.msra.mxu0 0.0
      %1021 = vmatprep.subr.mxu0 0.0
      %1022 = vmatpush1.msra.mxu0 0.0
      %1023 = vmatprep.subr.mxu0 0.0
      %1024 = vmatpush1.msra.mxu0 0.0
      %1025 = vmatprep.subr.mxu0 0.0
      %1026 = vmatpush1.msra.mxu0 0.0
      %1027 = vmatprep.subr.mxu0 0.0
      %1028 = vmatpush1.msra.mxu0 0.0
      %1029 = vmatprep.subr.mxu0 0.0
      %1030 = vmatpush1.msra.mxu0 0.0
      %1031 = vmatprep.mubr.f32.mxu0 0.0
      %1032 = vmatmul.mubr.f32.gmra.mrb[0].mxu0 %v965
      %v1033 = vpop.f32.mrb[0].mxu0
      %v1034 = vadd.f32 0.0, %v1033
      %v1035 = vpop.f32.mrb[0].mxu0
      %1036 = vdwg.mxu0
      %v1038 = vsel %vm581, %v963, 0
      %1040 = vmatprep.subr.mxu0 0.0
      %1041 = vmatpush1.msra.mxu0 %v1034
      %1042 = vmatprep.subr.mxu0 0.0
      %1043 = vmatpush1.msra.mxu0 0.0
      %1044 = vmatprep.subr.mxu0 0.0
      %1045 = vmatpush1.msra.mxu0 0.0
      %1046 = vmatprep.subr.mxu0 0.0
      %1047 = vmatpush1.msra.mxu0 0.0
      %1048 = vmatprep.subr.mxu0 0.0
      %1049 = vmatpush1.msra.mxu0 0.0
      %1050 = vmatprep.subr.mxu0 0.0
      %1051 = vmatpush1.msra.mxu0 0.0
      %1052 = vmatprep.subr.mxu0 0.0
      %1053 = vmatpush1.msra.mxu0 0.0
      %1054 = vmatprep.subr.mxu0 0.0
      %1055 = vmatpush1.msra.mxu0 0.0
      %1056 = vmatprep.subr.mxu0 0.0
      %1057 = vmatpush1.msra.mxu0 0.0
      %1058 = vmatprep.subr.mxu0 0.0
      %1059 = vmatpush1.msra.mxu0 0.0
      %1060 = vmatprep.subr.mxu0 0.0
      %1061 = vmatpush1.msra.mxu0 0.0
      %1062 = vmatprep.subr.mxu0 0.0
      %1063 = vmatpush1.msra.mxu0 0.0
      %1064 = vmatprep.subr.mxu0 0.0
      %1065 = vmatpush1.msra.mxu0 0.0
      %1066 = vmatprep.subr.mxu0 0.0
      %1067 = vmatpush1.msra.mxu0 0.0
      %1068 = vmatprep.subr.mxu0 0.0
      %1069 = vmatpush1.msra.mxu0 0.0
      %1070 = vmatprep.subr.mxu0 0.0
      %1071 = vmatpush1.msra.mxu0 0.0
      %1072 = vmatprep.subr.mxu0 0.0
      %1073 = vmatpush1.msra.mxu0 0.0
      %1074 = vmatprep.subr.mxu0 0.0
      %1075 = vmatpush1.msra.mxu0 0.0
      %1076 = vmatprep.subr.mxu0 0.0
      %1077 = vmatpush1.msra.mxu0 0.0
      %1078 = vmatprep.subr.mxu0 0.0
      %1079 = vmatpush1.msra.mxu0 0.0
      %1080 = vmatprep.subr.mxu0 0.0
      %1081 = vmatpush1.msra.mxu0 0.0
      %1082 = vmatprep.subr.mxu0 0.0
      %1083 = vmatpush1.msra.mxu0 0.0
      %1084 = vmatprep.subr.mxu0 0.0
      %1085 = vmatpush1.msra.mxu0 0.0
      %1086 = vmatprep.subr.mxu0 0.0
      %1087 = vmatpush1.msra.mxu0 0.0
      %1088 = vmatprep.subr.mxu0 0.0
      %1089 = vmatpush1.msra.mxu0 0.0
      %1090 = vmatprep.subr.mxu0 0.0
      %1091 = vmatpush1.msra.mxu0 0.0
      %1092 = vmatprep.subr.mxu0 0.0
      %1093 = vmatpush1.msra.mxu0 0.0
      %1094 = vmatprep.subr.mxu0 0.0
      %1095 = vmatpush1.msra.mxu0 0.0
      %1096 = vmatprep.subr.mxu0 0.0
      %1097 = vmatpush1.msra.mxu0 0.0
      %1098 = vmatprep.subr.mxu0 0.0
      %1099 = vmatpush1.msra.mxu0 0.0
      %1100 = vmatprep.subr.mxu0 0.0
      %1101 = vmatpush1.msra.mxu0 0.0
      %1102 = vmatprep.subr.mxu0 0.0
      %1103 = vmatpush1.msra.mxu0 0.0
      %1104 = vmatprep.mubr.f32.mxu0 0.0
      %1105 = vmatmul.mubr.f32.gmra.mrb[0].mxu0 %v1038
      %v1106 = vpop.f32.mrb[0].mxu0
      %v1107 = vadd.f32 0.0, %v1106
      %v1108 = vpop.f32.mrb[0].mxu0
      %1109 = vdwg.mxu0
      %v1110 = vadd.f32 %v963, %v1107
      %v1112 = vsel %vm581, %v1034, 0
      %1114 = vmatprep.subr.mxu0 0.0
      %1115 = vmatpush1.msra.mxu0 %v1034
      %1116 = vmatprep.subr.mxu0 0.0
      %1117 = vmatpush1.msra.mxu0 0.0
      %1118 = vmatprep.subr.mxu0 0.0
      %1119 = vmatpush1.msra.mxu0 0.0
      %1120 = vmatprep.subr.mxu0 0.0
      %1121 = vmatpush1.msra.mxu0 0.0
      %1122 = vmatprep.subr.mxu0 0.0
      %1123 = vmatpush1.msra.mxu0 0.0
      %1124 = vmatprep.subr.mxu0 0.0
      %1125 = vmatpush1.msra.mxu0 0.0
      %1126 = vmatprep.subr.mxu0 0.0
      %1127 = vmatpush1.msra.mxu0 0.0
      %1128 = vmatprep.subr.mxu0 0.0
      %1129 = vmatpush1.msra.mxu0 0.0
      %1130 = vmatprep.subr.mxu0 0.0
      %1131 = vmatpush1.msra.mxu0 0.0
      %1132 = vmatprep.subr.mxu0 0.0
      %1133 = vmatpush1.msra.mxu0 0.0
      %1134 = vmatprep.subr.mxu0 0.0
      %1135 = vmatpush1.msra.mxu0 0.0
      %1136 = vmatprep.subr.mxu0 0.0
      %1137 = vmatpush1.msra.mxu0 0.0
      %1138 = vmatprep.subr.mxu0 0.0
      %1139 = vmatpush1.msra.mxu0 0.0
      %1140 = vmatprep.subr.mxu0 0.0
      %1141 = vmatpush1.msra.mxu0 0.0
      %1142 = vmatprep.subr.mxu0 0.0
      %1143 = vmatpush1.msra.mxu0 0.0
      %1144 = vmatprep.subr.mxu0 0.0
      %1145 = vmatpush1.msra.mxu0 0.0
      %1146 = vmatprep.subr.mxu0 0.0
      %1147 = vmatpush1.msra.mxu0 0.0
      %1148 = vmatprep.subr.mxu0 0.0
      %1149 = vmatpush1.msra.mxu0 0.0
      %1150 = vmatprep.subr.mxu0 0.0
      %1151 = vmatpush1.msra.mxu0 0.0
      %1152 = vmatprep.subr.mxu0 0.0
      %1153 = vmatpush1.msra.mxu0 0.0
      %1154 = vmatprep.subr.mxu0 0.0
      %1155 = vmatpush1.msra.mxu0 0.0
      %1156 = vmatprep.subr.mxu0 0.0
      %1157 = vmatpush1.msra.mxu0 0.0
      %1158 = vmatprep.subr.mxu0 0.0
      %1159 = vmatpush1.msra.mxu0 0.0
      %1160 = vmatprep.subr.mxu0 0.0
      %1161 = vmatpush1.msra.mxu0 0.0
      %1162 = vmatprep.subr.mxu0 0.0
      %1163 = vmatpush1.msra.mxu0 0.0
      %1164 = vmatprep.subr.mxu0 0.0
      %1165 = vmatpush1.msra.mxu0 0.0
      %1166 = vmatprep.subr.mxu0 0.0
      %1167 = vmatpush1.msra.mxu0 0.0
      %1168 = vmatprep.subr.mxu0 0.0
      %1169 = vmatpush1.msra.mxu0 0.0
      %1170 = vmatprep.subr.mxu0 0.0
      %1171 = vmatpush1.msra.mxu0 0.0
      %1172 = vmatprep.subr.mxu0 0.0
      %1173 = vmatpush1.msra.mxu0 0.0
      %1174 = vmatprep.subr.mxu0 0.0
      %1175 = vmatpush1.msra.mxu0 0.0
      %1176 = vmatprep.subr.mxu0 0.0
      %1177 = vmatpush1.msra.mxu0 0.0
      %1178 = vmatprep.mubr.f32.mxu0 0.0
      %1179 = vmatmul.mubr.f32.gmra.mrb[0].mxu0 %v1112
      %v1180 = vpop.f32.mrb[0].mxu0
      %v1181 = vadd.f32 0.0, %v1180
      %v1182 = vpop.f32.mrb[0].mxu0
      %1183 = vdwg.mxu0
      %v1185 = vsel %vm581, %v1110, 0
      %1187 = vmatprep.subr.mxu0 0.0
      %1188 = vmatpush1.msra.mxu0 %v1181
      %1189 = vmatprep.subr.mxu0 0.0
      %1190 = vmatpush1.msra.mxu0 0.0
      %1191 = vmatprep.subr.mxu0 0.0
      %1192 = vmatpush1.msra.mxu0 0.0
      %1193 = vmatprep.subr.mxu0 0.0
      %1194 = vmatpush1.msra.mxu0 0.0
      %1195 = vmatprep.subr.mxu0 0.0
      %1196 = vmatpush1.msra.mxu0 0.0
      %1197 = vmatprep.subr.mxu0 0.0
      %1198 = vmatpush1.msra.mxu0 0.0
      %1199 = vmatprep.subr.mxu0 0.0
      %1200 = vmatpush1.msra.mxu0 0.0
      %1201 = vmatprep.subr.mxu0 0.0
      %1202 = vmatpush1.msra.mxu0 0.0
      %1203 = vmatprep.subr.mxu0 0.0
      %1204 = vmatpush1.msra.mxu0 0.0
      %1205 = vmatprep.subr.mxu0 0.0
      %1206 = vmatpush1.msra.mxu0 0.0
      %1207 = vmatprep.subr.mxu0 0.0
      %1208 = vmatpush1.msra.mxu0 0.0
      %1209 = vmatprep.subr.mxu0 0.0
      %1210 = vmatpush1.msra.mxu0 0.0
      %1211 = vmatprep.subr.mxu0 0.0
      %1212 = vmatpush1.msra.mxu0 0.0
      %1213 = vmatprep.subr.mxu0 0.0
      %1214 = vmatpush1.msra.mxu0 0.0
      %1215 = vmatprep.subr.mxu0 0.0
      %1216 = vmatpush1.msra.mxu0 0.0
      %1217 = vmatprep.subr.mxu0 0.0
      %1218 = vmatpush1.msra.mxu0 0.0
      %1219 = vmatprep.subr.mxu0 0.0
      %1220 = vmatpush1.msra.mxu0 0.0
      %1221 = vmatprep.subr.mxu0 0.0
      %1222 = vmatpush1.msra.mxu0 0.0
      %1223 = vmatprep.subr.mxu0 0.0
      %1224 = vmatpush1.msra.mxu0 0.0
      %1225 = vmatprep.subr.mxu0 0.0
      %1226 = vmatpush1.msra.mxu0 0.0
      %1227 = vmatprep.subr.mxu0 0.0
      %1228 = vmatpush1.msra.mxu0 0.0
      %1229 = vmatprep.subr.mxu0 0.0
      %1230 = vmatpush1.msra.mxu0 0.0
      %1231 = vmatprep.subr.mxu0 0.0
      %1232 = vmatpush1.msra.mxu0 0.0
      %1233 = vmatprep.subr.mxu0 0.0
      %1234 = vmatpush1.msra.mxu0 0.0
      %1235 = vmatprep.subr.mxu0 0.0
      %1236 = vmatpush1.msra.mxu0 0.0
      %1237 = vmatprep.subr.mxu0 0.0
      %1238 = vmatpush1.msra.mxu0 0.0
      %1239 = vmatprep.subr.mxu0 0.0
      %1240 = vmatpush1.msra.mxu0 0.0
      %1241 = vmatprep.subr.mxu0 0.0
      %1242 = vmatpush1.msra.mxu0 0.0
      %1243 = vmatprep.subr.mxu0 0.0
      %1244 = vmatpush1.msra.mxu0 0.0
      %1245 = vmatprep.subr.mxu0 0.0
      %1246 = vmatpush1.msra.mxu0 0.0
      %1247 = vmatprep.subr.mxu0 0.0
      %1248 = vmatpush1.msra.mxu0 0.0
      %1249 = vmatprep.subr.mxu0 0.0
      %1250 = vmatpush1.msra.mxu0 0.0
      %1251 = vmatprep.mubr.f32.mxu0 0.0
      %1252 = vmatmul.mubr.f32.gmra.mrb[0].mxu0 %v1185
      %v1253 = vpop.f32.mrb[0].mxu0
      %v1254 = vadd.f32 0.0, %v1253
      %v1255 = vpop.f32.mrb[0].mxu0
      %1256 = vdwg.mxu0
      %v1257 = vadd.f32 %v1110, %v1254
      %v1259 = vsel %vm581, %v1257, 0
      %1261 = vmatprep.subr.mxu0 0.0
      %1262 = vmatpush1.msra.mxu0 %v960
      %1263 = vmatprep.subr.mxu0 0.0
      %1264 = vmatpush1.msra.mxu0 0.0
      %1265 = vmatprep.subr.mxu0 0.0
      %1266 = vmatpush1.msra.mxu0 0.0
      %1267 = vmatprep.subr.mxu0 0.0
      %1268 = vmatpush1.msra.mxu0 0.0
      %1269 = vmatprep.subr.mxu0 0.0
      %1270 = vmatpush1.msra.mxu0 0.0
      %1271 = vmatprep.subr.mxu0 0.0
      %1272 = vmatpush1.msra.mxu0 0.0
      %1273 = vmatprep.subr.mxu0 0.0
      %1274 = vmatpush1.msra.mxu0 0.0
      %1275 = vmatprep.subr.mxu0 0.0
      %1276 = vmatpush1.msra.mxu0 0.0
      %1277 = vmatprep.subr.mxu0 0.0
      %1278 = vmatpush1.msra.mxu0 0.0
      %1279 = vmatprep.subr.mxu0 0.0
      %1280 = vmatpush1.msra.mxu0 0.0
      %1281 = vmatprep.subr.mxu0 0.0
      %1282 = vmatpush1.msra.mxu0 0.0
      %1283 = vmatprep.subr.mxu0 0.0
      %1284 = vmatpush1.msra.mxu0 0.0
      %1285 = vmatprep.subr.mxu0 0.0
      %1286 = vmatpush1.msra.mxu0 0.0
      %1287 = vmatprep.subr.mxu0 0.0
      %1288 = vmatpush1.msra.mxu0 0.0
      %1289 = vmatprep.subr.mxu0 0.0
      %1290 = vmatpush1.msra.mxu0 0.0
      %1291 = vmatprep.subr.mxu0 0.0
      %1292 = vmatpush1.msra.mxu0 0.0
      %1293 = vmatprep.subr.mxu0 0.0
      %1294 = vmatpush1.msra.mxu0 0.0
      %1295 = vmatprep.subr.mxu0 0.0
      %1296 = vmatpush1.msra.mxu0 0.0
      %1297 = vmatprep.subr.mxu0 0.0
      %1298 = vmatpush1.msra.mxu0 0.0
      %1299 = vmatprep.subr.mxu0 0.0
      %1300 = vmatpush1.msra.mxu0 0.0
      %1301 = vmatprep.subr.mxu0 0.0
      %1302 = vmatpush1.msra.mxu0 0.0
      %1303 = vmatprep.subr.mxu0 0.0
      %1304 = vmatpush1.msra.mxu0 0.0
      %1305 = vmatprep.subr.mxu0 0.0
      %1306 = vmatpush1.msra.mxu0 0.0
      %1307 = vmatprep.subr.mxu0 0.0
      %1308 = vmatpush1.msra.mxu0 0.0
      %1309 = vmatprep.subr.mxu0 0.0
      %1310 = vmatpush1.msra.mxu0 0.0
      %1311 = vmatprep.subr.mxu0 0.0
      %1312 = vmatpush1.msra.mxu0 0.0
      %1313 = vmatprep.subr.mxu0 0.0
      %1314 = vmatpush1.msra.mxu0 0.0
      %1315 = vmatprep.subr.mxu0 0.0
      %1316 = vmatpush1.msra.mxu0 0.0
      %1317 = vmatprep.subr.mxu0 0.0
      %1318 = vmatpush1.msra.mxu0 0.0
      %1319 = vmatprep.subr.mxu0 0.0
      %1320 = vmatpush1.msra.mxu0 0.0
      %1321 = vmatprep.subr.mxu0 0.0
      %1322 = vmatpush1.msra.mxu0 0.0
      %1323 = vmatprep.subr.mxu0 0.0
      %1324 = vmatpush1.msra.mxu0 0.0
      %1325 = vmatprep.mubr.f32.mxu0 0.0
      %1326 = vmatmul.mubr.f32.gmra.mrb[0].mxu0 %v1259
      %v1327 = vpop.f32.mrb[0].mxu0
      %v1328 = vadd.f32 0.0, %v1327
      %v1329 = vpop.f32.mrb[0].mxu0
      %1330 = vdwg.mxu0
      %v1332 = vsel %vm565, %v666, 0
      %1334 = vmatprep.subr.mxu0 0.0
      %1335 = vmatpush1.xpose.msra.mxu0 %v673
      %1336 = vmatprep.subr.mxu0 0.0
      %1337 = vmatpush1.xpose.msra.mxu0 0.0
      %1338 = vmatprep.subr.mxu0 0.0
      %1339 = vmatpush1.xpose.msra.mxu0 0.0
      %1340 = vmatprep.subr.mxu0 0.0
      %1341 = vmatpush1.xpose.msra.mxu0 0.0
      %1342 = vmatprep.subr.mxu0 0.0
      %1343 = vmatpush1.xpose.msra.mxu0 0.0
      %1344 = vmatprep.subr.mxu0 0.0
      %1345 = vmatpush1.xpose.msra.mxu0 0.0
      %1346 = vmatprep.subr.mxu0 0.0
      %1347 = vmatpush1.xpose.msra.mxu0 0.0
      %1348 = vmatprep.subr.mxu0 0.0
      %1349 = vmatpush1.xpose.msra.mxu0 0.0
      %1350 = vmatprep.subr.mxu0 0.0
      %1351 = vmatpush1.xpose.msra.mxu0 0.0
      %1352 = vmatprep.subr.mxu0 0.0
      %1353 = vmatpush1.xpose.msra.mxu0 0.0
      %1354 = vmatprep.subr.mxu0 0.0
      %1355 = vmatpush1.xpose.msra.mxu0 0.0
      %1356 = vmatprep.subr.mxu0 0.0
      %1357 = vmatpush1.xpose.msra.mxu0 0.0
      %1358 = vmatprep.subr.mxu0 0.0
      %1359 = vmatpush1.xpose.msra.mxu0 0.0
      %1360 = vmatprep.subr.mxu0 0.0
      %1361 = vmatpush1.xpose.msra.mxu0 0.0
      %1362 = vmatprep.subr.mxu0 0.0
      %1363 = vmatpush1.xpose.msra.mxu0 0.0
      %1364 = vmatprep.subr.mxu0 0.0
      %1365 = vmatpush1.xpose.msra.mxu0 0.0
      %1366 = vmatprep.subr.mxu0 0.0
      %1367 = vmatpush1.xpose.msra.mxu0 0.0
      %1368 = vmatprep.subr.mxu0 0.0
      %1369 = vmatpush1.xpose.msra.mxu0 0.0
      %1370 = vmatprep.subr.mxu0 0.0
      %1371 = vmatpush1.xpose.msra.mxu0 0.0
      %1372 = vmatprep.subr.mxu0 0.0
      %1373 = vmatpush1.xpose.msra.mxu0 0.0
      %1374 = vmatprep.subr.mxu0 0.0
      %1375 = vmatpush1.xpose.msra.mxu0 0.0
      %1376 = vmatprep.subr.mxu0 0.0
      %1377 = vmatpush1.xpose.msra.mxu0 0.0
      %1378 = vmatprep.subr.mxu0 0.0
      %1379 = vmatpush1.xpose.msra.mxu0 0.0
      %1380 = vmatprep.subr.mxu0 0.0
      %1381 = vmatpush1.xpose.msra.mxu0 0.0
      %1382 = vmatprep.subr.mxu0 0.0
      %1383 = vmatpush1.xpose.msra.mxu0 0.0
      %1384 = vmatprep.subr.mxu0 0.0
      %1385 = vmatpush1.xpose.msra.mxu0 0.0
      %1386 = vmatprep.subr.mxu0 0.0
      %1387 = vmatpush1.xpose.msra.mxu0 0.0
      %1388 = vmatprep.subr.mxu0 0.0
      %1389 = vmatpush1.xpose.msra.mxu0 0.0
      %1390 = vmatprep.subr.mxu0 0.0
      %1391 = vmatpush1.xpose.msra.mxu0 0.0
      %1392 = vmatprep.subr.mxu0 0.0
      %1393 = vmatpush1.xpose.msra.mxu0 0.0
      %1394 = vmatprep.subr.mxu0 0.0
      %1395 = vmatpush1.xpose.msra.mxu0 0.0
      %1396 = vmatprep.subr.mxu0 0.0
      %1397 = vmatpush1.xpose.msra.mxu0 0.0
      %1398 = vmatprep.mubr.f32.mxu0 0.0
      %1399 = vmatmul.mubr.f32.gmra.mrb[0].mxu0 %v1332
      %v1400 = vpop.f32.mrb[0].mxu0
      %v1401 = vadd.f32 0.0, %v1400
      %v1402 = vpop.f32.mrb[0].mxu0
      %1403 = vdwg.mxu0
      %v1404 = vmul.f32 %v550, %v1401
      %1405 = vmatprep.subr.mxu0 0.0
      %1406 = vmatpush1.xpose.msra.mxu0 %v747
      %1407 = vmatprep.subr.mxu0 0.0
      %1408 = vmatpush1.xpose.msra.mxu0 0.0
      %1409 = vmatprep.subr.mxu0 0.0
      %1410 = vmatpush1.xpose.msra.mxu0 0.0
      %1411 = vmatprep.subr.mxu0 0.0
      %1412 = vmatpush1.xpose.msra.mxu0 0.0
      %1413 = vmatprep.subr.mxu0 0.0
      %1414 = vmatpush1.xpose.msra.mxu0 0.0
      %1415 = vmatprep.subr.mxu0 0.0
      %1416 = vmatpush1.xpose.msra.mxu0 0.0
      %1417 = vmatprep.subr.mxu0 0.0
      %1418 = vmatpush1.xpose.msra.mxu0 0.0
      %1419 = vmatprep.subr.mxu0 0.0
      %1420 = vmatpush1.xpose.msra.mxu0 0.0
      %1421 = vmatprep.subr.mxu0 0.0
      %1422 = vmatpush1.xpose.msra.mxu0 0.0
      %1423 = vmatprep.subr.mxu0 0.0
      %1424 = vmatpush1.xpose.msra.mxu0 0.0
      %1425 = vmatprep.subr.mxu0 0.0
      %1426 = vmatpush1.xpose.msra.mxu0 0.0
      %1427 = vmatprep.subr.mxu0 0.0
      %1428 = vmatpush1.xpose.msra.mxu0 0.0
      %1429 = vmatprep.subr.mxu0 0.0
      %1430 = vmatpush1.xpose.msra.mxu0 0.0
      %1431 = vmatprep.subr.mxu0 0.0
      %1432 = vmatpush1.xpose.msra.mxu0 0.0
      %1433 = vmatprep.subr.mxu0 0.0
      %1434 = vmatpush1.xpose.msra.mxu0 0.0
      %1435 = vmatprep.subr.mxu0 0.0
      %1436 = vmatpush1.xpose.msra.mxu0 0.0
      %1437 = vmatprep.subr.mxu0 0.0
      %1438 = vmatpush1.xpose.msra.mxu0 0.0
      %1439 = vmatprep.subr.mxu0 0.0
      %1440 = vmatpush1.xpose.msra.mxu0 0.0
      %1441 = vmatprep.subr.mxu0 0.0
      %1442 = vmatpush1.xpose.msra.mxu0 0.0
      %1443 = vmatprep.subr.mxu0 0.0
      %1444 = vmatpush1.xpose.msra.mxu0 0.0
      %1445 = vmatprep.subr.mxu0 0.0
      %1446 = vmatpush1.xpose.msra.mxu0 0.0
      %1447 = vmatprep.subr.mxu0 0.0
      %1448 = vmatpush1.xpose.msra.mxu0 0.0
      %1449 = vmatprep.subr.mxu0 0.0
      %1450 = vmatpush1.xpose.msra.mxu0 0.0
      %1451 = vmatprep.subr.mxu0 0.0
      %1452 = vmatpush1.xpose.msra.mxu0 0.0
      %1453 = vmatprep.subr.mxu0 0.0
      %1454 = vmatpush1.xpose.msra.mxu0 0.0
      %1455 = vmatprep.subr.mxu0 0.0
      %1456 = vmatpush1.xpose.msra.mxu0 0.0
      %1457 = vmatprep.subr.mxu0 0.0
      %1458 = vmatpush1.xpose.msra.mxu0 0.0
      %1459 = vmatprep.subr.mxu0 0.0
      %1460 = vmatpush1.xpose.msra.mxu0 0.0
      %1461 = vmatprep.subr.mxu0 0.0
      %1462 = vmatpush1.xpose.msra.mxu0 0.0
      %1463 = vmatprep.subr.mxu0 0.0
      %1464 = vmatpush1.xpose.msra.mxu0 0.0
      %1465 = vmatprep.subr.mxu0 0.0
      %1466 = vmatpush1.xpose.msra.mxu0 0.0
      %1467 = vmatprep.subr.mxu0 0.0
      %1468 = vmatpush1.xpose.msra.mxu0 0.0
      %1469 = vmatprep.mubr.f32.mxu0 0.0
      %1470 = vmatmul.mubr.f32.gmra.mrb[0].mxu0 %v1332
      %v1471 = vpop.f32.mrb[0].mxu0
      %v1472 = vadd.f32 0.0, %v1471
      %v1473 = vpop.f32.mrb[0].mxu0
      %1474 = vdwg.mxu0
      %v1475 = vmul.f32 %v550, %v1472
      %v1477 = vsel %vm581, %v1404, 0
      %1479 = vmatprep.subr.mxu0 0.0
      %1480 = vmatpush1.msra.mxu0 %v1328
      %1481 = vmatprep.subr.mxu0 0.0
      %1482 = vmatpush1.msra.mxu0 0.0
      %1483 = vmatprep.subr.mxu0 0.0
      %1484 = vmatpush1.msra.mxu0 0.0
      %1485 = vmatprep.subr.mxu0 0.0
      %1486 = vmatpush1.msra.mxu0 0.0
      %1487 = vmatprep.subr.mxu0 0.0
      %1488 = vmatpush1.msra.mxu0 0.0
      %1489 = vmatprep.subr.mxu0 0.0
      %1490 = vmatpush1.msra.mxu0 0.0
      %1491 = vmatprep.subr.mxu0 0.0
      %1492 = vmatpush1.msra.mxu0 0.0
      %1493 = vmatprep.subr.mxu0 0.0
      %1494 = vmatpush1.msra.mxu0 0.0
      %1495 = vmatprep.subr.mxu0 0.0
      %1496 = vmatpush1.msra.mxu0 0.0
      %1497 = vmatprep.subr.mxu0 0.0
      %1498 = vmatpush1.msra.mxu0 0.0
      %1499 = vmatprep.subr.mxu0 0.0
      %1500 = vmatpush1.msra.mxu0 0.0
      %1501 = vmatprep.subr.mxu0 0.0
      %1502 = vmatpush1.msra.mxu0 0.0
      %1503 = vmatprep.subr.mxu0 0.0
      %1504 = vmatpush1.msra.mxu0 0.0
      %1505 = vmatprep.subr.mxu0 0.0
      %1506 = vmatpush1.msra.mxu0 0.0
      %1507 = vmatprep.subr.mxu0 0.0
      %1508 = vmatpush1.msra.mxu0 0.0
      %1509 = vmatprep.subr.mxu0 0.0
      %1510 = vmatpush1.msra.mxu0 0.0
      %1511 = vmatprep.subr.mxu0 0.0
      %1512 = vmatpush1.msra.mxu0 0.0
      %1513 = vmatprep.subr.mxu0 0.0
      %1514 = vmatpush1.msra.mxu0 0.0
      %1515 = vmatprep.subr.mxu0 0.0
      %1516 = vmatpush1.msra.mxu0 0.0
      %1517 = vmatprep.subr.mxu0 0.0
      %1518 = vmatpush1.msra.mxu0 0.0
      %1519 = vmatprep.subr.mxu0 0.0
      %1520 = vmatpush1.msra.mxu0 0.0
      %1521 = vmatprep.subr.mxu0 0.0
      %1522 = vmatpush1.msra.mxu0 0.0
      %1523 = vmatprep.subr.mxu0 0.0
      %1524 = vmatpush1.msra.mxu0 0.0
      %1525 = vmatprep.subr.mxu0 0.0
      %1526 = vmatpush1.msra.mxu0 0.0
      %1527 = vmatprep.subr.mxu0 0.0
      %1528 = vmatpush1.msra.mxu0 0.0
      %1529 = vmatprep.subr.mxu0 0.0
      %1530 = vmatpush1.msra.mxu0 0.0
      %1531 = vmatprep.subr.mxu0 0.0
      %1532 = vmatpush1.msra.mxu0 0.0
      %1533 = vmatprep.subr.mxu0 0.0
      %1534 = vmatpush1.msra.mxu0 0.0
      %1535 = vmatprep.subr.mxu0 0.0
      %1536 = vmatpush1.msra.mxu0 0.0
      %1537 = vmatprep.subr.mxu0 0.0
      %1538 = vmatpush1.msra.mxu0 0.0
      %1539 = vmatprep.subr.mxu0 0.0
      %1540 = vmatpush1.msra.mxu0 0.0
      %1541 = vmatprep.subr.mxu0 0.0
      %1542 = vmatpush1.msra.mxu0 0.0
      %1543 = vmatprep.mubr.f32.mxu0 0.0
      %1544 = vmatmul.mubr.f32.gmra.mrb[0].mxu0 %v1477
      %v1545 = vpop.f32.mrb[0].mxu0
      %v1546 = vadd.f32 0.0, %v1545
      %v1547 = vpop.f32.mrb[0].mxu0
      %1548 = vdwg.mxu0
      %1549 = vmatprep.subr.mxu0 0.0
      %1550 = vmatpush1.msra.mxu0 %v667
      %1551 = vmatprep.subr.mxu0 0.0
      %1552 = vmatpush1.msra.mxu0 %v668
      %1553 = vmatprep.subr.mxu0 0.0
      %1554 = vmatpush1.msra.mxu0 0.0
      %1555 = vmatprep.subr.mxu0 0.0
      %1556 = vmatpush1.msra.mxu0 0.0
      %1557 = vmatprep.subr.mxu0 0.0
      %1558 = vmatpush1.msra.mxu0 0.0
      %1559 = vmatprep.subr.mxu0 0.0
      %1560 = vmatpush1.msra.mxu0 0.0
      %1561 = vmatprep.subr.mxu0 0.0
      %1562 = vmatpush1.msra.mxu0 0.0
      %1563 = vmatprep.subr.mxu0 0.0
      %1564 = vmatpush1.msra.mxu0 0.0
      %1565 = vmatprep.subr.mxu0 0.0
      %1566 = vmatpush1.msra.mxu0 0.0
      %1567 = vmatprep.subr.mxu0 0.0
      %1568 = vmatpush1.msra.mxu0 0.0
      %1569 = vmatprep.subr.mxu0 0.0
      %1570 = vmatpush1.msra.mxu0 0.0
      %1571 = vmatprep.subr.mxu0 0.0
      %1572 = vmatpush1.msra.mxu0 0.0
      %1573 = vmatprep.subr.mxu0 0.0
      %1574 = vmatpush1.msra.mxu0 0.0
      %1575 = vmatprep.subr.mxu0 0.0
      %1576 = vmatpush1.msra.mxu0 0.0
      %1577 = vmatprep.subr.mxu0 0.0
      %1578 = vmatpush1.msra.mxu0 0.0
      %1579 = vmatprep.subr.mxu0 0.0
      %1580 = vmatpush1.msra.mxu0 0.0
      %1581 = vmatprep.subr.mxu0 0.0
      %1582 = vmatpush1.msra.mxu0 0.0
      %1583 = vmatprep.subr.mxu0 0.0
      %1584 = vmatpush1.msra.mxu0 0.0
      %1585 = vmatprep.subr.mxu0 0.0
      %1586 = vmatpush1.msra.mxu0 0.0
      %1587 = vmatprep.subr.mxu0 0.0
      %1588 = vmatpush1.msra.mxu0 0.0
      %1589 = vmatprep.subr.mxu0 0.0
      %1590 = vmatpush1.msra.mxu0 0.0
      %1591 = vmatprep.subr.mxu0 0.0
      %1592 = vmatpush1.msra.mxu0 0.0
      %1593 = vmatprep.subr.mxu0 0.0
      %1594 = vmatpush1.msra.mxu0 0.0
      %1595 = vmatprep.subr.mxu0 0.0
      %1596 = vmatpush1.msra.mxu0 0.0
      %1597 = vmatprep.subr.mxu0 0.0
      %1598 = vmatpush1.msra.mxu0 0.0
      %1599 = vmatprep.subr.mxu0 0.0
      %1600 = vmatpush1.msra.mxu0 0.0
      %1601 = vmatprep.subr.mxu0 0.0
      %1602 = vmatpush1.msra.mxu0 0.0
      %1603 = vmatprep.subr.mxu0 0.0
      %1604 = vmatpush1.msra.mxu0 0.0
      %1605 = vmatprep.subr.mxu0 0.0
      %1606 = vmatpush1.msra.mxu0 0.0
      %1607 = vmatprep.subr.mxu0 0.0
      %1608 = vmatpush1.msra.mxu0 0.0
      %1609 = vmatprep.subr.mxu0 0.0
      %1610 = vmatpush1.msra.mxu0 0.0
      %1611 = vmatprep.subr.mxu0 0.0
      %1612 = vmatpush1.msra.mxu0 0.0
      %1613 = vmatprep.mubr.f32.mxu0 0.0
      %1614 = vmatmul.mubr.f32.gmra.mrb[0].mxu0 %v1332
      %v1615 = vpop.f32.mrb[0].mxu0
      %v1616 = vadd.f32 %v1546, %v1615
      %v1617 = vpop.f32.mrb[0].mxu0
      %1618 = vdwg.mxu0
      %v1620 = vsel %vm581, %v1475, 0
      %1622 = vmatprep.subr.mxu0 0.0
      %1623 = vmatpush1.msra.mxu0 %v524
      %1624 = vmatprep.subr.mxu0 0.0
      %1625 = vmatpush1.msra.mxu0 0.0
      %1626 = vmatprep.subr.mxu0 0.0
      %1627 = vmatpush1.msra.mxu0 0.0
      %1628 = vmatprep.subr.mxu0 0.0
      %1629 = vmatpush1.msra.mxu0 0.0
      %1630 = vmatprep.subr.mxu0 0.0
      %1631 = vmatpush1.msra.mxu0 0.0
      %1632 = vmatprep.subr.mxu0 0.0
      %1633 = vmatpush1.msra.mxu0 0.0
      %1634 = vmatprep.subr.mxu0 0.0
      %1635 = vmatpush1.msra.mxu0 0.0
      %1636 = vmatprep.subr.mxu0 0.0
      %1637 = vmatpush1.msra.mxu0 0.0
      %1638 = vmatprep.subr.mxu0 0.0
      %1639 = vmatpush1.msra.mxu0 0.0
      %1640 = vmatprep.subr.mxu0 0.0
      %1641 = vmatpush1.msra.mxu0 0.0
      %1642 = vmatprep.subr.mxu0 0.0
      %1643 = vmatpush1.msra.mxu0 0.0
      %1644 = vmatprep.subr.mxu0 0.0
      %1645 = vmatpush1.msra.mxu0 0.0
      %1646 = vmatprep.subr.mxu0 0.0
      %1647 = vmatpush1.msra.mxu0 0.0
      %1648 = vmatprep.subr.mxu0 0.0
      %1649 = vmatpush1.msra.mxu0 0.0
      %1650 = vmatprep.subr.mxu0 0.0
      %1651 = vmatpush1.msra.mxu0 0.0
      %1652 = vmatprep.subr.mxu0 0.0
      %1653 = vmatpush1.msra.mxu0 0.0
      %1654 = vmatprep.subr.mxu0 0.0
      %1655 = vmatpush1.msra.mxu0 0.0
      %1656 = vmatprep.subr.mxu0 0.0
      %1657 = vmatpush1.msra.mxu0 0.0
      %1658 = vmatprep.subr.mxu0 0.0
      %1659 = vmatpush1.msra.mxu0 0.0
      %1660 = vmatprep.subr.mxu0 0.0
      %1661 = vmatpush1.msra.mxu0 0.0
      %1662 = vmatprep.subr.mxu0 0.0
      %1663 = vmatpush1.msra.mxu0 0.0
      %1664 = vmatprep.subr.mxu0 0.0
      %1665 = vmatpush1.msra.mxu0 0.0
      %1666 = vmatprep.subr.mxu0 0.0
      %1667 = vmatpush1.msra.mxu0 0.0
      %1668 = vmatprep.subr.mxu0 0.0
      %1669 = vmatpush1.msra.mxu0 0.0
      %1670 = vmatprep.subr.mxu0 0.0
      %1671 = vmatpush1.msra.mxu0 0.0
      %1672 = vmatprep.subr.mxu0 0.0
      %1673 = vmatpush1.msra.mxu0 0.0
      %1674 = vmatprep.subr.mxu0 0.0
      %1675 = vmatpush1.msra.mxu0 0.0
      %1676 = vmatprep.subr.mxu0 0.0
      %1677 = vmatpush1.msra.mxu0 0.0
      %1678 = vmatprep.subr.mxu0 0.0
      %1679 = vmatpush1.msra.mxu0 0.0
      %1680 = vmatprep.subr.mxu0 0.0
      %1681 = vmatpush1.msra.mxu0 0.0
      %1682 = vmatprep.subr.mxu0 0.0
      %1683 = vmatpush1.msra.mxu0 0.0
      %1684 = vmatprep.subr.mxu0 0.0
      %1685 = vmatpush1.msra.mxu0 0.0
      %1686 = vmatprep.mubr.f32.mxu0 0.0
      %1687 = vmatmul.mubr.f32.gmra.mrb[0].mxu0 %v1620
      %v1688 = vpop.f32.mrb[0].mxu0
      %v1689 = vadd.f32 0.0, %v1688
      %v1690 = vpop.f32.mrb[0].mxu0
      %1691 = vdwg.mxu0
      %v1692 = vadd.f32 %v1616, %v1689
      %v1693 = vlaneseq
      %v1694 = vshrl.u32 %v1693, 7
      %v1695 = vsub.s32 7, %v1694
      %v1696 = vrot.slane %v657, %v1695
      %v1697 = vmul.f32 %v664, %v1696
      %v1698 = vmul.f32 %v665, %v1696
      %v1699 = vmul.f32 %v562, %v1696
      %v1700 = vmul.f32 %v563, %v1696
      %1701 = vxpose.xlu0.b32.start [1/16] %v1697, 128
      %1702 = vxpose.xlu0.b32.cont [2/16] 0.0, 128
      %1703 = vxpose.xlu0.b32.cont [3/16] 0.0, 128
      %1704 = vxpose.xlu0.b32.cont [4/16] 0.0, 128
      %1705 = vxpose.xlu0.b32.cont [5/16] 0.0, 128
      %1706 = vxpose.xlu0.b32.cont [6/16] 0.0, 128
      %1707 = vxpose.xlu0.b32.cont [7/16] 0.0, 128
      %1708 = vxpose.xlu0.b32.cont [8/16] 0.0, 128
      %1709 = vxpose.xlu0.b32.cont [9/16] 0.0, 128
      %1710 = vxpose.xlu0.b32.cont [10/16] 0.0, 128
      %1711 = vxpose.xlu0.b32.cont [11/16] 0.0, 128
      %1712 = vxpose.xlu0.b32.cont [12/16] 0.0, 128
      %1713 = vxpose.xlu0.b32.cont [13/16] 0.0, 128
      %1714 = vxpose.xlu0.b32.cont [14/16] 0.0, 128
      %1715 = vxpose.xlu0.b32.cont [15/16] 0.0, 128
      %1716 = vxpose.xlu0.b32.end [16/16] 0.0, 128
      %v1717 = vpop.trf.xlu0
      %v1718 = vpop.trf.xlu0
      %v1719 = vpop.trf.xlu0
      %v1720 = vpop.trf.xlu0
      %v1721 = vpop.trf.xlu0
      %v1722 = vpop.trf.xlu0
      %v1723 = vpop.trf.xlu0
      %v1724 = vpop.trf.xlu0
      %v1725 = vpop.trf.xlu0
      %v1726 = vpop.trf.xlu0
      %v1727 = vpop.trf.xlu0
      %v1728 = vpop.trf.xlu0
      %v1729 = vpop.trf.xlu0
      %v1730 = vpop.trf.xlu0
      %v1731 = vpop.trf.xlu0
      %v1732 = vpop.trf.xlu0
      %v1734 = vsel %vm581, %v1717, 0
      %v1737 = vsel %vm581, %v1718, 0
      %1739 = vmatprep.subr.mxu0 0.0
      %1740 = vmatpush1.msra.mxu0 %v1328
      %1741 = vmatprep.subr.mxu0 0.0
      %1742 = vmatpush1.msra.mxu0 0.0
      %1743 = vmatprep.subr.mxu0 0.0
      %1744 = vmatpush1.msra.mxu0 0.0
      %1745 = vmatprep.subr.mxu0 0.0
      %1746 = vmatpush1.msra.mxu0 0.0
      %1747 = vmatprep.subr.mxu0 0.0
      %1748 = vmatpush1.msra.mxu0 0.0
      %1749 = vmatprep.subr.mxu0 0.0
      %1750 = vmatpush1.msra.mxu0 0.0
      %1751 = vmatprep.subr.mxu0 0.0
      %1752 = vmatpush1.msra.mxu0 0.0
      %1753 = vmatprep.subr.mxu0 0.0
      %1754 = vmatpush1.msra.mxu0 0.0
      %1755 = vmatprep.subr.mxu0 0.0
      %1756 = vmatpush1.msra.mxu0 0.0
      %1757 = vmatprep.subr.mxu0 0.0
      %1758 = vmatpush1.msra.mxu0 0.0
      %1759 = vmatprep.subr.mxu0 0.0
      %1760 = vmatpush1.msra.mxu0 0.0
      %1761 = vmatprep.subr.mxu0 0.0
      %1762 = vmatpush1.msra.mxu0 0.0
      %1763 = vmatprep.subr.mxu0 0.0
      %1764 = vmatpush1.msra.mxu0 0.0
      %1765 = vmatprep.subr.mxu0 0.0
      %1766 = vmatpush1.msra.mxu0 0.0
      %1767 = vmatprep.subr.mxu0 0.0
      %1768 = vmatpush1.msra.mxu0 0.0
      %1769 = vmatprep.subr.mxu0 0.0
      %1770 = vmatpush1.msra.mxu0 0.0
      %1771 = vmatprep.subr.mxu0 0.0
      %1772 = vmatpush1.msra.mxu0 0.0
      %1773 = vmatprep.subr.mxu0 0.0
      %1774 = vmatpush1.msra.mxu0 0.0
      %1775 = vmatprep.subr.mxu0 0.0
      %1776 = vmatpush1.msra.mxu0 0.0
      %1777 = vmatprep.subr.mxu0 0.0
      %1778 = vmatpush1.msra.mxu0 0.0
      %1779 = vmatprep.subr.mxu0 0.0
      %1780 = vmatpush1.msra.mxu0 0.0
      %1781 = vmatprep.subr.mxu0 0.0
      %1782 = vmatpush1.msra.mxu0 0.0
      %1783 = vmatprep.subr.mxu0 0.0
      %1784 = vmatpush1.msra.mxu0 0.0
      %1785 = vmatprep.subr.mxu0 0.0
      %1786 = vmatpush1.msra.mxu0 0.0
      %1787 = vmatprep.subr.mxu0 0.0
      %1788 = vmatpush1.msra.mxu0 0.0
      %1789 = vmatprep.subr.mxu0 0.0
      %1790 = vmatpush1.msra.mxu0 0.0
      %1791 = vmatprep.subr.mxu0 0.0
      %1792 = vmatpush1.msra.mxu0 0.0
      %1793 = vmatprep.subr.mxu0 0.0
      %1794 = vmatpush1.msra.mxu0 0.0
      %1795 = vmatprep.subr.mxu0 0.0
      %1796 = vmatpush1.msra.mxu0 0.0
      %1797 = vmatprep.subr.mxu0 0.0
      %1798 = vmatpush1.msra.mxu0 0.0
      %1799 = vmatprep.subr.mxu0 0.0
      %1800 = vmatpush1.msra.mxu0 0.0
      %1801 = vmatprep.subr.mxu0 0.0
      %1802 = vmatpush1.msra.mxu0 0.0
      %1803 = vmatprep.mubr.f32.mxu0 0.0
      %1804 = vmatmul.mubr.f32.gmra.mrb[0].mxu0 %v1734
      %v1805 = vpop.f32.mrb[0].mxu0
      %v1806 = vadd.f32 0.0, %v1805
      %v1807 = vpop.f32.mrb[0].mxu0
      %1808 = vmatprep.mubr.f32.mxu0 0.0
      %1809 = vmatmul.mubr.f32.gmra.mrb[0].mxu0 %v1737
      %v1810 = vpop.f32.mrb[0].mxu0
      %v1811 = vadd.f32 0.0, %v1810
      %v1812 = vpop.f32.mrb[0].mxu0
      %1813 = vdwg.mxu0
      %v1815 = vsel %vm565, %v1699, 0
      %v1818 = vsel %vm565, %v1700, 0
      %1820 = vmatprep.subr.mxu0 0.0
      %1821 = vmatpush1.msra.mxu0 %v667
      %1822 = vmatprep.subr.mxu0 0.0
      %1823 = vmatpush1.msra.mxu0 %v668
      %1824 = vmatprep.subr.mxu0 0.0
      %1825 = vmatpush1.msra.mxu0 0.0
      %1826 = vmatprep.subr.mxu0 0.0
      %1827 = vmatpush1.msra.mxu0 0.0
      %1828 = vmatprep.subr.mxu0 0.0
      %1829 = vmatpush1.msra.mxu0 0.0
      %1830 = vmatprep.subr.mxu0 0.0
      %1831 = vmatpush1.msra.mxu0 0.0
      %1832 = vmatprep.subr.mxu0 0.0
      %1833 = vmatpush1.msra.mxu0 0.0
      %1834 = vmatprep.subr.mxu0 0.0
      %1835 = vmatpush1.msra.mxu0 0.0
      %1836 = vmatprep.subr.mxu0 0.0
      %1837 = vmatpush1.msra.mxu0 0.0
      %1838 = vmatprep.subr.mxu0 0.0
      %1839 = vmatpush1.msra.mxu0 0.0
      %1840 = vmatprep.subr.mxu0 0.0
      %1841 = vmatpush1.msra.mxu0 0.0
      %1842 = vmatprep.subr.mxu0 0.0
      %1843 = vmatpush1.msra.mxu0 0.0
      %1844 = vmatprep.subr.mxu0 0.0
      %1845 = vmatpush1.msra.mxu0 0.0
      %1846 = vmatprep.subr.mxu0 0.0
      %1847 = vmatpush1.msra.mxu0 0.0
      %1848 = vmatprep.subr.mxu0 0.0
      %1849 = vmatpush1.msra.mxu0 0.0
      %1850 = vmatprep.subr.mxu0 0.0
      %1851 = vmatpush1.msra.mxu0 0.0
      %1852 = vmatprep.subr.mxu0 0.0
      %1853 = vmatpush1.msra.mxu0 0.0
      %1854 = vmatprep.subr.mxu0 0.0
      %1855 = vmatpush1.msra.mxu0 0.0
      %1856 = vmatprep.subr.mxu0 0.0
      %1857 = vmatpush1.msra.mxu0 0.0
      %1858 = vmatprep.subr.mxu0 0.0
      %1859 = vmatpush1.msra.mxu0 0.0
      %1860 = vmatprep.subr.mxu0 0.0
      %1861 = vmatpush1.msra.mxu0 0.0
      %1862 = vmatprep.subr.mxu0 0.0
      %1863 = vmatpush1.msra.mxu0 0.0
      %1864 = vmatprep.subr.mxu0 0.0
      %1865 = vmatpush1.msra.mxu0 0.0
      %1866 = vmatprep.subr.mxu0 0.0
      %1867 = vmatpush1.msra.mxu0 0.0
      %1868 = vmatprep.subr.mxu0 0.0
      %1869 = vmatpush1.msra.mxu0 0.0
      %1870 = vmatprep.subr.mxu0 0.0
      %1871 = vmatpush1.msra.mxu0 0.0
      %1872 = vmatprep.subr.mxu0 0.0
      %1873 = vmatpush1.msra.mxu0 0.0
      %1874 = vmatprep.subr.mxu0 0.0
      %1875 = vmatpush1.msra.mxu0 0.0
      %1876 = vmatprep.subr.mxu0 0.0
      %1877 = vmatpush1.msra.mxu0 0.0
      %1878 = vmatprep.subr.mxu0 0.0
      %1879 = vmatpush1.msra.mxu0 0.0
      %1880 = vmatprep.subr.mxu0 0.0
      %1881 = vmatpush1.msra.mxu0 0.0
      %1882 = vmatprep.subr.mxu0 0.0
      %1883 = vmatpush1.msra.mxu0 0.0
      %1884 = vmatprep.mubr.f32.mxu0 0.0
      %1885 = vmatmul.mubr.f32.gmra.mrb[0].mxu0 %v1815
      %v1886 = vpop.f32.mrb[0].mxu0
      %v1887 = vadd.f32 %v1806, %v1886
      %v1888 = vpop.f32.mrb[0].mxu0
      %1889 = vmatprep.mubr.f32.mxu0 0.0
      %1890 = vmatmul.mubr.f32.gmra.mrb[0].mxu0 %v1818
      %v1891 = vpop.f32.mrb[0].mxu0
      %v1892 = vadd.f32 %v1811, %v1891
      %v1893 = vpop.f32.mrb[0].mxu0
      %1894 = vdwg.mxu0
      %1895 = vxpose.xlu0.b32.start [1/16] %v1698, 128
      %1896 = vxpose.xlu0.b32.cont [2/16] 0.0, 128
      %1897 = vxpose.xlu0.b32.cont [3/16] 0.0, 128
      %1898 = vxpose.xlu0.b32.cont [4/16] 0.0, 128
      %1899 = vxpose.xlu0.b32.cont [5/16] 0.0, 128
      %1900 = vxpose.xlu0.b32.cont [6/16] 0.0, 128
      %1901 = vxpose.xlu0.b32.cont [7/16] 0.0, 128
      %1902 = vxpose.xlu0.b32.cont [8/16] 0.0, 128
      %1903 = vxpose.xlu0.b32.cont [9/16] 0.0, 128
      %1904 = vxpose.xlu0.b32.cont [10/16] 0.0, 128
      %1905 = vxpose.xlu0.b32.cont [11/16] 0.0, 128
      %1906 = vxpose.xlu0.b32.cont [12/16] 0.0, 128
      %1907 = vxpose.xlu0.b32.cont [13/16] 0.0, 128
      %1908 = vxpose.xlu0.b32.cont [14/16] 0.0, 128
      %1909 = vxpose.xlu0.b32.cont [15/16] 0.0, 128
      %1910 = vxpose.xlu0.b32.end [16/16] 0.0, 128
      %v1911 = vpop.trf.xlu0
      %v1912 = vpop.trf.xlu0
      %v1913 = vpop.trf.xlu0
      %v1914 = vpop.trf.xlu0
      %v1915 = vpop.trf.xlu0
      %v1916 = vpop.trf.xlu0
      %v1917 = vpop.trf.xlu0
      %v1918 = vpop.trf.xlu0
      %v1919 = vpop.trf.xlu0
      %v1920 = vpop.trf.xlu0
      %v1921 = vpop.trf.xlu0
      %v1922 = vpop.trf.xlu0
      %v1923 = vpop.trf.xlu0
      %v1924 = vpop.trf.xlu0
      %v1925 = vpop.trf.xlu0
      %v1926 = vpop.trf.xlu0
      %v1928 = vsel %vm581, %v1911, 0
      %v1931 = vsel %vm581, %v1912, 0
      %1933 = vmatprep.subr.mxu0 0.0
      %1934 = vmatpush1.msra.mxu0 %v524
      %1935 = vmatprep.subr.mxu0 0.0
      %1936 = vmatpush1.msra.mxu0 0.0
      %1937 = vmatprep.subr.mxu0 0.0
      %1938 = vmatpush1.msra.mxu0 0.0
      %1939 = vmatprep.subr.mxu0 0.0
      %1940 = vmatpush1.msra.mxu0 0.0
      %1941 = vmatprep.subr.mxu0 0.0
      %1942 = vmatpush1.msra.mxu0 0.0
      %1943 = vmatprep.subr.mxu0 0.0
      %1944 = vmatpush1.msra.mxu0 0.0
      %1945 = vmatprep.subr.mxu0 0.0
      %1946 = vmatpush1.msra.mxu0 0.0
      %1947 = vmatprep.subr.mxu0 0.0
      %1948 = vmatpush1.msra.mxu0 0.0
      %1949 = vmatprep.subr.mxu0 0.0
      %1950 = vmatpush1.msra.mxu0 0.0
      %1951 = vmatprep.subr.mxu0 0.0
      %1952 = vmatpush1.msra.mxu0 0.0
      %1953 = vmatprep.subr.mxu0 0.0
      %1954 = vmatpush1.msra.mxu0 0.0
      %1955 = vmatprep.subr.mxu0 0.0
      %1956 = vmatpush1.msra.mxu0 0.0
      %1957 = vmatprep.subr.mxu0 0.0
      %1958 = vmatpush1.msra.mxu0 0.0
      %1959 = vmatprep.subr.mxu0 0.0
      %1960 = vmatpush1.msra.mxu0 0.0
      %1961 = vmatprep.subr.mxu0 0.0
      %1962 = vmatpush1.msra.mxu0 0.0
      %1963 = vmatprep.subr.mxu0 0.0
      %1964 = vmatpush1.msra.mxu0 0.0
      %1965 = vmatprep.subr.mxu0 0.0
      %1966 = vmatpush1.msra.mxu0 0.0
      %1967 = vmatprep.subr.mxu0 0.0
      %1968 = vmatpush1.msra.mxu0 0.0
      %1969 = vmatprep.subr.mxu0 0.0
      %1970 = vmatpush1.msra.mxu0 0.0
      %1971 = vmatprep.subr.mxu0 0.0
      %1972 = vmatpush1.msra.mxu0 0.0
      %1973 = vmatprep.subr.mxu0 0.0
      %1974 = vmatpush1.msra.mxu0 0.0
      %1975 = vmatprep.subr.mxu0 0.0
      %1976 = vmatpush1.msra.mxu0 0.0
      %1977 = vmatprep.subr.mxu0 0.0
      %1978 = vmatpush1.msra.mxu0 0.0
      %1979 = vmatprep.subr.mxu0 0.0
      %1980 = vmatpush1.msra.mxu0 0.0
      %1981 = vmatprep.subr.mxu0 0.0
      %1982 = vmatpush1.msra.mxu0 0.0
      %1983 = vmatprep.subr.mxu0 0.0
      %1984 = vmatpush1.msra.mxu0 0.0
      %1985 = vmatprep.subr.mxu0 0.0
      %1986 = vmatpush1.msra.mxu0 0.0
      %1987 = vmatprep.subr.mxu0 0.0
      %1988 = vmatpush1.msra.mxu0 0.0
      %1989 = vmatprep.subr.mxu0 0.0
      %1990 = vmatpush1.msra.mxu0 0.0
      %1991 = vmatprep.subr.mxu0 0.0
      %1992 = vmatpush1.msra.mxu0 0.0
      %1993 = vmatprep.subr.mxu0 0.0
      %1994 = vmatpush1.msra.mxu0 0.0
      %1995 = vmatprep.subr.mxu0 0.0
      %1996 = vmatpush1.msra.mxu0 0.0
      %1997 = vmatprep.mubr.f32.mxu0 0.0
      %1998 = vmatmul.mubr.f32.gmra.mrb[0].mxu0 %v1928
      %v1999 = vpop.f32.mrb[0].mxu0
      %v2000 = vadd.f32 0.0, %v1999
      %v2001 = vpop.f32.mrb[0].mxu0
      %2002 = vmatprep.mubr.f32.mxu0 0.0
      %2003 = vmatmul.mubr.f32.gmra.mrb[0].mxu0 %v1931
      %v2004 = vpop.f32.mrb[0].mxu0
      %v2005 = vadd.f32 0.0, %v2004
      %v2006 = vpop.f32.mrb[0].mxu0
      %2007 = vdwg.mxu0
      %v2008 = vadd.f32 %v1887, %v2000
      %v2009 = vadd.f32 %v1892, %v2005
      %2010 = vst.msk [vmem:[#allocation2] sm:$0xff] %vm565, %v2008
      %2011 = vst.msk [vmem:[#allocation2 + $0x8] sm:$0xff] %vm565, %v2009
      %v2012 = vsel %vm565, %v1692, 0.0
      %2013 = vadd.xlane.f32.xlu0 %v2012
      %v2014 = vpop.xlane.xlu0 %2013
      %v2015 = vrcp.pop 16.0
      %v2016 = vmul.f32 %v2014, %v2015
      %v2017 = vsub.f32 %v1692, %v2016
      %v2018 = vmul.f32 %v2017, %v2017
      %v2019 = vsel %vm565, %v2018, 0.0
      %2020 = vadd.xlane.f32.xlu0 %v2019
      %v2021 = vpop.xlane.xlu0 %2020
      %v2022 = vmul.f32 %v2021, %v2015
      %v2023 = vadd.f32 %v2022, 0.00064
      %v2024 = vrsqrt.pop %v2023
      %v2025 = vmul.f32 %v2017, %v2024
      %v2026 = vld [vmem:[%s8] sm:$0x1]
      %v2027 = vlaneseq
      %v2028 = vshrl.u32 %v2027, 7
      %v2029 = vsub.s32 0, %v2028
      %v2030 = vrot.slane %v2026, %v2029
      %v2031 = vmul.f32 %v2025, %v2030
      %v2032 = vld [vmem:[%s9] sm:$0x1]
      %v2033 = vlaneseq
      %v2034 = vshrl.u32 %v2033, 7
      %v2035 = vsub.s32 0, %v2034
      %v2036 = vrot.slane %v2032, %v2035
      %v2037 = vadd.f32 %v2031, %v2036
      %v2038 = vmul.f32 %v507, %v543
      %v2039 = vld [vmem:[%s7] sm:$0x1]
      %v2040 = vlaneseq
      %v2041 = vshrl.u32 %v2040, 7
      %v2042 = vsub.s32 0, %v2041
      %v2043 = vrot.slane %v2039, %v2042
      %v2044 = vmul.f32 %v2038, %v2043
      %v2045 = vsel %vm565, %v2044, 0.0
      %2046 = vadd.xlane.f32.xlu0 %v2045
      %v2047 = vpop.xlane.xlu0 %2046
      %v2048 = vmul.f32 %v2047, %v524
      %v2049 = vadd.f32 %v2037, %v2048
      %2051 = vrot.lane.b32.xlu0 %v564, 112
      %v2052 = vpop.permute.xlu0 %2051
      %v2054 = vsel %vm565, %v2052, 0.0
      %2055 = vadd.xlane.f32.xlu0 %v2054
      %v2056 = vpop.xlane.xlu0 %2055
      %v2057 = vrsqrt.pop %v2056
      %v2058 = vmul.f32 %v2056, %v2057
      %vm2059 = vcmp.eq.f32.partialorder %v2056, inf
      %v2060 = vsel %vm2059, %v2056, %v2058
      %vm2061 = vcmp.eq.f32.partialorder %v2056, 0.0
      %v2062 = vand.u32 %v2056, 2147483648
      %v2063 = vsel %vm2061, %v2062, %v2060
      %v2064 = vmax.f32 %v2063, 1e-12
      %v2065 = vrcp.pop %v2064
      %v2066 = vmul.f32 %v532, %v2065
      %v2067 = vsub.f32 0.0, %v2066
      %v2068 = vmul.f32 %v2067, %v514
      %2070 = vrot.lane.b32.xlu0 %v522, 112
      %v2071 = vpop.permute.xlu0 %2070
      %2073 = vmatprep.subr.mxu0 0.0
      %2074 = vmatpush1.msra.mxu0 %v2071
      %2075 = vmatprep.subr.mxu0 0.0
      %2076 = vmatpush1.msra.mxu0 0.0
      %2077 = vmatprep.subr.mxu0 0.0
      %2078 = vmatpush1.msra.mxu0 0.0
      %2079 = vmatprep.subr.mxu0 0.0
      %2080 = vmatpush1.msra.mxu0 0.0
      %2081 = vmatprep.subr.mxu0 0.0
      %2082 = vmatpush1.msra.mxu0 0.0
      %2083 = vmatprep.subr.mxu0 0.0
      %2084 = vmatpush1.msra.mxu0 0.0
      %2085 = vmatprep.subr.mxu0 0.0
      %2086 = vmatpush1.msra.mxu0 0.0
      %2087 = vmatprep.subr.mxu0 0.0
      %2088 = vmatpush1.msra.mxu0 0.0
      %2089 = vmatprep.subr.mxu0 0.0
      %2090 = vmatpush1.msra.mxu0 0.0
      %2091 = vmatprep.subr.mxu0 0.0
      %2092 = vmatpush1.msra.mxu0 0.0
      %2093 = vmatprep.subr.mxu0 0.0
      %2094 = vmatpush1.msra.mxu0 0.0
      %2095 = vmatprep.subr.mxu0 0.0
      %2096 = vmatpush1.msra.mxu0 0.0
      %2097 = vmatprep.subr.mxu0 0.0
      %2098 = vmatpush1.msra.mxu0 0.0
      %2099 = vmatprep.subr.mxu0 0.0
      %2100 = vmatpush1.msra.mxu0 0.0
      %2101 = vmatprep.subr.mxu0 0.0
      %2102 = vmatpush1.msra.mxu0 0.0
      %2103 = vmatprep.subr.mxu0 0.0
      %2104 = vmatpush1.msra.mxu0 0.0
      %2105 = vmatprep.subr.mxu0 0.0
      %2106 = vmatpush1.msra.mxu0 0.0
      %2107 = vmatprep.subr.mxu0 0.0
      %2108 = vmatpush1.msra.mxu0 0.0
      %2109 = vmatprep.subr.mxu0 0.0
      %2110 = vmatpush1.msra.mxu0 0.0
      %2111 = vmatprep.subr.mxu0 0.0
      %2112 = vmatpush1.msra.mxu0 0.0
      %2113 = vmatprep.subr.mxu0 0.0
      %2114 = vmatpush1.msra.mxu0 0.0
      %2115 = vmatprep.subr.mxu0 0.0
      %2116 = vmatpush1.msra.mxu0 0.0
      %2117 = vmatprep.subr.mxu0 0.0
      %2118 = vmatpush1.msra.mxu0 0.0
      %2119 = vmatprep.subr.mxu0 0.0
      %2120 = vmatpush1.msra.mxu0 0.0
      %2121 = vmatprep.subr.mxu0 0.0
      %2122 = vmatpush1.msra.mxu0 0.0
      %2123 = vmatprep.subr.mxu0 0.0
      %2124 = vmatpush1.msra.mxu0 0.0
      %2125 = vmatprep.subr.mxu0 0.0
      %2126 = vmatpush1.msra.mxu0 0.0
      %2127 = vmatprep.subr.mxu0 0.0
      %2128 = vmatpush1.msra.mxu0 0.0
      %2129 = vmatprep.subr.mxu0 0.0
      %2130 = vmatpush1.msra.mxu0 0.0
      %2131 = vmatprep.subr.mxu0 0.0
      %2132 = vmatpush1.msra.mxu0 0.0
      %2133 = vmatprep.subr.mxu0 0.0
      %2134 = vmatpush1.msra.mxu0 0.0
      %2135 = vmatprep.subr.mxu0 0.0
      %2136 = vmatpush1.msra.mxu0 0.0
      %2137 = vmatprep.mubr.f32.mxu0 0.0
      %2138 = vmatmul.mubr.f32.gmra.mrb[0].mxu0 %v583
      %v2139 = vpop.f32.mrb[0].mxu0
      %v2140 = vadd.f32 0.0, %v2139
      %v2141 = vpop.f32.mrb[0].mxu0
      %2142 = vdwg.mxu0
      %v2143 = vsub.f32 0.0, %v2140
      %v2144 = vmul.f32 %v2143, 1.442695
      %v2145 = vpow.pop %v2144
      %2147 = vrot.lane.b32.xlu0 %v2140, 16
      %v2148 = vpop.permute.xlu0 %2147
      %v2150 = vsub.f32 %v522, %v2148
      %v2151 = vmul.f32 %v2150, 1.442695
      %v2152 = vpow.pop %v2151
      %v2153 = vmul.f32 %v2140, 1.442695
      %v2154 = vpow.pop %v2153
      %v2155 = vmul.f32 %v2066, %v2152
      %2157 = vrot.lane.b32.xlu0 %v2154, 16
      %v2158 = vpop.permute.xlu0 %2157
      %v2160 = vmul.f32 %v2068, %v2158
      %v2161 = vmul.f32 %v543, %v2158
      %2163 = vrot.lane.b32.xlu0 %v2145, 16
      %v2164 = vpop.permute.xlu0 %2163
      %v2166 = vmul.f32 %v507, %v2164
      %s2167 = scalar_lea.vmem [#allocation2], 16
      %v2168 = vld [vmem:[%s2167] sm:$0xff]
      %v2169 = vld [vmem:[%s2167 + $0x8] sm:$0xff]
      %2171 = vrot.lane.b32.xlu0 %v2155, 112
      %v2172 = vpop.permute.xlu0 %2171
      %2174 = vrot.lane.b32.xlu0 %v2160, 112
      %v2175 = vpop.permute.xlu0 %2174
      %v2176 = vsel %vm565, %v2172, 0
      %v2178 = vsel %vm565, %v2175, 0
      %2180 = vmatprep.subr.mxu0 0.0
      %2181 = vmatpush1.xpose.msra.mxu0 %v2178
      %2182 = vmatprep.subr.mxu0 0.0
      %2183 = vmatpush1.xpose.msra.mxu0 0.0
      %2184 = vmatprep.subr.mxu0 0.0
      %2185 = vmatpush1.xpose.msra.mxu0 0.0
      %2186 = vmatprep.subr.mxu0 0.0
      %2187 = vmatpush1.xpose.msra.mxu0 0.0
      %2188 = vmatprep.subr.mxu0 0.0
      %2189 = vmatpush1.xpose.msra.mxu0 0.0
      %2190 = vmatprep.subr.mxu0 0.0
      %2191 = vmatpush1.xpose.msra.mxu0 0.0
      %2192 = vmatprep.subr.mxu0 0.0
      %2193 = vmatpush1.xpose.msra.mxu0 0.0
      %2194 = vmatprep.subr.mxu0 0.0
      %2195 = vmatpush1.xpose.msra.mxu0 0.0
      %2196 = vmatprep.subr.mxu0 0.0
      %2197 = vmatpush1.xpose.msra.mxu0 0.0
      %2198 = vmatprep.subr.mxu0 0.0
      %2199 = vmatpush1.xpose.msra.mxu0 0.0
      %2200 = vmatprep.subr.mxu0 0.0
      %2201 = vmatpush1.xpose.msra.mxu0 0.0
      %2202 = vmatprep.subr.mxu0 0.0
      %2203 = vmatpush1.xpose.msra.mxu0 0.0
      %2204 = vmatprep.subr.mxu0 0.0
      %2205 = vmatpush1.xpose.msra.mxu0 0.0
      %2206 = vmatprep.subr.mxu0 0.0
      %2207 = vmatpush1.xpose.msra.mxu0 0.0
      %2208 = vmatprep.subr.mxu0 0.0
      %2209 = vmatpush1.xpose.msra.mxu0 0.0
      %2210 = vmatprep.subr.mxu0 0.0
      %2211 = vmatpush1.xpose.msra.mxu0 0.0
      %2212 = vmatprep.subr.mxu0 0.0
      %2213 = vmatpush1.xpose.msra.mxu0 0.0
      %2214 = vmatprep.subr.mxu0 0.0
      %2215 = vmatpush1.xpose.msra.mxu0 0.0
      %2216 = vmatprep.subr.mxu0 0.0
      %2217 = vmatpush1.xpose.msra.mxu0 0.0
      %2218 = vmatprep.subr.mxu0 0.0
      %2219 = vmatpush1.xpose.msra.mxu0 0.0
      %2220 = vmatprep.subr.mxu0 0.0
      %2221 = vmatpush1.xpose.msra.mxu0 0.0
      %2222 = vmatprep.subr.mxu0 0.0
      %2223 = vmatpush1.xpose.msra.mxu0 0.0
      %2224 = vmatprep.subr.mxu0 0.0
      %2225 = vmatpush1.xpose.msra.mxu0 0.0
      %2226 = vmatprep.subr.mxu0 0.0
      %2227 = vmatpush1.xpose.msra.mxu0 0.0
      %2228 = vmatprep.subr.mxu0 0.0
      %2229 = vmatpush1.xpose.msra.mxu0 0.0
      %2230 = vmatprep.subr.mxu0 0.0
      %2231 = vmatpush1.xpose.msra.mxu0 0.0
      %2232 = vmatprep.subr.mxu0 0.0
      %2233 = vmatpush1.xpose.msra.mxu0 0.0
      %2234 = vmatprep.subr.mxu0 0.0
      %2235 = vmatpush1.xpose.msra.mxu0 0.0
      %2236 = vmatprep.subr.mxu0 0.0
      %2237 = vmatpush1.xpose.msra.mxu0 0.0
      %2238 = vmatprep.subr.mxu0 0.0
      %2239 = vmatpush1.xpose.msra.mxu0 0.0
      %2240 = vmatprep.subr.mxu0 0.0
      %2241 = vmatpush1.xpose.msra.mxu0 0.0
      %2242 = vmatprep.subr.mxu0 0.0
      %2243 = vmatpush1.xpose.msra.mxu0 0.0
      %2244 = vmatprep.mubr.f32.mxu0 0.0
      %2245 = vmatmul.mubr.f32.gmra.mrb[0].mxu0 %v2176
      %v2246 = vpop.f32.mrb[0].mxu0
      %v2247 = vadd.f32 0.0, %v2246
      %v2248 = vpop.f32.mrb[0].mxu0
      %2249 = vdwg.mxu0
      %v2250 = vmul.f32 %v553, %v2247
      %2252 = vrot.lane.b32.xlu0 %v2161, 112
      %v2253 = vpop.permute.xlu0 %2252
      %v2254 = vsel %vm565, %v2253, 0
      %2256 = vmatprep.subr.mxu0 0.0
      %2257 = vmatpush1.xpose.msra.mxu0 %v2254
      %2258 = vmatprep.subr.mxu0 0.0
      %2259 = vmatpush1.xpose.msra.mxu0 0.0
      %2260 = vmatprep.subr.mxu0 0.0
      %2261 = vmatpush1.xpose.msra.mxu0 0.0
      %2262 = vmatprep.subr.mxu0 0.0
      %2263 = vmatpush1.xpose.msra.mxu0 0.0
      %2264 = vmatprep.subr.mxu0 0.0
      %2265 = vmatpush1.xpose.msra.mxu0 0.0
      %2266 = vmatprep.subr.mxu0 0.0
      %2267 = vmatpush1.xpose.msra.mxu0 0.0
      %2268 = vmatprep.subr.mxu0 0.0
      %2269 = vmatpush1.xpose.msra.mxu0 0.0
      %2270 = vmatprep.subr.mxu0 0.0
      %2271 = vmatpush1.xpose.msra.mxu0 0.0
      %2272 = vmatprep.subr.mxu0 0.0
      %2273 = vmatpush1.xpose.msra.mxu0 0.0
      %2274 = vmatprep.subr.mxu0 0.0
      %2275 = vmatpush1.xpose.msra.mxu0 0.0
      %2276 = vmatprep.subr.mxu0 0.0
      %2277 = vmatpush1.xpose.msra.mxu0 0.0
      %2278 = vmatprep.subr.mxu0 0.0
      %2279 = vmatpush1.xpose.msra.mxu0 0.0
      %2280 = vmatprep.subr.mxu0 0.0
      %2281 = vmatpush1.xpose.msra.mxu0 0.0
      %2282 = vmatprep.subr.mxu0 0.0
      %2283 = vmatpush1.xpose.msra.mxu0 0.0
      %2284 = vmatprep.subr.mxu0 0.0
      %2285 = vmatpush1.xpose.msra.mxu0 0.0
      %2286 = vmatprep.subr.mxu0 0.0
      %2287 = vmatpush1.xpose.msra.mxu0 0.0
      %2288 = vmatprep.subr.mxu0 0.0
      %2289 = vmatpush1.xpose.msra.mxu0 0.0
      %2290 = vmatprep.subr.mxu0 0.0
      %2291 = vmatpush1.xpose.msra.mxu0 0.0
      %2292 = vmatprep.subr.mxu0 0.0
      %2293 = vmatpush1.xpose.msra.mxu0 0.0
      %2294 = vmatprep.subr.mxu0 0.0
      %2295 = vmatpush1.xpose.msra.mxu0 0.0
      %2296 = vmatprep.subr.mxu0 0.0
      %2297 = vmatpush1.xpose.msra.mxu0 0.0
      %2298 = vmatprep.subr.mxu0 0.0
      %2299 = vmatpush1.xpose.msra.mxu0 0.0
      %2300 = vmatprep.subr.mxu0 0.0
      %2301 = vmatpush1.xpose.msra.mxu0 0.0
      %2302 = vmatprep.subr.mxu0 0.0
      %2303 = vmatpush1.xpose.msra.mxu0 0.0
      %2304 = vmatprep.subr.mxu0 0.0
      %2305 = vmatpush1.xpose.msra.mxu0 0.0
      %2306 = vmatprep.subr.mxu0 0.0
      %2307 = vmatpush1.xpose.msra.mxu0 0.0
      %2308 = vmatprep.subr.mxu0 0.0
      %2309 = vmatpush1.xpose.msra.mxu0 0.0
      %2310 = vmatprep.subr.mxu0 0.0
      %2311 = vmatpush1.xpose.msra.mxu0 0.0
      %2312 = vmatprep.subr.mxu0 0.0
      %2313 = vmatpush1.xpose.msra.mxu0 0.0
      %2314 = vmatprep.subr.mxu0 0.0
      %2315 = vmatpush1.xpose.msra.mxu0 0.0
      %2316 = vmatprep.subr.mxu0 0.0
      %2317 = vmatpush1.xpose.msra.mxu0 0.0
      %2318 = vmatprep.subr.mxu0 0.0
      %2319 = vmatpush1.xpose.msra.mxu0 0.0
      %2320 = vmatprep.mubr.f32.mxu0 0.0
      %2321 = vmatmul.mubr.f32.gmra.mrb[0].mxu0 %v2176
      %v2322 = vpop.f32.mrb[0].mxu0
      %v2323 = vadd.f32 0.0, %v2322
      %v2324 = vpop.f32.mrb[0].mxu0
      %2325 = vdwg.mxu0
      %v2326 = vmul.f32 %v553, %v2323
      %2328 = vrot.lane.b32.xlu0 %v524, 112
      %v2329 = vpop.permute.xlu0 %2328
      %v2332 = vsel %vm581, %v2326, 0
      %2334 = vmatprep.subr.mxu0 0.0
      %2335 = vmatpush1.msra.mxu0 %v2329
      %2336 = vmatprep.subr.mxu0 0.0
      %2337 = vmatpush1.msra.mxu0 0.0
      %2338 = vmatprep.subr.mxu0 0.0
      %2339 = vmatpush1.msra.mxu0 0.0
      %2340 = vmatprep.subr.mxu0 0.0
      %2341 = vmatpush1.msra.mxu0 0.0
      %2342 = vmatprep.subr.mxu0 0.0
      %2343 = vmatpush1.msra.mxu0 0.0
      %2344 = vmatprep.subr.mxu0 0.0
      %2345 = vmatpush1.msra.mxu0 0.0
      %2346 = vmatprep.subr.mxu0 0.0
      %2347 = vmatpush1.msra.mxu0 0.0
      %2348 = vmatprep.subr.mxu0 0.0
      %2349 = vmatpush1.msra.mxu0 0.0
      %2350 = vmatprep.subr.mxu0 0.0
      %2351 = vmatpush1.msra.mxu0 0.0
      %2352 = vmatprep.subr.mxu0 0.0
      %2353 = vmatpush1.msra.mxu0 0.0
      %2354 = vmatprep.subr.mxu0 0.0
      %2355 = vmatpush1.msra.mxu0 0.0
      %2356 = vmatprep.subr.mxu0 0.0
      %2357 = vmatpush1.msra.mxu0 0.0
      %2358 = vmatprep.subr.mxu0 0.0
      %2359 = vmatpush1.msra.mxu0 0.0
      %2360 = vmatprep.subr.mxu0 0.0
      %2361 = vmatpush1.msra.mxu0 0.0
      %2362 = vmatprep.subr.mxu0 0.0
      %2363 = vmatpush1.msra.mxu0 0.0
      %2364 = vmatprep.subr.mxu0 0.0
      %2365 = vmatpush1.msra.mxu0 0.0
      %2366 = vmatprep.subr.mxu0 0.0
      %2367 = vmatpush1.msra.mxu0 0.0
      %2368 = vmatprep.subr.mxu0 0.0
      %2369 = vmatpush1.msra.mxu0 0.0
      %2370 = vmatprep.subr.mxu0 0.0
      %2371 = vmatpush1.msra.mxu0 0.0
      %2372 = vmatprep.subr.mxu0 0.0
      %2373 = vmatpush1.msra.mxu0 0.0
      %2374 = vmatprep.subr.mxu0 0.0
      %2375 = vmatpush1.msra.mxu0 0.0
      %2376 = vmatprep.subr.mxu0 0.0
      %2377 = vmatpush1.msra.mxu0 0.0
      %2378 = vmatprep.subr.mxu0 0.0
      %2379 = vmatpush1.msra.mxu0 0.0
      %2380 = vmatprep.subr.mxu0 0.0
      %2381 = vmatpush1.msra.mxu0 0.0
      %2382 = vmatprep.subr.mxu0 0.0
      %2383 = vmatpush1.msra.mxu0 0.0
      %2384 = vmatprep.subr.mxu0 0.0
      %2385 = vmatpush1.msra.mxu0 0.0
      %2386 = vmatprep.subr.mxu0 0.0
      %2387 = vmatpush1.msra.mxu0 0.0
      %2388 = vmatprep.subr.mxu0 0.0
      %2389 = vmatpush1.msra.mxu0 0.0
      %2390 = vmatprep.subr.mxu0 0.0
      %2391 = vmatpush1.msra.mxu0 0.0
      %2392 = vmatprep.subr.mxu0 0.0
      %2393 = vmatpush1.msra.mxu0 0.0
      %2394 = vmatprep.subr.mxu0 0.0
      %2395 = vmatpush1.msra.mxu0 0.0
      %2396 = vmatprep.subr.mxu0 0.0
      %2397 = vmatpush1.msra.mxu0 0.0
      %2398 = vmatprep.mubr.f32.mxu0 0.0
      %2399 = vmatmul.mubr.f32.gmra.mrb[0].mxu0 %v2332
      %v2400 = vpop.f32.mrb[0].mxu0
      %v2401 = vadd.f32 0.0, %v2400
      %v2402 = vpop.f32.mrb[0].mxu0
      %2403 = vdwg.mxu0
      %2404 = vmatprep.subr.mxu0 0.0
      %2405 = vmatpush1.msra.mxu0 %v2168
      %2406 = vmatprep.subr.mxu0 0.0
      %2407 = vmatpush1.msra.mxu0 %v2169
      %2408 = vmatprep.subr.mxu0 0.0
      %2409 = vmatpush1.msra.mxu0 0.0
      %2410 = vmatprep.subr.mxu0 0.0
      %2411 = vmatpush1.msra.mxu0 0.0
      %2412 = vmatprep.subr.mxu0 0.0
      %2413 = vmatpush1.msra.mxu0 0.0
      %2414 = vmatprep.subr.mxu0 0.0
      %2415 = vmatpush1.msra.mxu0 0.0
      %2416 = vmatprep.subr.mxu0 0.0
      %2417 = vmatpush1.msra.mxu0 0.0
      %2418 = vmatprep.subr.mxu0 0.0
      %2419 = vmatpush1.msra.mxu0 0.0
      %2420 = vmatprep.subr.mxu0 0.0
      %2421 = vmatpush1.msra.mxu0 0.0
      %2422 = vmatprep.subr.mxu0 0.0
      %2423 = vmatpush1.msra.mxu0 0.0
      %2424 = vmatprep.subr.mxu0 0.0
      %2425 = vmatpush1.msra.mxu0 0.0
      %2426 = vmatprep.subr.mxu0 0.0
      %2427 = vmatpush1.msra.mxu0 0.0
      %2428 = vmatprep.subr.mxu0 0.0
      %2429 = vmatpush1.msra.mxu0 0.0
      %2430 = vmatprep.subr.mxu0 0.0
      %2431 = vmatpush1.msra.mxu0 0.0
      %2432 = vmatprep.subr.mxu0 0.0
      %2433 = vmatpush1.msra.mxu0 0.0
      %2434 = vmatprep.subr.mxu0 0.0
      %2435 = vmatpush1.msra.mxu0 0.0
      %2436 = vmatprep.subr.mxu0 0.0
      %2437 = vmatpush1.msra.mxu0 0.0
      %2438 = vmatprep.subr.mxu0 0.0
      %2439 = vmatpush1.msra.mxu0 0.0
      %2440 = vmatprep.subr.mxu0 0.0
      %2441 = vmatpush1.msra.mxu0 0.0
      %2442 = vmatprep.subr.mxu0 0.0
      %2443 = vmatpush1.msra.mxu0 0.0
      %2444 = vmatprep.subr.mxu0 0.0
      %2445 = vmatpush1.msra.mxu0 0.0
      %2446 = vmatprep.subr.mxu0 0.0
      %2447 = vmatpush1.msra.mxu0 0.0
      %2448 = vmatprep.subr.mxu0 0.0
      %2449 = vmatpush1.msra.mxu0 0.0
      %2450 = vmatprep.subr.mxu0 0.0
      %2451 = vmatpush1.msra.mxu0 0.0
      %2452 = vmatprep.subr.mxu0 0.0
      %2453 = vmatpush1.msra.mxu0 0.0
      %2454 = vmatprep.subr.mxu0 0.0
      %2455 = vmatpush1.msra.mxu0 0.0
      %2456 = vmatprep.subr.mxu0 0.0
      %2457 = vmatpush1.msra.mxu0 0.0
      %2458 = vmatprep.subr.mxu0 0.0
      %2459 = vmatpush1.msra.mxu0 0.0
      %2460 = vmatprep.subr.mxu0 0.0
      %2461 = vmatpush1.msra.mxu0 0.0
      %2462 = vmatprep.subr.mxu0 0.0
      %2463 = vmatpush1.msra.mxu0 0.0
      %2464 = vmatprep.subr.mxu0 0.0
      %2465 = vmatpush1.msra.mxu0 0.0
      %2466 = vmatprep.subr.mxu0 0.0
      %2467 = vmatpush1.msra.mxu0 0.0
      %2468 = vmatprep.mubr.f32.mxu0 0.0
      %2469 = vmatmul.mubr.f32.gmra.mrb[0].mxu0 %v2176
      %v2470 = vpop.f32.mrb[0].mxu0
      %v2471 = vadd.f32 %v2401, %v2470
      %v2472 = vpop.f32.mrb[0].mxu0
      %2473 = vdwg.mxu0
      %v2474 = vadd.f32 %v556, %v2250
      %v2476 = vsel %vm581, %v2250, 0
      %2478 = vmatprep.subr.mxu0 0.0
      %2479 = vmatpush1.msra.mxu0 %v2250
      %2480 = vmatprep.subr.mxu0 0.0
      %2481 = vmatpush1.msra.mxu0 0.0
      %2482 = vmatprep.subr.mxu0 0.0
      %2483 = vmatpush1.msra.mxu0 0.0
      %2484 = vmatprep.subr.mxu0 0.0
      %2485 = vmatpush1.msra.mxu0 0.0
      %2486 = vmatprep.subr.mxu0 0.0
      %2487 = vmatpush1.msra.mxu0 0.0
      %2488 = vmatprep.subr.mxu0 0.0
      %2489 = vmatpush1.msra.mxu0 0.0
      %2490 = vmatprep.subr.mxu0 0.0
      %2491 = vmatpush1.msra.mxu0 0.0
      %2492 = vmatprep.subr.mxu0 0.0
      %2493 = vmatpush1.msra.mxu0 0.0
      %2494 = vmatprep.subr.mxu0 0.0
      %2495 = vmatpush1.msra.mxu0 0.0
      %2496 = vmatprep.subr.mxu0 0.0
      %2497 = vmatpush1.msra.mxu0 0.0
      %2498 = vmatprep.subr.mxu0 0.0
      %2499 = vmatpush1.msra.mxu0 0.0
      %2500 = vmatprep.subr.mxu0 0.0
      %2501 = vmatpush1.msra.mxu0 0.0
      %2502 = vmatprep.subr.mxu0 0.0
      %2503 = vmatpush1.msra.mxu0 0.0
      %2504 = vmatprep.subr.mxu0 0.0
      %2505 = vmatpush1.msra.mxu0 0.0
      %2506 = vmatprep.subr.mxu0 0.0
      %2507 = vmatpush1.msra.mxu0 0.0
      %2508 = vmatprep.subr.mxu0 0.0
      %2509 = vmatpush1.msra.mxu0 0.0
      %2510 = vmatprep.subr.mxu0 0.0
      %2511 = vmatpush1.msra.mxu0 0.0
      %2512 = vmatprep.subr.mxu0 0.0
      %2513 = vmatpush1.msra.mxu0 0.0
      %2514 = vmatprep.subr.mxu0 0.0
      %2515 = vmatpush1.msra.mxu0 0.0
      %2516 = vmatprep.subr.mxu0 0.0
      %2517 = vmatpush1.msra.mxu0 0.0
      %2518 = vmatprep.subr.mxu0 0.0
      %2519 = vmatpush1.msra.mxu0 0.0
      %2520 = vmatprep.subr.mxu0 0.0
      %2521 = vmatpush1.msra.mxu0 0.0
      %2522 = vmatprep.subr.mxu0 0.0
      %2523 = vmatpush1.msra.mxu0 0.0
      %2524 = vmatprep.subr.mxu0 0.0
      %2525 = vmatpush1.msra.mxu0 0.0
      %2526 = vmatprep.subr.mxu0 0.0
      %2527 = vmatpush1.msra.mxu0 0.0
      %2528 = vmatprep.subr.mxu0 0.0
      %2529 = vmatpush1.msra.mxu0 0.0
      %2530 = vmatprep.subr.mxu0 0.0
      %2531 = vmatpush1.msra.mxu0 0.0
      %2532 = vmatprep.subr.mxu0 0.0
      %2533 = vmatpush1.msra.mxu0 0.0
      %2534 = vmatprep.subr.mxu0 0.0
      %2535 = vmatpush1.msra.mxu0 0.0
      %2536 = vmatprep.subr.mxu0 0.0
      %2537 = vmatpush1.msra.mxu0 0.0
      %2538 = vmatprep.subr.mxu0 0.0
      %2539 = vmatpush1.msra.mxu0 0.0
      %2540 = vmatprep.subr.mxu0 0.0
      %2541 = vmatpush1.msra.mxu0 0.0
      %2542 = vmatprep.mubr.f32.mxu0 0.0
      %2543 = vmatmul.mubr.f32.gmra.mrb[0].mxu0 %v2476
      %v2544 = vpop.f32.mrb[0].mxu0
      %v2545 = vadd.f32 0.0, %v2544
      %v2546 = vpop.f32.mrb[0].mxu0
      %2547 = vdwg.mxu0
      %v2549 = vsel %vm581, %v2474, 0
      %2551 = vmatprep.subr.mxu0 0.0
      %2552 = vmatpush1.msra.mxu0 %v2545
      %2553 = vmatprep.subr.mxu0 0.0
      %2554 = vmatpush1.msra.mxu0 0.0
      %2555 = vmatprep.subr.mxu0 0.0
      %2556 = vmatpush1.msra.mxu0 0.0
      %2557 = vmatprep.subr.mxu0 0.0
      %2558 = vmatpush1.msra.mxu0 0.0
      %2559 = vmatprep.subr.mxu0 0.0
      %2560 = vmatpush1.msra.mxu0 0.0
      %2561 = vmatprep.subr.mxu0 0.0
      %2562 = vmatpush1.msra.mxu0 0.0
      %2563 = vmatprep.subr.mxu0 0.0
      %2564 = vmatpush1.msra.mxu0 0.0
      %2565 = vmatprep.subr.mxu0 0.0
      %2566 = vmatpush1.msra.mxu0 0.0
      %2567 = vmatprep.subr.mxu0 0.0
      %2568 = vmatpush1.msra.mxu0 0.0
      %2569 = vmatprep.subr.mxu0 0.0
      %2570 = vmatpush1.msra.mxu0 0.0
      %2571 = vmatprep.subr.mxu0 0.0
      %2572 = vmatpush1.msra.mxu0 0.0
      %2573 = vmatprep.subr.mxu0 0.0
      %2574 = vmatpush1.msra.mxu0 0.0
      %2575 = vmatprep.subr.mxu0 0.0
      %2576 = vmatpush1.msra.mxu0 0.0
      %2577 = vmatprep.subr.mxu0 0.0
      %2578 = vmatpush1.msra.mxu0 0.0
      %2579 = vmatprep.subr.mxu0 0.0
      %2580 = vmatpush1.msra.mxu0 0.0
      %2581 = vmatprep.subr.mxu0 0.0
      %2582 = vmatpush1.msra.mxu0 0.0
      %2583 = vmatprep.subr.mxu0 0.0
      %2584 = vmatpush1.msra.mxu0 0.0
      %2585 = vmatprep.subr.mxu0 0.0
      %2586 = vmatpush1.msra.mxu0 0.0
      %2587 = vmatprep.subr.mxu0 0.0
      %2588 = vmatpush1.msra.mxu0 0.0
      %2589 = vmatprep.subr.mxu0 0.0
      %2590 = vmatpush1.msra.mxu0 0.0
      %2591 = vmatprep.subr.mxu0 0.0
      %2592 = vmatpush1.msra.mxu0 0.0
      %2593 = vmatprep.subr.mxu0 0.0
      %2594 = vmatpush1.msra.mxu0 0.0
      %2595 = vmatprep.subr.mxu0 0.0
      %2596 = vmatpush1.msra.mxu0 0.0
      %2597 = vmatprep.subr.mxu0 0.0
      %2598 = vmatpush1.msra.mxu0 0.0
      %2599 = vmatprep.subr.mxu0 0.0
      %2600 = vmatpush1.msra.mxu0 0.0
      %2601 = vmatprep.subr.mxu0 0.0
      %2602 = vmatpush1.msra.mxu0 0.0
      %2603 = vmatprep.subr.mxu0 0.0
      %2604 = vmatpush1.msra.mxu0 0.0
      %2605 = vmatprep.subr.mxu0 0.0
      %2606 = vmatpush1.msra.mxu0 0.0
      %2607 = vmatprep.subr.mxu0 0.0
      %2608 = vmatpush1.msra.mxu0 0.0
      %2609 = vmatprep.subr.mxu0 0.0
      %2610 = vmatpush1.msra.mxu0 0.0
      %2611 = vmatprep.subr.mxu0 0.0
      %2612 = vmatpush1.msra.mxu0 0.0
      %2613 = vmatprep.subr.mxu0 0.0
      %2614 = vmatpush1.msra.mxu0 0.0
      %2615 = vmatprep.mubr.f32.mxu0 0.0
      %2616 = vmatmul.mubr.f32.gmra.mrb[0].mxu0 %v2549
      %v2617 = vpop.f32.mrb[0].mxu0
      %v2618 = vadd.f32 0.0, %v2617
      %v2619 = vpop.f32.mrb[0].mxu0
      %2620 = vdwg.mxu0
      %v2621 = vadd.f32 %v2474, %v2618
      %v2623 = vsel %vm581, %v2545, 0
      %2625 = vmatprep.subr.mxu0 0.0
      %2626 = vmatpush1.msra.mxu0 %v2545
      %2627 = vmatprep.subr.mxu0 0.0
      %2628 = vmatpush1.msra.mxu0 0.0
      %2629 = vmatprep.subr.mxu0 0.0
      %2630 = vmatpush1.msra.mxu0 0.0
      %2631 = vmatprep.subr.mxu0 0.0
      %2632 = vmatpush1.msra.mxu0 0.0
      %2633 = vmatprep.subr.mxu0 0.0
      %2634 = vmatpush1.msra.mxu0 0.0
      %2635 = vmatprep.subr.mxu0 0.0
      %2636 = vmatpush1.msra.mxu0 0.0
      %2637 = vmatprep.subr.mxu0 0.0
      %2638 = vmatpush1.msra.mxu0 0.0
      %2639 = vmatprep.subr.mxu0 0.0
      %2640 = vmatpush1.msra.mxu0 0.0
      %2641 = vmatprep.subr.mxu0 0.0
      %2642 = vmatpush1.msra.mxu0 0.0
      %2643 = vmatprep.subr.mxu0 0.0
      %2644 = vmatpush1.msra.mxu0 0.0
      %2645 = vmatprep.subr.mxu0 0.0
      %2646 = vmatpush1.msra.mxu0 0.0
      %2647 = vmatprep.subr.mxu0 0.0
      %2648 = vmatpush1.msra.mxu0 0.0
      %2649 = vmatprep.subr.mxu0 0.0
      %2650 = vmatpush1.msra.mxu0 0.0
      %2651 = vmatprep.subr.mxu0 0.0
      %2652 = vmatpush1.msra.mxu0 0.0
      %2653 = vmatprep.subr.mxu0 0.0
      %2654 = vmatpush1.msra.mxu0 0.0
      %2655 = vmatprep.subr.mxu0 0.0
      %2656 = vmatpush1.msra.mxu0 0.0
      %2657 = vmatprep.subr.mxu0 0.0
      %2658 = vmatpush1.msra.mxu0 0.0
      %2659 = vmatprep.subr.mxu0 0.0
      %2660 = vmatpush1.msra.mxu0 0.0
      %2661 = vmatprep.subr.mxu0 0.0
      %2662 = vmatpush1.msra.mxu0 0.0
      %2663 = vmatprep.subr.mxu0 0.0
      %2664 = vmatpush1.msra.mxu0 0.0
      %2665 = vmatprep.subr.mxu0 0.0
      %2666 = vmatpush1.msra.mxu0 0.0
      %2667 = vmatprep.subr.mxu0 0.0
      %2668 = vmatpush1.msra.mxu0 0.0
      %2669 = vmatprep.subr.mxu0 0.0
      %2670 = vmatpush1.msra.mxu0 0.0
      %2671 = vmatprep.subr.mxu0 0.0
      %2672 = vmatpush1.msra.mxu0 0.0
      %2673 = vmatprep.subr.mxu0 0.0
      %2674 = vmatpush1.msra.mxu0 0.0
      %2675 = vmatprep.subr.mxu0 0.0
      %2676 = vmatpush1.msra.mxu0 0.0
      %2677 = vmatprep.subr.mxu0 0.0
      %2678 = vmatpush1.msra.mxu0 0.0
      %2679 = vmatprep.subr.mxu0 0.0
      %2680 = vmatpush1.msra.mxu0 0.0
      %2681 = vmatprep.subr.mxu0 0.0
      %2682 = vmatpush1.msra.mxu0 0.0
      %2683 = vmatprep.subr.mxu0 0.0
      %2684 = vmatpush1.msra.mxu0 0.0
      %2685 = vmatprep.subr.mxu0 0.0
      %2686 = vmatpush1.msra.mxu0 0.0
      %2687 = vmatprep.subr.mxu0 0.0
      %2688 = vmatpush1.msra.mxu0 0.0
      %2689 = vmatprep.mubr.f32.mxu0 0.0
      %2690 = vmatmul.mubr.f32.gmra.mrb[0].mxu0 %v2623
      %v2691 = vpop.f32.mrb[0].mxu0
      %v2692 = vadd.f32 0.0, %v2691
      %v2693 = vpop.f32.mrb[0].mxu0
      %2694 = vdwg.mxu0
      %v2696 = vsel %vm581, %v2621, 0
      %2698 = vmatprep.subr.mxu0 0.0
      %2699 = vmatpush1.msra.mxu0 %v2692
      %2700 = vmatprep.subr.mxu0 0.0
      %2701 = vmatpush1.msra.mxu0 0.0
      %2702 = vmatprep.subr.mxu0 0.0
      %2703 = vmatpush1.msra.mxu0 0.0
      %2704 = vmatprep.subr.mxu0 0.0
      %2705 = vmatpush1.msra.mxu0 0.0
      %2706 = vmatprep.subr.mxu0 0.0
      %2707 = vmatpush1.msra.mxu0 0.0
      %2708 = vmatprep.subr.mxu0 0.0
      %2709 = vmatpush1.msra.mxu0 0.0
      %2710 = vmatprep.subr.mxu0 0.0
      %2711 = vmatpush1.msra.mxu0 0.0
      %2712 = vmatprep.subr.mxu0 0.0
      %2713 = vmatpush1.msra.mxu0 0.0
      %2714 = vmatprep.subr.mxu0 0.0
      %2715 = vmatpush1.msra.mxu0 0.0
      %2716 = vmatprep.subr.mxu0 0.0
      %2717 = vmatpush1.msra.mxu0 0.0
      %2718 = vmatprep.subr.mxu0 0.0
      %2719 = vmatpush1.msra.mxu0 0.0
      %2720 = vmatprep.subr.mxu0 0.0
      %2721 = vmatpush1.msra.mxu0 0.0
      %2722 = vmatprep.subr.mxu0 0.0
      %2723 = vmatpush1.msra.mxu0 0.0
      %2724 = vmatprep.subr.mxu0 0.0
      %2725 = vmatpush1.msra.mxu0 0.0
      %2726 = vmatprep.subr.mxu0 0.0
      %2727 = vmatpush1.msra.mxu0 0.0
      %2728 = vmatprep.subr.mxu0 0.0
      %2729 = vmatpush1.msra.mxu0 0.0
      %2730 = vmatprep.subr.mxu0 0.0
      %2731 = vmatpush1.msra.mxu0 0.0
      %2732 = vmatprep.subr.mxu0 0.0
      %2733 = vmatpush1.msra.mxu0 0.0
      %2734 = vmatprep.subr.mxu0 0.0
      %2735 = vmatpush1.msra.mxu0 0.0
      %2736 = vmatprep.subr.mxu0 0.0
      %2737 = vmatpush1.msra.mxu0 0.0
      %2738 = vmatprep.subr.mxu0 0.0
      %2739 = vmatpush1.msra.mxu0 0.0
      %2740 = vmatprep.subr.mxu0 0.0
      %2741 = vmatpush1.msra.mxu0 0.0
      %2742 = vmatprep.subr.mxu0 0.0
      %2743 = vmatpush1.msra.mxu0 0.0
      %2744 = vmatprep.subr.mxu0 0.0
      %2745 = vmatpush1.msra.mxu0 0.0
      %2746 = vmatprep.subr.mxu0 0.0
      %2747 = vmatpush1.msra.mxu0 0.0
      %2748 = vmatprep.subr.mxu0 0.0
      %2749 = vmatpush1.msra.mxu0 0.0
      %2750 = vmatprep.subr.mxu0 0.0
      %2751 = vmatpush1.msra.mxu0 0.0
      %2752 = vmatprep.subr.mxu0 0.0
      %2753 = vmatpush1.msra.mxu0 0.0
      %2754 = vmatprep.subr.mxu0 0.0
      %2755 = vmatpush1.msra.mxu0 0.0
      %2756 = vmatprep.subr.mxu0 0.0
      %2757 = vmatpush1.msra.mxu0 0.0
      %2758 = vmatprep.subr.mxu0 0.0
      %2759 = vmatpush1.msra.mxu0 0.0
      %2760 = vmatprep.subr.mxu0 0.0
      %2761 = vmatpush1.msra.mxu0 0.0
      %2762 = vmatprep.mubr.f32.mxu0 0.0
      %2763 = vmatmul.mubr.f32.gmra.mrb[0].mxu0 %v2696
      %v2764 = vpop.f32.mrb[0].mxu0
      %v2765 = vadd.f32 0.0, %v2764
      %v2766 = vpop.f32.mrb[0].mxu0
      %2767 = vdwg.mxu0
      %v2768 = vadd.f32 %v2621, %v2765
      %v2770 = vsel %vm581, %v2768, 0
      %2772 = vmatprep.subr.mxu0 0.0
      %2773 = vmatpush1.msra.mxu0 %v2471
      %2774 = vmatprep.subr.mxu0 0.0
      %2775 = vmatpush1.msra.mxu0 0.0
      %2776 = vmatprep.subr.mxu0 0.0
      %2777 = vmatpush1.msra.mxu0 0.0
      %2778 = vmatprep.subr.mxu0 0.0
      %2779 = vmatpush1.msra.mxu0 0.0
      %2780 = vmatprep.subr.mxu0 0.0
      %2781 = vmatpush1.msra.mxu0 0.0
      %2782 = vmatprep.subr.mxu0 0.0
      %2783 = vmatpush1.msra.mxu0 0.0
      %2784 = vmatprep.subr.mxu0 0.0
      %2785 = vmatpush1.msra.mxu0 0.0
      %2786 = vmatprep.subr.mxu0 0.0
      %2787 = vmatpush1.msra.mxu0 0.0
      %2788 = vmatprep.subr.mxu0 0.0
      %2789 = vmatpush1.msra.mxu0 0.0
      %2790 = vmatprep.subr.mxu0 0.0
      %2791 = vmatpush1.msra.mxu0 0.0
      %2792 = vmatprep.subr.mxu0 0.0
      %2793 = vmatpush1.msra.mxu0 0.0
      %2794 = vmatprep.subr.mxu0 0.0
      %2795 = vmatpush1.msra.mxu0 0.0
      %2796 = vmatprep.subr.mxu0 0.0
      %2797 = vmatpush1.msra.mxu0 0.0
      %2798 = vmatprep.subr.mxu0 0.0
      %2799 = vmatpush1.msra.mxu0 0.0
      %2800 = vmatprep.subr.mxu0 0.0
      %2801 = vmatpush1.msra.mxu0 0.0
      %2802 = vmatprep.subr.mxu0 0.0
      %2803 = vmatpush1.msra.mxu0 0.0
      %2804 = vmatprep.subr.mxu0 0.0
      %2805 = vmatpush1.msra.mxu0 0.0
      %2806 = vmatprep.subr.mxu0 0.0
      %2807 = vmatpush1.msra.mxu0 0.0
      %2808 = vmatprep.subr.mxu0 0.0
      %2809 = vmatpush1.msra.mxu0 0.0
      %2810 = vmatprep.subr.mxu0 0.0
      %2811 = vmatpush1.msra.mxu0 0.0
      %2812 = vmatprep.subr.mxu0 0.0
      %2813 = vmatpush1.msra.mxu0 0.0
      %2814 = vmatprep.subr.mxu0 0.0
      %2815 = vmatpush1.msra.mxu0 0.0
      %2816 = vmatprep.subr.mxu0 0.0
      %2817 = vmatpush1.msra.mxu0 0.0
      %2818 = vmatprep.subr.mxu0 0.0
      %2819 = vmatpush1.msra.mxu0 0.0
      %2820 = vmatprep.subr.mxu0 0.0
      %2821 = vmatpush1.msra.mxu0 0.0
      %2822 = vmatprep.subr.mxu0 0.0
      %2823 = vmatpush1.msra.mxu0 0.0
      %2824 = vmatprep.subr.mxu0 0.0
      %2825 = vmatpush1.msra.mxu0 0.0
      %2826 = vmatprep.subr.mxu0 0.0
      %2827 = vmatpush1.msra.mxu0 0.0
      %2828 = vmatprep.subr.mxu0 0.0
      %2829 = vmatpush1.msra.mxu0 0.0
      %2830 = vmatprep.subr.mxu0 0.0
      %2831 = vmatpush1.msra.mxu0 0.0
      %2832 = vmatprep.subr.mxu0 0.0
      %2833 = vmatpush1.msra.mxu0 0.0
      %2834 = vmatprep.subr.mxu0 0.0
      %2835 = vmatpush1.msra.mxu0 0.0
      %2836 = vmatprep.mubr.f32.mxu0 0.0
      %2837 = vmatmul.mubr.f32.gmra.mrb[0].mxu0 %v2770
      %v2838 = vpop.f32.mrb[0].mxu0
      %v2839 = vadd.f32 0.0, %v2838
      %v2840 = vpop.f32.mrb[0].mxu0
      %2841 = vdwg.mxu0
      %2843 = vrot.lane.b32.xlu0 %v2166, 112
      %v2844 = vpop.permute.xlu0 %2843
      %v2845 = vsel %vm565, %v2844, 0
      %2847 = vmatprep.subr.mxu0 0.0
      %2848 = vmatpush1.xpose.msra.mxu0 %v2178
      %2849 = vmatprep.subr.mxu0 0.0
      %2850 = vmatpush1.xpose.msra.mxu0 0.0
      %2851 = vmatprep.subr.mxu0 0.0
      %2852 = vmatpush1.xpose.msra.mxu0 0.0
      %2853 = vmatprep.subr.mxu0 0.0
      %2854 = vmatpush1.xpose.msra.mxu0 0.0
      %2855 = vmatprep.subr.mxu0 0.0
      %2856 = vmatpush1.xpose.msra.mxu0 0.0
      %2857 = vmatprep.subr.mxu0 0.0
      %2858 = vmatpush1.xpose.msra.mxu0 0.0
      %2859 = vmatprep.subr.mxu0 0.0
      %2860 = vmatpush1.xpose.msra.mxu0 0.0
      %2861 = vmatprep.subr.mxu0 0.0
      %2862 = vmatpush1.xpose.msra.mxu0 0.0
      %2863 = vmatprep.subr.mxu0 0.0
      %2864 = vmatpush1.xpose.msra.mxu0 0.0
      %2865 = vmatprep.subr.mxu0 0.0
      %2866 = vmatpush1.xpose.msra.mxu0 0.0
      %2867 = vmatprep.subr.mxu0 0.0
      %2868 = vmatpush1.xpose.msra.mxu0 0.0
      %2869 = vmatprep.subr.mxu0 0.0
      %2870 = vmatpush1.xpose.msra.mxu0 0.0
      %2871 = vmatprep.subr.mxu0 0.0
      %2872 = vmatpush1.xpose.msra.mxu0 0.0
      %2873 = vmatprep.subr.mxu0 0.0
      %2874 = vmatpush1.xpose.msra.mxu0 0.0
      %2875 = vmatprep.subr.mxu0 0.0
      %2876 = vmatpush1.xpose.msra.mxu0 0.0
      %2877 = vmatprep.subr.mxu0 0.0
      %2878 = vmatpush1.xpose.msra.mxu0 0.0
      %2879 = vmatprep.subr.mxu0 0.0
      %2880 = vmatpush1.xpose.msra.mxu0 0.0
      %2881 = vmatprep.subr.mxu0 0.0
      %2882 = vmatpush1.xpose.msra.mxu0 0.0
      %2883 = vmatprep.subr.mxu0 0.0
      %2884 = vmatpush1.xpose.msra.mxu0 0.0
      %2885 = vmatprep.subr.mxu0 0.0
      %2886 = vmatpush1.xpose.msra.mxu0 0.0
      %2887 = vmatprep.subr.mxu0 0.0
      %2888 = vmatpush1.xpose.msra.mxu0 0.0
      %2889 = vmatprep.subr.mxu0 0.0
      %2890 = vmatpush1.xpose.msra.mxu0 0.0
      %2891 = vmatprep.subr.mxu0 0.0
      %2892 = vmatpush1.xpose.msra.mxu0 0.0
      %2893 = vmatprep.subr.mxu0 0.0
      %2894 = vmatpush1.xpose.msra.mxu0 0.0
      %2895 = vmatprep.subr.mxu0 0.0
      %2896 = vmatpush1.xpose.msra.mxu0 0.0
      %2897 = vmatprep.subr.mxu0 0.0
      %2898 = vmatpush1.xpose.msra.mxu0 0.0
      %2899 = vmatprep.subr.mxu0 0.0
      %2900 = vmatpush1.xpose.msra.mxu0 0.0
      %2901 = vmatprep.subr.mxu0 0.0
      %2902 = vmatpush1.xpose.msra.mxu0 0.0
      %2903 = vmatprep.subr.mxu0 0.0
      %2904 = vmatpush1.xpose.msra.mxu0 0.0
      %2905 = vmatprep.subr.mxu0 0.0
      %2906 = vmatpush1.xpose.msra.mxu0 0.0
      %2907 = vmatprep.subr.mxu0 0.0
      %2908 = vmatpush1.xpose.msra.mxu0 0.0
      %2909 = vmatprep.subr.mxu0 0.0
      %2910 = vmatpush1.xpose.msra.mxu0 0.0
      %2911 = vmatprep.mubr.f32.mxu0 0.0
      %2912 = vmatmul.mubr.f32.gmra.mrb[0].mxu0 %v2845
      %v2913 = vpop.f32.mrb[0].mxu0
      %v2914 = vadd.f32 0.0, %v2913
      %v2915 = vpop.f32.mrb[0].mxu0
      %2916 = vdwg.mxu0
      %v2917 = vmul.f32 %v550, %v2914
      %2918 = vmatprep.subr.mxu0 0.0
      %2919 = vmatpush1.xpose.msra.mxu0 %v2254
      %2920 = vmatprep.subr.mxu0 0.0
      %2921 = vmatpush1.xpose.msra.mxu0 0.0
      %2922 = vmatprep.subr.mxu0 0.0
      %2923 = vmatpush1.xpose.msra.mxu0 0.0
      %2924 = vmatprep.subr.mxu0 0.0
      %2925 = vmatpush1.xpose.msra.mxu0 0.0
      %2926 = vmatprep.subr.mxu0 0.0
      %2927 = vmatpush1.xpose.msra.mxu0 0.0
      %2928 = vmatprep.subr.mxu0 0.0
      %2929 = vmatpush1.xpose.msra.mxu0 0.0
      %2930 = vmatprep.subr.mxu0 0.0
      %2931 = vmatpush1.xpose.msra.mxu0 0.0
      %2932 = vmatprep.subr.mxu0 0.0
      %2933 = vmatpush1.xpose.msra.mxu0 0.0
      %2934 = vmatprep.subr.mxu0 0.0
      %2935 = vmatpush1.xpose.msra.mxu0 0.0
      %2936 = vmatprep.subr.mxu0 0.0
      %2937 = vmatpush1.xpose.msra.mxu0 0.0
      %2938 = vmatprep.subr.mxu0 0.0
      %2939 = vmatpush1.xpose.msra.mxu0 0.0
      %2940 = vmatprep.subr.mxu0 0.0
      %2941 = vmatpush1.xpose.msra.mxu0 0.0
      %2942 = vmatprep.subr.mxu0 0.0
      %2943 = vmatpush1.xpose.msra.mxu0 0.0
      %2944 = vmatprep.subr.mxu0 0.0
      %2945 = vmatpush1.xpose.msra.mxu0 0.0
      %2946 = vmatprep.subr.mxu0 0.0
      %2947 = vmatpush1.xpose.msra.mxu0 0.0
      %2948 = vmatprep.subr.mxu0 0.0
      %2949 = vmatpush1.xpose.msra.mxu0 0.0
      %2950 = vmatprep.subr.mxu0 0.0
      %2951 = vmatpush1.xpose.msra.mxu0 0.0
      %2952 = vmatprep.subr.mxu0 0.0
      %2953 = vmatpush1.xpose.msra.mxu0 0.0
      %2954 = vmatprep.subr.mxu0 0.0
      %2955 = vmatpush1.xpose.msra.mxu0 0.0
      %2956 = vmatprep.subr.mxu0 0.0
      %2957 = vmatpush1.xpose.msra.mxu0 0.0
      %2958 = vmatprep.subr.mxu0 0.0
      %2959 = vmatpush1.xpose.msra.mxu0 0.0
      %2960 = vmatprep.subr.mxu0 0.0
      %2961 = vmatpush1.xpose.msra.mxu0 0.0
      %2962 = vmatprep.subr.mxu0 0.0
      %2963 = vmatpush1.xpose.msra.mxu0 0.0
      %2964 = vmatprep.subr.mxu0 0.0
      %2965 = vmatpush1.xpose.msra.mxu0 0.0
      %2966 = vmatprep.subr.mxu0 0.0
      %2967 = vmatpush1.xpose.msra.mxu0 0.0
      %2968 = vmatprep.subr.mxu0 0.0
      %2969 = vmatpush1.xpose.msra.mxu0 0.0
      %2970 = vmatprep.subr.mxu0 0.0
      %2971 = vmatpush1.xpose.msra.mxu0 0.0
      %2972 = vmatprep.subr.mxu0 0.0
      %2973 = vmatpush1.xpose.msra.mxu0 0.0
      %2974 = vmatprep.subr.mxu0 0.0
      %2975 = vmatpush1.xpose.msra.mxu0 0.0
      %2976 = vmatprep.subr.mxu0 0.0
      %2977 = vmatpush1.xpose.msra.mxu0 0.0
      %2978 = vmatprep.subr.mxu0 0.0
      %2979 = vmatpush1.xpose.msra.mxu0 0.0
      %2980 = vmatprep.subr.mxu0 0.0
      %2981 = vmatpush1.xpose.msra.mxu0 0.0
      %2982 = vmatprep.mubr.f32.mxu0 0.0
      %2983 = vmatmul.mubr.f32.gmra.mrb[0].mxu0 %v2845
      %v2984 = vpop.f32.mrb[0].mxu0
      %v2985 = vadd.f32 0.0, %v2984
      %v2986 = vpop.f32.mrb[0].mxu0
      %2987 = vdwg.mxu0
      %v2988 = vmul.f32 %v550, %v2985
      %v2990 = vsel %vm581, %v2917, 0
      %2992 = vmatprep.subr.mxu0 0.0
      %2993 = vmatpush1.msra.mxu0 %v2839
      %2994 = vmatprep.subr.mxu0 0.0
      %2995 = vmatpush1.msra.mxu0 0.0
      %2996 = vmatprep.subr.mxu0 0.0
      %2997 = vmatpush1.msra.mxu0 0.0
      %2998 = vmatprep.subr.mxu0 0.0
      %2999 = vmatpush1.msra.mxu0 0.0
      %3000 = vmatprep.subr.mxu0 0.0
      %3001 = vmatpush1.msra.mxu0 0.0
      %3002 = vmatprep.subr.mxu0 0.0
      %3003 = vmatpush1.msra.mxu0 0.0
      %3004 = vmatprep.subr.mxu0 0.0
      %3005 = vmatpush1.msra.mxu0 0.0
      %3006 = vmatprep.subr.mxu0 0.0
      %3007 = vmatpush1.msra.mxu0 0.0
      %3008 = vmatprep.subr.mxu0 0.0
      %3009 = vmatpush1.msra.mxu0 0.0
      %3010 = vmatprep.subr.mxu0 0.0
      %3011 = vmatpush1.msra.mxu0 0.0
      %3012 = vmatprep.subr.mxu0 0.0
      %3013 = vmatpush1.msra.mxu0 0.0
      %3014 = vmatprep.subr.mxu0 0.0
      %3015 = vmatpush1.msra.mxu0 0.0
      %3016 = vmatprep.subr.mxu0 0.0
      %3017 = vmatpush1.msra.mxu0 0.0
      %3018 = vmatprep.subr.mxu0 0.0
      %3019 = vmatpush1.msra.mxu0 0.0
      %3020 = vmatprep.subr.mxu0 0.0
      %3021 = vmatpush1.msra.mxu0 0.0
      %3022 = vmatprep.subr.mxu0 0.0
      %3023 = vmatpush1.msra.mxu0 0.0
      %3024 = vmatprep.subr.mxu0 0.0
      %3025 = vmatpush1.msra.mxu0 0.0
      %3026 = vmatprep.subr.mxu0 0.0
      %3027 = vmatpush1.msra.mxu0 0.0
      %3028 = vmatprep.subr.mxu0 0.0
      %3029 = vmatpush1.msra.mxu0 0.0
      %3030 = vmatprep.subr.mxu0 0.0
      %3031 = vmatpush1.msra.mxu0 0.0
      %3032 = vmatprep.subr.mxu0 0.0
      %3033 = vmatpush1.msra.mxu0 0.0
      %3034 = vmatprep.subr.mxu0 0.0
      %3035 = vmatpush1.msra.mxu0 0.0
      %3036 = vmatprep.subr.mxu0 0.0
      %3037 = vmatpush1.msra.mxu0 0.0
      %3038 = vmatprep.subr.mxu0 0.0
      %3039 = vmatpush1.msra.mxu0 0.0
      %3040 = vmatprep.subr.mxu0 0.0
      %3041 = vmatpush1.msra.mxu0 0.0
      %3042 = vmatprep.subr.mxu0 0.0
      %3043 = vmatpush1.msra.mxu0 0.0
      %3044 = vmatprep.subr.mxu0 0.0
      %3045 = vmatpush1.msra.mxu0 0.0
      %3046 = vmatprep.subr.mxu0 0.0
      %3047 = vmatpush1.msra.mxu0 0.0
      %3048 = vmatprep.subr.mxu0 0.0
      %3049 = vmatpush1.msra.mxu0 0.0
      %3050 = vmatprep.subr.mxu0 0.0
      %3051 = vmatpush1.msra.mxu0 0.0
      %3052 = vmatprep.subr.mxu0 0.0
      %3053 = vmatpush1.msra.mxu0 0.0
      %3054 = vmatprep.subr.mxu0 0.0
      %3055 = vmatpush1.msra.mxu0 0.0
      %3056 = vmatprep.mubr.f32.mxu0 0.0
      %3057 = vmatmul.mubr.f32.gmra.mrb[0].mxu0 %v2990
      %v3058 = vpop.f32.mrb[0].mxu0
      %v3059 = vadd.f32 0.0, %v3058
      %v3060 = vpop.f32.mrb[0].mxu0
      %3061 = vdwg.mxu0
      %3062 = vmatprep.subr.mxu0 0.0
      %3063 = vmatpush1.msra.mxu0 %v2168
      %3064 = vmatprep.subr.mxu0 0.0
      %3065 = vmatpush1.msra.mxu0 %v2169
      %3066 = vmatprep.subr.mxu0 0.0
      %3067 = vmatpush1.msra.mxu0 0.0
      %3068 = vmatprep.subr.mxu0 0.0
      %3069 = vmatpush1.msra.mxu0 0.0
      %3070 = vmatprep.subr.mxu0 0.0
      %3071 = vmatpush1.msra.mxu0 0.0
      %3072 = vmatprep.subr.mxu0 0.0
      %3073 = vmatpush1.msra.mxu0 0.0
      %3074 = vmatprep.subr.mxu0 0.0
      %3075 = vmatpush1.msra.mxu0 0.0
      %3076 = vmatprep.subr.mxu0 0.0
      %3077 = vmatpush1.msra.mxu0 0.0
      %3078 = vmatprep.subr.mxu0 0.0
      %3079 = vmatpush1.msra.mxu0 0.0
      %3080 = vmatprep.subr.mxu0 0.0
      %3081 = vmatpush1.msra.mxu0 0.0
      %3082 = vmatprep.subr.mxu0 0.0
      %3083 = vmatpush1.msra.mxu0 0.0
      %3084 = vmatprep.subr.mxu0 0.0
      %3085 = vmatpush1.msra.mxu0 0.0
      %3086 = vmatprep.subr.mxu0 0.0
      %3087 = vmatpush1.msra.mxu0 0.0
      %3088 = vmatprep.subr.mxu0 0.0
      %3089 = vmatpush1.msra.mxu0 0.0
      %3090 = vmatprep.subr.mxu0 0.0
      %3091 = vmatpush1.msra.mxu0 0.0
      %3092 = vmatprep.subr.mxu0 0.0
      %3093 = vmatpush1.msra.mxu0 0.0
      %3094 = vmatprep.subr.mxu0 0.0
      %3095 = vmatpush1.msra.mxu0 0.0
      %3096 = vmatprep.subr.mxu0 0.0
      %3097 = vmatpush1.msra.mxu0 0.0
      %3098 = vmatprep.subr.mxu0 0.0
      %3099 = vmatpush1.msra.mxu0 0.0
      %3100 = vmatprep.subr.mxu0 0.0
      %3101 = vmatpush1.msra.mxu0 0.0
      %3102 = vmatprep.subr.mxu0 0.0
      %3103 = vmatpush1.msra.mxu0 0.0
      %3104 = vmatprep.subr.mxu0 0.0
      %3105 = vmatpush1.msra.mxu0 0.0
      %3106 = vmatprep.subr.mxu0 0.0
      %3107 = vmatpush1.msra.mxu0 0.0
      %3108 = vmatprep.subr.mxu0 0.0
      %3109 = vmatpush1.msra.mxu0 0.0
      %3110 = vmatprep.subr.mxu0 0.0
      %3111 = vmatpush1.msra.mxu0 0.0
      %3112 = vmatprep.subr.mxu0 0.0
      %3113 = vmatpush1.msra.mxu0 0.0
      %3114 = vmatprep.subr.mxu0 0.0
      %3115 = vmatpush1.msra.mxu0 0.0
      %3116 = vmatprep.subr.mxu0 0.0
      %3117 = vmatpush1.msra.mxu0 0.0
      %3118 = vmatprep.subr.mxu0 0.0
      %3119 = vmatpush1.msra.mxu0 0.0
      %3120 = vmatprep.subr.mxu0 0.0
      %3121 = vmatpush1.msra.mxu0 0.0
      %3122 = vmatprep.subr.mxu0 0.0
      %3123 = vmatpush1.msra.mxu0 0.0
      %3124 = vmatprep.subr.mxu0 0.0
      %3125 = vmatpush1.msra.mxu0 0.0
      %3126 = vmatprep.mubr.f32.mxu0 0.0
      %3127 = vmatmul.mubr.f32.gmra.mrb[0].mxu0 %v2845
      %v3128 = vpop.f32.mrb[0].mxu0
      %v3129 = vadd.f32 %v3059, %v3128
      %v3130 = vpop.f32.mrb[0].mxu0
      %3131 = vdwg.mxu0
      %v3133 = vsel %vm581, %v2988, 0
      %3135 = vmatprep.subr.mxu0 0.0
      %3136 = vmatpush1.msra.mxu0 %v2329
      %3137 = vmatprep.subr.mxu0 0.0
      %3138 = vmatpush1.msra.mxu0 0.0
      %3139 = vmatprep.subr.mxu0 0.0
      %3140 = vmatpush1.msra.mxu0 0.0
      %3141 = vmatprep.subr.mxu0 0.0
      %3142 = vmatpush1.msra.mxu0 0.0
      %3143 = vmatprep.subr.mxu0 0.0
      %3144 = vmatpush1.msra.mxu0 0.0
      %3145 = vmatprep.subr.mxu0 0.0
      %3146 = vmatpush1.msra.mxu0 0.0
      %3147 = vmatprep.subr.mxu0 0.0
      %3148 = vmatpush1.msra.mxu0 0.0
      %3149 = vmatprep.subr.mxu0 0.0
      %3150 = vmatpush1.msra.mxu0 0.0
      %3151 = vmatprep.subr.mxu0 0.0
      %3152 = vmatpush1.msra.mxu0 0.0
      %3153 = vmatprep.subr.mxu0 0.0
      %3154 = vmatpush1.msra.mxu0 0.0
      %3155 = vmatprep.subr.mxu0 0.0
      %3156 = vmatpush1.msra.mxu0 0.0
      %3157 = vmatprep.subr.mxu0 0.0
      %3158 = vmatpush1.msra.mxu0 0.0
      %3159 = vmatprep.subr.mxu0 0.0
      %3160 = vmatpush1.msra.mxu0 0.0
      %3161 = vmatprep.subr.mxu0 0.0
      %3162 = vmatpush1.msra.mxu0 0.0
      %3163 = vmatprep.subr.mxu0 0.0
      %3164 = vmatpush1.msra.mxu0 0.0
      %3165 = vmatprep.subr.mxu0 0.0
      %3166 = vmatpush1.msra.mxu0 0.0
      %3167 = vmatprep.subr.mxu0 0.0
      %3168 = vmatpush1.msra.mxu0 0.0
      %3169 = vmatprep.subr.mxu0 0.0
      %3170 = vmatpush1.msra.mxu0 0.0
      %3171 = vmatprep.subr.mxu0 0.0
      %3172 = vmatpush1.msra.mxu0 0.0
      %3173 = vmatprep.subr.mxu0 0.0
      %3174 = vmatpush1.msra.mxu0 0.0
      %3175 = vmatprep.subr.mxu0 0.0
      %3176 = vmatpush1.msra.mxu0 0.0
      %3177 = vmatprep.subr.mxu0 0.0
      %3178 = vmatpush1.msra.mxu0 0.0
      %3179 = vmatprep.subr.mxu0 0.0
      %3180 = vmatpush1.msra.mxu0 0.0
      %3181 = vmatprep.subr.mxu0 0.0
      %3182 = vmatpush1.msra.mxu0 0.0
      %3183 = vmatprep.subr.mxu0 0.0
      %3184 = vmatpush1.msra.mxu0 0.0
      %3185 = vmatprep.subr.mxu0 0.0
      %3186 = vmatpush1.msra.mxu0 0.0
      %3187 = vmatprep.subr.mxu0 0.0
      %3188 = vmatpush1.msra.mxu0 0.0
      %3189 = vmatprep.subr.mxu0 0.0
      %3190 = vmatpush1.msra.mxu0 0.0
      %3191 = vmatprep.subr.mxu0 0.0
      %3192 = vmatpush1.msra.mxu0 0.0
      %3193 = vmatprep.subr.mxu0 0.0
      %3194 = vmatpush1.msra.mxu0 0.0
      %3195 = vmatprep.subr.mxu0 0.0
      %3196 = vmatpush1.msra.mxu0 0.0
      %3197 = vmatprep.subr.mxu0 0.0
      %3198 = vmatpush1.msra.mxu0 0.0
      %3199 = vmatprep.mubr.f32.mxu0 0.0
      %3200 = vmatmul.mubr.f32.gmra.mrb[0].mxu0 %v3133
      %v3201 = vpop.f32.mrb[0].mxu0
      %v3202 = vadd.f32 0.0, %v3201
      %v3203 = vpop.f32.mrb[0].mxu0
      %3204 = vdwg.mxu0
      %v3205 = vadd.f32 %v3129, %v3202
      %v3206 = vlaneseq
      %v3207 = vshrl.u32 %v3206, 7
      %v3208 = vsub.s32 7, %v3207
      %v3209 = vrot.slane %v2145, %v3208
      %3211 = vrot.lane.b32.xlu0 %v3209, 16
      %v3212 = vpop.permute.xlu0 %3211
      %v3214 = vmul.f32 %v2160, %v3212
      %v3215 = vmul.f32 %v2161, %v3212
      %v3216 = vmul.f32 %v562, %v3209
      %v3217 = vmul.f32 %v563, %v3209
      %3219 = vrot.lane.b32.xlu0 %v3214, 112
      %v3220 = vpop.permute.xlu0 %3219
      %3222 = vxpose.xlu0.b32.start [1/16] %v3220, 128
      %3223 = vxpose.xlu0.b32.cont [2/16] 0.0, 128
      %3224 = vxpose.xlu0.b32.cont [3/16] 0.0, 128
      %3225 = vxpose.xlu0.b32.cont [4/16] 0.0, 128
      %3226 = vxpose.xlu0.b32.cont [5/16] 0.0, 128
      %3227 = vxpose.xlu0.b32.cont [6/16] 0.0, 128
      %3228 = vxpose.xlu0.b32.cont [7/16] 0.0, 128
      %3229 = vxpose.xlu0.b32.cont [8/16] 0.0, 128
      %3230 = vxpose.xlu0.b32.cont [9/16] 0.0, 128
      %3231 = vxpose.xlu0.b32.cont [10/16] 0.0, 128
      %3232 = vxpose.xlu0.b32.cont [11/16] 0.0, 128
      %3233 = vxpose.xlu0.b32.cont [12/16] 0.0, 128
      %3234 = vxpose.xlu0.b32.cont [13/16] 0.0, 128
      %3235 = vxpose.xlu0.b32.cont [14/16] 0.0, 128
      %3236 = vxpose.xlu0.b32.cont [15/16] 0.0, 128
      %3237 = vxpose.xlu0.b32.end [16/16] 0.0, 128
      %v3238 = vpop.trf.xlu0
      %v3239 = vpop.trf.xlu0
      %v3240 = vpop.trf.xlu0
      %v3241 = vpop.trf.xlu0
      %v3242 = vpop.trf.xlu0
      %v3243 = vpop.trf.xlu0
      %v3244 = vpop.trf.xlu0
      %v3245 = vpop.trf.xlu0
      %v3246 = vpop.trf.xlu0
      %v3247 = vpop.trf.xlu0
      %v3248 = vpop.trf.xlu0
      %v3249 = vpop.trf.xlu0
      %v3250 = vpop.trf.xlu0
      %v3251 = vpop.trf.xlu0
      %v3252 = vpop.trf.xlu0
      %v3253 = vpop.trf.xlu0
      %v3255 = vsel %vm581, %v3238, 0
      %v3258 = vsel %vm581, %v3239, 0
      %3260 = vmatprep.subr.mxu0 0.0
      %3261 = vmatpush1.msra.mxu0 %v2839
      %3262 = vmatprep.subr.mxu0 0.0
      %3263 = vmatpush1.msra.mxu0 0.0
      %3264 = vmatprep.subr.mxu0 0.0
      %3265 = vmatpush1.msra.mxu0 0.0
      %3266 = vmatprep.subr.mxu0 0.0
      %3267 = vmatpush1.msra.mxu0 0.0
      %3268 = vmatprep.subr.mxu0 0.0
      %3269 = vmatpush1.msra.mxu0 0.0
      %3270 = vmatprep.subr.mxu0 0.0
      %3271 = vmatpush1.msra.mxu0 0.0
      %3272 = vmatprep.subr.mxu0 0.0
      %3273 = vmatpush1.msra.mxu0 0.0
      %3274 = vmatprep.subr.mxu0 0.0
      %3275 = vmatpush1.msra.mxu0 0.0
      %3276 = vmatprep.subr.mxu0 0.0
      %3277 = vmatpush1.msra.mxu0 0.0
      %3278 = vmatprep.subr.mxu0 0.0
      %3279 = vmatpush1.msra.mxu0 0.0
      %3280 = vmatprep.subr.mxu0 0.0
      %3281 = vmatpush1.msra.mxu0 0.0
      %3282 = vmatprep.subr.mxu0 0.0
      %3283 = vmatpush1.msra.mxu0 0.0
      %3284 = vmatprep.subr.mxu0 0.0
      %3285 = vmatpush1.msra.mxu0 0.0
      %3286 = vmatprep.subr.mxu0 0.0
      %3287 = vmatpush1.msra.mxu0 0.0
      %3288 = vmatprep.subr.mxu0 0.0
      %3289 = vmatpush1.msra.mxu0 0.0
      %3290 = vmatprep.subr.mxu0 0.0
      %3291 = vmatpush1.msra.mxu0 0.0
      %3292 = vmatprep.subr.mxu0 0.0
      %3293 = vmatpush1.msra.mxu0 0.0
      %3294 = vmatprep.subr.mxu0 0.0
      %3295 = vmatpush1.msra.mxu0 0.0
      %3296 = vmatprep.subr.mxu0 0.0
      %3297 = vmatpush1.msra.mxu0 0.0
      %3298 = vmatprep.subr.mxu0 0.0
      %3299 = vmatpush1.msra.mxu0 0.0
      %3300 = vmatprep.subr.mxu0 0.0
      %3301 = vmatpush1.msra.mxu0 0.0
      %3302 = vmatprep.subr.mxu0 0.0
      %3303 = vmatpush1.msra.mxu0 0.0
      %3304 = vmatprep.subr.mxu0 0.0
      %3305 = vmatpush1.msra.mxu0 0.0
      %3306 = vmatprep.subr.mxu0 0.0
      %3307 = vmatpush1.msra.mxu0 0.0
      %3308 = vmatprep.subr.mxu0 0.0
      %3309 = vmatpush1.msra.mxu0 0.0
      %3310 = vmatprep.subr.mxu0 0.0
      %3311 = vmatpush1.msra.mxu0 0.0
      %3312 = vmatprep.subr.mxu0 0.0
      %3313 = vmatpush1.msra.mxu0 0.0
      %3314 = vmatprep.subr.mxu0 0.0
      %3315 = vmatpush1.msra.mxu0 0.0
      %3316 = vmatprep.subr.mxu0 0.0
      %3317 = vmatpush1.msra.mxu0 0.0
      %3318 = vmatprep.subr.mxu0 0.0
      %3319 = vmatpush1.msra.mxu0 0.0
      %3320 = vmatprep.subr.mxu0 0.0
      %3321 = vmatpush1.msra.mxu0 0.0
      %3322 = vmatprep.subr.mxu0 0.0
      %3323 = vmatpush1.msra.mxu0 0.0
      %3324 = vmatprep.mubr.f32.mxu0 0.0
      %3325 = vmatmul.mubr.f32.gmra.mrb[0].mxu0 %v3255
      %v3326 = vpop.f32.mrb[0].mxu0
      %v3327 = vadd.f32 0.0, %v3326
      %v3328 = vpop.f32.mrb[0].mxu0
      %3329 = vmatprep.mubr.f32.mxu0 0.0
      %3330 = vmatmul.mubr.f32.gmra.mrb[0].mxu0 %v3258
      %v3331 = vpop.f32.mrb[0].mxu0
      %v3332 = vadd.f32 0.0, %v3331
      %v3333 = vpop.f32.mrb[0].mxu0
      %3334 = vdwg.mxu0
      %v3336 = vsel %vm565, %v3216, 0
      %v3339 = vsel %vm565, %v3217, 0
      %3341 = vmatprep.subr.mxu0 0.0
      %3342 = vmatpush1.msra.mxu0 %v2168
      %3343 = vmatprep.subr.mxu0 0.0
      %3344 = vmatpush1.msra.mxu0 %v2169
      %3345 = vmatprep.subr.mxu0 0.0
      %3346 = vmatpush1.msra.mxu0 0.0
      %3347 = vmatprep.subr.mxu0 0.0
      %3348 = vmatpush1.msra.mxu0 0.0
      %3349 = vmatprep.subr.mxu0 0.0
      %3350 = vmatpush1.msra.mxu0 0.0
      %3351 = vmatprep.subr.mxu0 0.0
      %3352 = vmatpush1.msra.mxu0 0.0
      %3353 = vmatprep.subr.mxu0 0.0
      %3354 = vmatpush1.msra.mxu0 0.0
      %3355 = vmatprep.subr.mxu0 0.0
      %3356 = vmatpush1.msra.mxu0 0.0
      %3357 = vmatprep.subr.mxu0 0.0
      %3358 = vmatpush1.msra.mxu0 0.0
      %3359 = vmatprep.subr.mxu0 0.0
      %3360 = vmatpush1.msra.mxu0 0.0
      %3361 = vmatprep.subr.mxu0 0.0
      %3362 = vmatpush1.msra.mxu0 0.0
      %3363 = vmatprep.subr.mxu0 0.0
      %3364 = vmatpush1.msra.mxu0 0.0
      %3365 = vmatprep.subr.mxu0 0.0
      %3366 = vmatpush1.msra.mxu0 0.0
      %3367 = vmatprep.subr.mxu0 0.0
      %3368 = vmatpush1.msra.mxu0 0.0
      %3369 = vmatprep.subr.mxu0 0.0
      %3370 = vmatpush1.msra.mxu0 0.0
      %3371 = vmatprep.subr.mxu0 0.0
      %3372 = vmatpush1.msra.mxu0 0.0
      %3373 = vmatprep.subr.mxu0 0.0
      %3374 = vmatpush1.msra.mxu0 0.0
      %3375 = vmatprep.subr.mxu0 0.0
      %3376 = vmatpush1.msra.mxu0 0.0
      %3377 = vmatprep.subr.mxu0 0.0
      %3378 = vmatpush1.msra.mxu0 0.0
      %3379 = vmatprep.subr.mxu0 0.0
      %3380 = vmatpush1.msra.mxu0 0.0
      %3381 = vmatprep.subr.mxu0 0.0
      %3382 = vmatpush1.msra.mxu0 0.0
      %3383 = vmatprep.subr.mxu0 0.0
      %3384 = vmatpush1.msra.mxu0 0.0
      %3385 = vmatprep.subr.mxu0 0.0
      %3386 = vmatpush1.msra.mxu0 0.0
      %3387 = vmatprep.subr.mxu0 0.0
      %3388 = vmatpush1.msra.mxu0 0.0
      %3389 = vmatprep.subr.mxu0 0.0
      %3390 = vmatpush1.msra.mxu0 0.0
      %3391 = vmatprep.subr.mxu0 0.0
      %3392 = vmatpush1.msra.mxu0 0.0
      %3393 = vmatprep.subr.mxu0 0.0
      %3394 = vmatpush1.msra.mxu0 0.0
      %3395 = vmatprep.subr.mxu0 0.0
      %3396 = vmatpush1.msra.mxu0 0.0
      %3397 = vmatprep.subr.mxu0 0.0
      %3398 = vmatpush1.msra.mxu0 0.0
      %3399 = vmatprep.subr.mxu0 0.0
      %3400 = vmatpush1.msra.mxu0 0.0
      %3401 = vmatprep.subr.mxu0 0.0
      %3402 = vmatpush1.msra.mxu0 0.0
      %3403 = vmatprep.subr.mxu0 0.0
      %3404 = vmatpush1.msra.mxu0 0.0
      %3405 = vmatprep.mubr.f32.mxu0 0.0
      %3406 = vmatmul.mubr.f32.gmra.mrb[0].mxu0 %v3336
      %v3407 = vpop.f32.mrb[0].mxu0
      %v3408 = vadd.f32 %v3327, %v3407
      %v3409 = vpop.f32.mrb[0].mxu0
      %3410 = vmatprep.mubr.f32.mxu0 0.0
      %3411 = vmatmul.mubr.f32.gmra.mrb[0].mxu0 %v3339
      %v3412 = vpop.f32.mrb[0].mxu0
      %v3413 = vadd.f32 %v3332, %v3412
      %v3414 = vpop.f32.mrb[0].mxu0
      %3415 = vdwg.mxu0
      %3417 = vrot.lane.b32.xlu0 %v3215, 112
      %v3418 = vpop.permute.xlu0 %3417
      %3420 = vxpose.xlu0.b32.start [1/16] %v3418, 128
      %3421 = vxpose.xlu0.b32.cont [2/16] 0.0, 128
      %3422 = vxpose.xlu0.b32.cont [3/16] 0.0, 128
      %3423 = vxpose.xlu0.b32.cont [4/16] 0.0, 128
      %3424 = vxpose.xlu0.b32.cont [5/16] 0.0, 128
      %3425 = vxpose.xlu0.b32.cont [6/16] 0.0, 128
      %3426 = vxpose.xlu0.b32.cont [7/16] 0.0, 128
      %3427 = vxpose.xlu0.b32.cont [8/16] 0.0, 128
      %3428 = vxpose.xlu0.b32.cont [9/16] 0.0, 128
      %3429 = vxpose.xlu0.b32.cont [10/16] 0.0, 128
      %3430 = vxpose.xlu0.b32.cont [11/16] 0.0, 128
      %3431 = vxpose.xlu0.b32.cont [12/16] 0.0, 128
      %3432 = vxpose.xlu0.b32.cont [13/16] 0.0, 128
      %3433 = vxpose.xlu0.b32.cont [14/16] 0.0, 128
      %3434 = vxpose.xlu0.b32.cont [15/16] 0.0, 128
      %3435 = vxpose.xlu0.b32.end [16/16] 0.0, 128
      %v3436 = vpop.trf.xlu0
      %v3437 = vpop.trf.xlu0
      %v3438 = vpop.trf.xlu0
      %v3439 = vpop.trf.xlu0
      %v3440 = vpop.trf.xlu0
      %v3441 = vpop.trf.xlu0
      %v3442 = vpop.trf.xlu0
      %v3443 = vpop.trf.xlu0
      %v3444 = vpop.trf.xlu0
      %v3445 = vpop.trf.xlu0
      %v3446 = vpop.trf.xlu0
      %v3447 = vpop.trf.xlu0
      %v3448 = vpop.trf.xlu0
      %v3449 = vpop.trf.xlu0
      %v3450 = vpop.trf.xlu0
      %v3451 = vpop.trf.xlu0
      %v3453 = vsel %vm581, %v3436, 0
      %v3456 = vsel %vm581, %v3437, 0
      %3458 = vmatprep.subr.mxu0 0.0
      %3459 = vmatpush1.msra.mxu0 %v2329
      %3460 = vmatprep.subr.mxu0 0.0
      %3461 = vmatpush1.msra.mxu0 0.0
      %3462 = vmatprep.subr.mxu0 0.0
      %3463 = vmatpush1.msra.mxu0 0.0
      %3464 = vmatprep.subr.mxu0 0.0
      %3465 = vmatpush1.msra.mxu0 0.0
      %3466 = vmatprep.subr.mxu0 0.0
      %3467 = vmatpush1.msra.mxu0 0.0
      %3468 = vmatprep.subr.mxu0 0.0
      %3469 = vmatpush1.msra.mxu0 0.0
      %3470 = vmatprep.subr.mxu0 0.0
      %3471 = vmatpush1.msra.mxu0 0.0
      %3472 = vmatprep.subr.mxu0 0.0
      %3473 = vmatpush1.msra.mxu0 0.0
      %3474 = vmatprep.subr.mxu0 0.0
      %3475 = vmatpush1.msra.mxu0 0.0
      %3476 = vmatprep.subr.mxu0 0.0
      %3477 = vmatpush1.msra.mxu0 0.0
      %3478 = vmatprep.subr.mxu0 0.0
      %3479 = vmatpush1.msra.mxu0 0.0
      %3480 = vmatprep.subr.mxu0 0.0
      %3481 = vmatpush1.msra.mxu0 0.0
      %3482 = vmatprep.subr.mxu0 0.0
      %3483 = vmatpush1.msra.mxu0 0.0
      %3484 = vmatprep.subr.mxu0 0.0
      %3485 = vmatpush1.msra.mxu0 0.0
      %3486 = vmatprep.subr.mxu0 0.0
      %3487 = vmatpush1.msra.mxu0 0.0
      %3488 = vmatprep.subr.mxu0 0.0
      %3489 = vmatpush1.msra.mxu0 0.0
      %3490 = vmatprep.subr.mxu0 0.0
      %3491 = vmatpush1.msra.mxu0 0.0
      %3492 = vmatprep.subr.mxu0 0.0
      %3493 = vmatpush1.msra.mxu0 0.0
      %3494 = vmatprep.subr.mxu0 0.0
      %3495 = vmatpush1.msra.mxu0 0.0
      %3496 = vmatprep.subr.mxu0 0.0
      %3497 = vmatpush1.msra.mxu0 0.0
      %3498 = vmatprep.subr.mxu0 0.0
      %3499 = vmatpush1.msra.mxu0 0.0
      %3500 = vmatprep.subr.mxu0 0.0
      %3501 = vmatpush1.msra.mxu0 0.0
      %3502 = vmatprep.subr.mxu0 0.0
      %3503 = vmatpush1.msra.mxu0 0.0
      %3504 = vmatprep.subr.mxu0 0.0
      %3505 = vmatpush1.msra.mxu0 0.0
      %3506 = vmatprep.subr.mxu0 0.0
      %3507 = vmatpush1.msra.mxu0 0.0
      %3508 = vmatprep.subr.mxu0 0.0
      %3509 = vmatpush1.msra.mxu0 0.0
      %3510 = vmatprep.subr.mxu0 0.0
      %3511 = vmatpush1.msra.mxu0 0.0
      %3512 = vmatprep.subr.mxu0 0.0
      %3513 = vmatpush1.msra.mxu0 0.0
      %3514 = vmatprep.subr.mxu0 0.0
      %3515 = vmatpush1.msra.mxu0 0.0
      %3516 = vmatprep.subr.mxu0 0.0
      %3517 = vmatpush1.msra.mxu0 0.0
      %3518 = vmatprep.subr.mxu0 0.0
      %3519 = vmatpush1.msra.mxu0 0.0
      %3520 = vmatprep.subr.mxu0 0.0
      %3521 = vmatpush1.msra.mxu0 0.0
      %3522 = vmatprep.mubr.f32.mxu0 0.0
      %3523 = vmatmul.mubr.f32.gmra.mrb[0].mxu0 %v3453
      %v3524 = vpop.f32.mrb[0].mxu0
      %v3525 = vadd.f32 0.0, %v3524
      %v3526 = vpop.f32.mrb[0].mxu0
      %3527 = vmatprep.mubr.f32.mxu0 0.0
      %3528 = vmatmul.mubr.f32.gmra.mrb[0].mxu0 %v3456
      %v3529 = vpop.f32.mrb[0].mxu0
      %v3530 = vadd.f32 0.0, %v3529
      %v3531 = vpop.f32.mrb[0].mxu0
      %3532 = vdwg.mxu0
      %v3533 = vadd.f32 %v3408, %v3525
      %v3534 = vadd.f32 %v3413, %v3530
      %3535 = vst.msk [vmem:[%s2167] sm:$0xff] %vm565, %v3533
      %3536 = vst.msk [vmem:[%s2167 + $0x8] sm:$0xff] %vm565, %v3534
      %v3537 = vsel %vm565, %v3205, 0.0
      %3538 = vadd.xlane.f32.xlu0 %v3537
      %v3539 = vpop.xlane.xlu0 %3538
      %v3540 = vmul.f32 %v3539, %v2015
      %v3541 = vsub.f32 %v3205, %v3540
      %v3542 = vmul.f32 %v3541, %v3541
      %v3543 = vsel %vm565, %v3542, 0.0
      %3544 = vadd.xlane.f32.xlu0 %v3543
      %v3545 = vpop.xlane.xlu0 %3544
      %v3546 = vmul.f32 %v3545, %v2015
      %v3547 = vadd.f32 %v3546, 0.00064
      %v3548 = vrsqrt.pop %v3547
      %v3549 = vmul.f32 %v3541, %v3548
      %v3550 = vld [vmem:[%s8 + $0x1] sm:$0x1]
      %v3551 = vlaneseq
      %v3552 = vshrl.u32 %v3551, 7
      %v3553 = vsub.s32 0, %v3552
      %v3554 = vrot.slane %v3550, %v3553
      %v3555 = vmul.f32 %v3549, %v3554
      %v3556 = vld [vmem:[%s9 + $0x1] sm:$0x1]
      %v3557 = vlaneseq
      %v3558 = vshrl.u32 %v3557, 7
      %v3559 = vsub.s32 0, %v3558
      %v3560 = vrot.slane %v3556, %v3559
      %v3561 = vadd.f32 %v3555, %v3560
      %v3562 = vld [vmem:[%s7 + $0x1] sm:$0x1]
      %v3563 = vlaneseq
      %v3564 = vshrl.u32 %v3563, 7
      %v3565 = vsub.s32 0, %v3564
      %v3566 = vrot.slane %v3562, %v3565
      %3568 = vrot.lane.b32.xlu0 %v3566, 16
      %v3569 = vpop.permute.xlu0 %3568
      %v3571 = vmul.f32 %v2038, %v3569
      %3573 = vrot.lane.b32.xlu0 %v3571, 112
      %v3574 = vpop.permute.xlu0 %3573
      %v3576 = vsel %vm565, %v3574, 0.0
      %3577 = vadd.xlane.f32.xlu0 %v3576
      %v3578 = vpop.xlane.xlu0 %3577
      %v3579 = vmul.f32 %v3578, %v524
      %3581 = vrot.lane.b32.xlu0 %v3579, 112
      %v3582 = vpop.permute.xlu0 %3581
      %v3584 = vadd.f32 %v3561, %v3582
      %3586 = vrot.lane.b32.xlu0 %v3584, 16
      %v3587 = vpop.permute.xlu0 %3586
      %v3589 = vsel %vm565, %v2049, %v3587
      %vm3590 = vcmask 261120
      %3591 = vst.msk [vmem:[%s497] sm:$0xff] %vm3590, %v3589
      %p3592 = scmp.lt.s32.totalorder %s25, 1
      %s3593 = scalar_select %p3592, %s25, 1
      %p3594 = scmp.lt.s32.totalorder %s26, 0
      %s3595 = scalar_select %p3594, %s26, 0
      %s3596 = sadd.s32 %s3595, %s3593
      %s3597 = smul.addr %s3596, 8
      %s3598 = scalar_lea.vmem %s10, %s3597
      // Predicated region
      $region65: #{forward.22} parent=59 // pred_check
        %p3599 = pneg %p298
      $region66: #{forward.22} parent=59 // pred_check_branch
        %3601 = sbr.rel (%p3599) target = $region68
      $region67: #{forward.22} parent=59 // pred_region
        _
      $region68: #{forward.22} parent=59 // pred_fallthru
        _
    $region60: #{forward.22} parent=5 // pred_fallthru
      _
    %p3602 = scmp.le.s32.totalorder 2, %s16
    // Predicated region
    $region69: #{forward.22} parent=5 // pred_check
      %p3603 = pneg %p3602
    $region70: #{forward.22} parent=5 // pred_check_branch
      %3605 = sbr.rel (%p3603) target = $region72
    $region71: #{forward.22} parent=5 // pred_region
      %s3606 = ssub.s32 %s16, 2
      // Predicated region
      $region73: #{forward.22} parent=71 // pred_check
        %p3607 = pneg %p304
      $region74: #{forward.22} parent=71 // pred_check_branch
        %3609 = sbr.rel (%p3607) target = $region76
      $region75: #{forward.22} parent=71 // pred_region
        %p3610 = scmp.lt.s32.totalorder %s27, 1
        %s3611 = scalar_select %p3610, %s27, 1
        %p3612 = scmp.lt.s32.totalorder %s28, 0
        %s3613 = scalar_select %p3612, %s28, 0
        %s3614 = sadd.s32 %s3613, %s3611
        %s3615 = smul.addr %s3614, 8
        %s3616 = scalar_lea.vmem %s10, %s3615
      $region76: #{forward.22} parent=71 // pred_fallthru
        _
    $region72: #{forward.22} parent=5 // pred_fallthru
      _
  $region6: #{forward.22} parent=0 // loop_footer
    %s20 = sadd.s32 1, %s16
  $region7: #{forward.22} parent=0 // loop_footer_branch
    %15 = sbr.rel target = $region3
  $region8: #{forward.22} parent=0 // loop_exit
    _

</llo_original>
